<compile_context>
chip_gen: v5e
topology: v5e:2x2
jax: 0.10.0
libtpu: 0.0.40
codegen_flags: <defaults>
</compile_context>

<pallas_src>
import numpy as np
import jax
import jax.numpy as jnp
from jax import lax
from jax.experimental import pallas as pl
from jax.experimental.pallas import tpu as pltpu


def sentence_kernel(x_ref, mask_ref, wih_ref, bx_ref, whhf_ref, whhb_ref,
                    bhhn_ref, watt_ref, batt_ref, ctx_ref,
                    s_ref, alpha_ref):
    f32 = jnp.float32
    bf16 = jnp.bfloat16
    Hp = whhf_ref.shape[0]                 # padded per-gate width (multiple of 128)
    BP, Dp = s_ref.shape                   # padded batch rows (multiple of 8), padded sentence dim
    TBP = alpha_ref.shape[0]
    T = TBP // BP

    # ---- hoisted input projection: ONE bf16 MXU matmul for every timestep of both
    # directions; bx already folds b_ih (all gates) and b_hh (r, z gates).
    gx = jnp.dot(x_ref[...], wih_ref[...], preferred_element_type=f32) + bx_ref[...]   # (T*BP, 6Hp)

    mask = mask_ref[...]                   # (T*BP, 1), lane-broadcast at use (free on VPU)

    # loop-invariant weight/bias loads, hoisted once
    whhf = whhf_ref[...]                   # (Hp, 3Hp) bf16, gates lane-aligned at k*Hp
    whhb = whhb_ref[...]
    bhhnf = bhhn_ref[:, 0:Hp]              # (1, Hp) n-gate hidden bias, forward
    bhhnb = bhhn_ref[:, Hp:2 * Hp]         # (1, Hp) n-gate hidden bias, backward

    h_f = jnp.zeros((BP, Hp), f32)
    h_b = jnp.zeros((BP, Hp), f32)
    hf_list = [None] * T
    hb_list = [None] * T

    # ---- fused fwd/bwd recurrence, fully unrolled (T static & small here).
    # Only h @ W_hh (one lane-aligned MXU push per direction) is on the critical path.
    # TODO(synk): at realistic T use lax.fori_loop(..., unroll=2..4) to bound live ranges.
    for t in range(T):
        tb = T - 1 - t
        rf = slice(t * BP, (t + 1) * BP)   # sublane-aligned rows of timestep t  (forward)
        rb = slice(tb * BP, (tb + 1) * BP)  # sublane-aligned rows of timestep tb (backward)

        # forward direction, timestep t
        ghf = jnp.dot(h_f.astype(bf16), whhf, preferred_element_type=f32)      # (BP, 3Hp)
        r_f = jax.nn.sigmoid(gx[rf, 0 * Hp:1 * Hp] + ghf[:, 0 * Hp:1 * Hp])
        z_f = jax.nn.sigmoid(gx[rf, 1 * Hp:2 * Hp] + ghf[:, 1 * Hp:2 * Hp])
        n_f = jnp.tanh(gx[rf, 2 * Hp:3 * Hp] + r_f * (ghf[:, 2 * Hp:3 * Hp] + bhhnf))
        h_f = ((1.0 - z_f) * n_f + z_f * h_f) * mask[rf, :]
        hf_list[t] = h_f

        # backward direction, timestep tb (packed semantics: zeroing h at padded steps
        # makes the recurrence start at each sequence's last valid step)
        ghb = jnp.dot(h_b.astype(bf16), whhb, preferred_element_type=f32)
        r_b = jax.nn.sigmoid(gx[rb, 3 * Hp:4 * Hp] + ghb[:, 0 * Hp:1 * Hp])
        z_b = jax.nn.sigmoid(gx[rb, 4 * Hp:5 * Hp] + ghb[:, 1 * Hp:2 * Hp])
        n_b = jnp.tanh(gx[rb, 5 * Hp:6 * Hp] + r_b * (ghb[:, 2 * Hp:3 * Hp] + bhhnb))
        h_b = ((1.0 - z_b) * n_b + z_b * h_b) * mask[rb, :]
        hb_list[tb] = h_b

    # ---- HAN attention epilogue: one (T*BP, 2Hp) @ (2Hp, Dp) matmul + one
    # (T*BP, Dp) @ (Dp, 1) matmul for the logits (reduction on the MXU, not XLU).
    hfb = jnp.concatenate(
        [jnp.concatenate([hf_list[t], hb_list[t]], axis=1) for t in range(T)], axis=0)  # (T*BP, 2Hp)
    u2 = jnp.tanh(jnp.dot(hfb.astype(bf16), watt_ref[...],
                          preferred_element_type=f32) + batt_ref[...])                  # (T*BP, Dp)
    logits = jnp.dot(u2.astype(bf16), ctx_ref[...], preferred_element_type=f32)         # (T*BP, 1)

    # NOTE: padded timesteps get u_t = tanh(b_att) != 0 and hence nonzero alpha;
    # this matches the PyTorch module (its attention does not mask padding).
    lg3 = logits.reshape(T, BP, 1)                     # layout-free (BP == 8 sublanes)
    m = jnp.max(lg3, axis=0, keepdims=True)
    e = jnp.exp(lg3 - m)
    denom = jnp.sum(e, axis=0, keepdims=True)
    inv = pl.reciprocal(denom, approx=True)
    inv = inv * (2.0 - denom * inv)                    # one Newton step -> full f32 accuracy
    alpha3 = e * inv                                   # (T, BP, 1)

    u3 = u2.reshape(T, BP, Dp)                         # layout-free vreg regroup
    s_ref[...] = jnp.sum(alpha3 * u3, axis=0)          # (BP, Dp) lane-dense store
    # TODO(synk): at realistic B emit alpha lane-dense as (B, T) or pack it into the
    # s slab; at (T*BP, 1) this is a tiny masked store.
    alpha_ref[...] = alpha3.reshape(TBP, 1)


@jax.jit
def sentence_forward(x_idx, lengths, params):
    """x_idx: (T, B) int32 padded word indices; lengths: (B,) int32."""
    emb = params["embedding"]
    T, B = x_idx.shape
    E = emb.shape[1]
    H = params["w_hh_f_t"].shape[0]
    D = params["w_att_t"].shape[1]

    BP = ((B + 7) // 8) * 8          # batch rows -> multiple of 8 sublanes
    Hp = ((H + 127) // 128) * 128    # per-gate width -> multiple of 128 lanes
    Dp = ((D + 127) // 128) * 128    # sentence dim  -> multiple of 128 lanes

    # --- glue: embedding lookup + batch padding + validity mask (pack_padded_sequence) ---
    # TODO(synk): at realistic sizes do the embedding gather in-kernel via
    # PrefetchScalarGridSpec scalar prefetch instead of materializing x_emb in HBM.
    x_emb = emb[x_idx].astype(jnp.float32)                                   # (T, B, E)
    x_emb = jnp.pad(x_emb, ((0, 0), (0, BP - B), (0, 0)))                    # (T, BP, E)
    x_emb = x_emb.reshape(T * BP, E).astype(jnp.bfloat16)                    # bf16 MXU operand
    lens = jnp.pad(lengths, (0, BP - B))                                     # padded rows: length 0
    mask = (jnp.arange(T)[:, None] < lens[None, :]).astype(jnp.float32)      # (T, BP)
    mask = mask.reshape(T * BP, 1)                                           # lane-broadcast in-kernel

    # --- re-pack GRU / attention parameters (trace-time; fused into this jit) ---
    def pad_to(a, shape):
        return jnp.pad(a, [(0, s - d) for s, d in zip(shape, a.shape)])

    def gate_cols(w):  # PyTorch gate order r, z, n
        return [w[:, 0:H], w[:, H:2 * H], w[:, 2 * H:3 * H]]

    # input-side weights of both directions, each gate padded to a 128-lane block
    wih_blocks = ([pad_to(g, (E, Hp)) for g in gate_cols(params["w_ih_f_t"])] +
                  [pad_to(g, (E, Hp)) for g in gate_cols(params["w_ih_b_t"])])
    wih_all = jnp.concatenate(wih_blocks, axis=1).astype(jnp.bfloat16)       # (E, 6Hp)

    def fold_bias(b_ih, b_hh):   # b_ih (all gates) + b_hh (r, z only) -> input-side bias
        bi, bh = gate_cols(b_ih), gate_cols(b_hh)
        return [pad_to(bi[0] + bh[0], (1, Hp)),
                pad_to(bi[1] + bh[1], (1, Hp)),
                pad_to(bi[2], (1, Hp))]
    bx_all = jnp.concatenate(fold_bias(params["b_ih_f"], params["b_hh_f"]) +
                             fold_bias(params["b_ih_b"], params["b_hh_b"]), axis=1)   # (1, 6Hp) f32

    def fuse_whh(w):   # (H, 3H) -> (Hp, 3Hp), gates lane-aligned at multiples of Hp
        return jnp.concatenate([pad_to(g, (Hp, Hp)) for g in gate_cols(w)], axis=1)
    whh_f = fuse_whh(params["w_hh_f_t"]).astype(jnp.bfloat16)                # (Hp, 3Hp)
    whh_b = fuse_whh(params["w_hh_b_t"]).astype(jnp.bfloat16)

    bhh_n = jnp.concatenate([pad_to(params["b_hh_f"][:, 2 * H:3 * H], (1, Hp)),
                             pad_to(params["b_hh_b"][:, 2 * H:3 * H], (1, Hp))], axis=1)  # (1, 2Hp)

    # attention projection: fwd-h rows at [0:H), bwd-h rows at [Hp:Hp+H)
    w_att = jnp.zeros((2 * Hp, Dp), jnp.float32)
    w_att = w_att.at[0:H, 0:D].set(params["w_att_t"][0:H])
    w_att = w_att.at[Hp:Hp + H, 0:D].set(params["w_att_t"][H:2 * H])
    w_att = w_att.astype(jnp.bfloat16)                                        # (2Hp, Dp)
    b_att = pad_to(params["b_att"], (1, Dp))                                  # (1, Dp) f32
    ctx = pad_to(params["ctx"].reshape(1, D), (1, Dp)).reshape(Dp, 1).astype(jnp.bfloat16)  # (Dp, 1)

    # TODO(synk): at realistic T/B add a batch grid over sentences with
    # dimension_semantics=("parallel",) (v7x: 2 TCs, 64 MiB VMEM -> smaller B-tile or
    # per-timestep gx; v5e/v6e: ~2x larger tiles) and set vmem_limit_bytes.
    n_in = 10
    kernel = pl.pallas_call(
        sentence_kernel,
        out_shape=(jax.ShapeDtypeStruct((BP, Dp), jnp.float32),
                   jax.ShapeDtypeStruct((T * BP, 1), jnp.float32)),
        in_specs=[pl.BlockSpec(memory_space=pltpu.MemorySpace.VMEM)] * n_in,
        out_specs=(pl.BlockSpec(memory_space=pltpu.MemorySpace.VMEM),
                   pl.BlockSpec(memory_space=pltpu.MemorySpace.VMEM)),
    )
    s_full, alpha_col = kernel(x_emb, mask, wih_all, bx_all, whh_f, whh_b,
                               bhh_n, w_att, b_att, ctx)
    s = s_full[:B, :D]
    alpha = alpha_col.reshape(T, BP)[:, :B]
    return s, alpha


def reference_forward(x_idx, lengths, params):
    """Pure-JAX reference (f32, HIGHEST precision) for correctness checking."""
    P = lax.Precision.HIGHEST
    emb = params["embedding"]
    x = emb[x_idx].astype(jnp.float32)
    T, B, _ = x.shape
    H = params["w_hh_f_t"].shape[0]
    mask = (jnp.arange(T)[:, None] < lengths[None, :]).astype(jnp.float32)[:, :, None]

    def run_dir(w_ih_t, w_hh_t, b_ih, b_hh, reverse):
        def step(h, inp):
            x_t, m_t = inp
            gx = jnp.dot(x_t, w_ih_t, precision=P) + b_ih
            gh = jnp.dot(h, w_hh_t, precision=P) + b_hh
            r = jax.nn.sigmoid(gx[:, :H] + gh[:, :H])
            z = jax.nn.sigmoid(gx[:, H:2 * H] + gh[:, H:2 * H])
            n = jnp.tanh(gx[:, 2 * H:] + r * gh[:, 2 * H:])
            h_new = ((1.0 - z) * n + z * h) * m_t
            return h_new, h_new
        h0 = jnp.zeros((B, H), jnp.float32)
        _, hs = lax.scan(step, h0, (x, mask), reverse=reverse)
        return hs

    hf = run_dir(params["w_ih_f_t"], params["w_hh_f_t"], params["b_ih_f"], params["b_hh_f"], False)
    hb = run_dir(params["w_ih_b_t"], params["w_hh_b_t"], params["b_ih_b"], params["b_hh_b"], True)
    out = jnp.concatenate([hf, hb], axis=-1)                                  # (T, B, 2H)
    u = jnp.tanh(jnp.dot(out, params["w_att_t"], precision=P) + params["b_att"])  # (T, B, D)
    logits = jnp.sum(u * params["ctx"], axis=-1)                              # (T, B)
    alpha = jax.nn.softmax(logits, axis=0)
    s = jnp.sum(alpha[:, :, None] * u, axis=0)
    return s, alpha


def init_params(key, V, E, H, D, padding_idx=0):
    ks = jax.random.split(key, 12)
    k_gru = 1.0 / np.sqrt(H)
    k_att = 1.0 / np.sqrt(2 * H)

    def u(k, shape, scale):
        return jax.random.uniform(k, shape, jnp.float32, -scale, scale)

    emb = jax.random.normal(ks[0], (V, E), jnp.float32) * 0.1
    emb = emb.at[padding_idx].set(0.0)   # nn.Embedding(padding_idx=...) zeroes that row

    return {
        "embedding": emb,
        "w_ih_f_t": u(ks[1], (E, 3 * H), k_gru),   # W_ih^T forward
        "w_hh_f_t": u(ks[2], (H, 3 * H), k_gru),   # W_hh^T forward
        "b_ih_f":   u(ks[3], (1, 3 * H), k_gru),
        "b_hh_f":   u(ks[4], (1, 3 * H), k_gru),
        "w_ih_b_t": u(ks[5], (E, 3 * H), k_gru),   # backward direction
        "w_hh_b_t": u(ks[6], (H, 3 * H), k_gru),
        "b_ih_b":   u(ks[7], (1, 3 * H), k_gru),
        "b_hh_b":   u(ks[8], (1, 3 * H), k_gru),
        "w_att_t":  u(ks[9], (2 * H, D), k_att),   # attention projection W^T
        "b_att":    u(ks[10], (1, D), k_att),
        "ctx":      jax.random.normal(ks[11], (1, 1, D), jnp.float32),  # context vector
    }


if __name__ == "__main__":
    key = jax.random.PRNGKey(0)
    V, E, H, D = 20, 32, 32, 16        # vocab, embedding_dim, gru_hidden_size, sentence_dim
    T, B = 8, 4                        # longest sentence length, number of sentences
    padding_idx = 0

    k_params, k_idx = jax.random.split(key)
    params = init_params(k_params, V, E, H, D, padding_idx)

    # emulate the `list[Tensor]` input: 4 sentences of lengths [8, 5, 7, 3], padded to T=8
    lengths = jnp.array([8, 5, 7, 3], dtype=jnp.int32)
    raw_idx = jax.random.randint(k_idx, (T, B), 1, V, dtype=jnp.int32)
    valid = jnp.arange(T)[:, None] < lengths[None, :]
    x_idx = jnp.where(valid, raw_idx, padding_idx)

    s, alpha = sentence_forward(x_idx, lengths, params)
    jax.block_until_ready((s, alpha))

    # Kernel uses single-pass bf16 MXU operands (f32 accumulation); reference is f32
    # HIGHEST precision, so tolerances account for bf16 operand rounding.
    s_ref, alpha_ref = reference_forward(x_idx, lengths, params)
    np.testing.assert_allclose(np.asarray(s), np.asarray(s_ref), rtol=5e-2, atol=1e-2)
    np.testing.assert_allclose(np.asarray(alpha), np.asarray(alpha_ref), rtol=5e-2, atol=1e-2)
    assert s.shape == (B, D) and alpha.shape == (T, B)

    print("KERNEL_OK")
</pallas_src>

<mosaic_0001>
module attributes {stable_mosaic.version = 11 : i64} {
  func.func @sentence_kernel(%arg0: memref<64x32xbf16, #tpu.memory_space<vmem>>, %arg1: memref<64x1xf32, #tpu.memory_space<vmem>>, %arg2: memref<32x768xbf16, #tpu.memory_space<vmem>>, %arg3: memref<1x768xf32, #tpu.memory_space<vmem>>, %arg4: memref<128x384xbf16, #tpu.memory_space<vmem>>, %arg5: memref<128x384xbf16, #tpu.memory_space<vmem>>, %arg6: memref<1x256xf32, #tpu.memory_space<vmem>>, %arg7: memref<256x128xbf16, #tpu.memory_space<vmem>>, %arg8: memref<1x128xf32, #tpu.memory_space<vmem>>, %arg9: memref<128x1xbf16, #tpu.memory_space<vmem>>, %arg10: memref<8x128xf32, #tpu.memory_space<vmem>>, %arg11: memref<64x1xf32, #tpu.memory_space<vmem>>) attributes {dimension_semantics = [], scalar_prefetch = 0 : i64, scratch_operands = 0 : i64, tpu.core_type = #tpu.core_type<tc>} {
    %c0 = arith.constant 0 : index
    %c0_0 = arith.constant 0 : index
    %0 = vector.load %arg0[%c0, %c0_0] : memref<64x32xbf16, #tpu.memory_space<vmem>>, vector<64x32xbf16>
    %c0_1 = arith.constant 0 : index
    %c0_2 = arith.constant 0 : index
    %1 = vector.load %arg2[%c0_1, %c0_2] : memref<32x768xbf16, #tpu.memory_space<vmem>>, vector<32x768xbf16>
    %cst = arith.constant dense<0.000000e+00> : vector<64x768xf32>
    %2 = tpu.matmul %0, %1, %cst {dimension_numbers = #tpu.dot_dimension_numbers<[1], [0], [0], [1], [0, 0, 1, 1], [], []>} : vector<64x32xbf16>, vector<32x768xbf16>, vector<64x768xf32> -> vector<64x768xf32>
    %c0_3 = arith.constant 0 : index
    %c0_4 = arith.constant 0 : index
    %3 = vector.load %arg3[%c0_3, %c0_4] : memref<1x768xf32, #tpu.memory_space<vmem>>, vector<1x768xf32>
    %4 = vector.broadcast %3 : vector<1x768xf32> to vector<64x768xf32>
    %5 = arith.addf %2, %4 : vector<64x768xf32>
    %c0_5 = arith.constant 0 : index
    %c0_6 = arith.constant 0 : index
    %6 = vector.load %arg1[%c0_5, %c0_6] : memref<64x1xf32, #tpu.memory_space<vmem>>, vector<64x1xf32>
    %c0_7 = arith.constant 0 : index
    %c0_8 = arith.constant 0 : index
    %7 = vector.load %arg4[%c0_7, %c0_8] : memref<128x384xbf16, #tpu.memory_space<vmem>>, vector<128x384xbf16>
    %c0_9 = arith.constant 0 : index
    %c0_10 = arith.constant 0 : index
    %8 = vector.load %arg5[%c0_9, %c0_10] : memref<128x384xbf16, #tpu.memory_space<vmem>>, vector<128x384xbf16>
    %c0_11 = arith.constant 0 : index
    %c0_12 = arith.constant 0 : index
    %9 = vector.load %arg6[%c0_11, %c0_12] : memref<1x256xf32, #tpu.memory_space<vmem>>, vector<1x128xf32>
    %c0_13 = arith.constant 0 : index
    %c128 = arith.constant 128 : index
    %10 = vector.load %arg6[%c0_13, %c128] : memref<1x256xf32, #tpu.memory_space<vmem>>, vector<1x128xf32>
    %cst_14 = arith.constant 0.000000e+00 : f32
    %11 = vector.broadcast %cst_14 : f32 to vector<8x128xf32>
    %cst_15 = arith.constant 0.000000e+00 : f32
    %12 = vector.broadcast %cst_15 : f32 to vector<8x128xf32>
    %13 = arith.truncf %11 : vector<8x128xf32> to vector<8x128xbf16>
    %cst_16 = arith.constant dense<0.000000e+00> : vector<8x384xf32>
    %14 = tpu.matmul %13, %7, %cst_16 {dimension_numbers = #tpu.dot_dimension_numbers<[1], [0], [0], [1], [0, 0, 1, 1], [], []>} : vector<8x128xbf16>, vector<128x384xbf16>, vector<8x384xf32> -> vector<8x384xf32>
    %15 = vector.extract_strided_slice %5 {offsets = [0, 0], sizes = [8, 128], strides = [1, 1]} : vector<64x768xf32> to vector<8x128xf32>
    %16 = vector.extract_strided_slice %14 {offsets = [0, 0], sizes = [8, 128], strides = [1, 1]} : vector<8x384xf32> to vector<8x128xf32>
    %17 = arith.addf %15, %16 : vector<8x128xf32>
    %18 = arith.negf %17 : vector<8x128xf32>
    %19 = math.exp %18 : vector<8x128xf32>
    %cst_17 = arith.constant 1.000000e+00 : f32
    %20 = vector.broadcast %cst_17 : f32 to vector<8x128xf32>
    %21 = arith.addf %20, %19 : vector<8x128xf32>
    %22 = arith.divf %20, %21 : vector<8x128xf32>
    %23 = vector.extract_strided_slice %5 {offsets = [0, 128], sizes = [8, 128], strides = [1, 1]} : vector<64x768xf32> to vector<8x128xf32>
    %24 = vector.extract_strided_slice %14 {offsets = [0, 128], sizes = [8, 128], strides = [1, 1]} : vector<8x384xf32> to vector<8x128xf32>
    %25 = arith.addf %23, %24 : vector<8x128xf32>
    %26 = arith.negf %25 : vector<8x128xf32>
    %27 = math.exp %26 : vector<8x128xf32>
    %cst_18 = arith.constant 1.000000e+00 : f32
    %28 = vector.broadcast %cst_18 : f32 to vector<8x128xf32>
    %29 = arith.addf %28, %27 : vector<8x128xf32>
    %30 = arith.divf %28, %29 : vector<8x128xf32>
    %31 = vector.extract_strided_slice %5 {offsets = [0, 256], sizes = [8, 128], strides = [1, 1]} : vector<64x768xf32> to vector<8x128xf32>
    %32 = vector.extract_strided_slice %14 {offsets = [0, 256], sizes = [8, 128], strides = [1, 1]} : vector<8x384xf32> to vector<8x128xf32>
    %33 = vector.broadcast %9 : vector<1x128xf32> to vector<8x128xf32>
    %34 = arith.addf %32, %33 : vector<8x128xf32>
    %35 = arith.mulf %22, %34 : vector<8x128xf32>
    %36 = arith.addf %31, %35 : vector<8x128xf32>
    %37 = math.tanh %36 : vector<8x128xf32>
    %cst_19 = arith.constant 1.000000e+00 : f32
    %38 = vector.broadcast %cst_19 : f32 to vector<8x128xf32>
    %39 = arith.subf %38, %30 : vector<8x128xf32>
    %40 = arith.mulf %39, %37 : vector<8x128xf32>
    %41 = arith.mulf %30, %11 : vector<8x128xf32>
    %42 = arith.addf %40, %41 : vector<8x128xf32>
    %43 = vector.extract_strided_slice %6 {offsets = [0, 0], sizes = [8, 1], strides = [1, 1]} : vector<64x1xf32> to vector<8x1xf32>
    %44 = vector.broadcast %43 : vector<8x1xf32> to vector<8x128xf32>
    %45 = arith.mulf %42, %44 : vector<8x128xf32>
    %46 = arith.truncf %12 : vector<8x128xf32> to vector<8x128xbf16>
    %cst_20 = arith.constant dense<0.000000e+00> : vector<8x384xf32>
    %47 = tpu.matmul %46, %8, %cst_20 {dimension_numbers = #tpu.dot_dimension_numbers<[1], [0], [0], [1], [0, 0, 1, 1], [], []>} : vector<8x128xbf16>, vector<128x384xbf16>, vector<8x384xf32> -> vector<8x384xf32>
    %48 = vector.extract_strided_slice %5 {offsets = [56, 384], sizes = [8, 128], strides = [1, 1]} : vector<64x768xf32> to vector<8x128xf32>
    %49 = vector.extract_strided_slice %47 {offsets = [0, 0], sizes = [8, 128], strides = [1, 1]} : vector<8x384xf32> to vector<8x128xf32>
    %50 = arith.addf %48, %49 : vector<8x128xf32>
    %51 = arith.negf %50 : vector<8x128xf32>
    %52 = math.exp %51 : vector<8x128xf32>
    %cst_21 = arith.constant 1.000000e+00 : f32
    %53 = vector.broadcast %cst_21 : f32 to vector<8x128xf32>
    %54 = arith.addf %53, %52 : vector<8x128xf32>
    %55 = arith.divf %53, %54 : vector<8x128xf32>
    %56 = vector.extract_strided_slice %5 {offsets = [56, 512], sizes = [8, 128], strides = [1, 1]} : vector<64x768xf32> to vector<8x128xf32>
    %57 = vector.extract_strided_slice %47 {offsets = [0, 128], sizes = [8, 128], strides = [1, 1]} : vector<8x384xf32> to vector<8x128xf32>
    %58 = arith.addf %56, %57 : vector<8x128xf32>
    %59 = arith.negf %58 : vector<8x128xf32>
    %60 = math.exp %59 : vector<8x128xf32>
    %cst_22 = arith.constant 1.000000e+00 : f32
    %61 = vector.broadcast %cst_22 : f32 to vector<8x128xf32>
    %62 = arith.addf %61, %60 : vector<8x128xf32>
    %63 = arith.divf %61, %62 : vector<8x128xf32>
    %64 = vector.extract_strided_slice %5 {offsets = [56, 640], sizes = [8, 128], strides = [1, 1]} : vector<64x768xf32> to vector<8x128xf32>
    %65 = vector.extract_strided_slice %47 {offsets = [0, 256], sizes = [8, 128], strides = [1, 1]} : vector<8x384xf32> to vector<8x128xf32>
    %66 = vector.broadcast %10 : vector<1x128xf32> to vector<8x128xf32>
    %67 = arith.addf %65, %66 : vector<8x128xf32>
    %68 = arith.mulf %55, %67 : vector<8x128xf32>
    %69 = arith.addf %64, %68 : vector<8x128xf32>
    %70 = math.tanh %69 : vector<8x128xf32>
    %cst_23 = arith.constant 1.000000e+00 : f32
    %71 = vector.broadcast %cst_23 : f32 to vector<8x128xf32>
    %72 = arith.subf %71, %63 : vector<8x128xf32>
    %73 = arith.mulf %72, %70 : vector<8x128xf32>
    %74 = arith.mulf %63, %12 : vector<8x128xf32>
    %75 = arith.addf %73, %74 : vector<8x128xf32>
    %76 = vector.extract_strided_slice %6 {offsets = [56, 0], sizes = [8, 1], strides = [1, 1]} : vector<64x1xf32> to vector<8x1xf32>
    %77 = vector.broadcast %76 : vector<8x1xf32> to vector<8x128xf32>
    %78 = arith.mulf %75, %77 : vector<8x128xf32>
    %79 = arith.truncf %45 : vector<8x128xf32> to vector<8x128xbf16>
    %cst_24 = arith.constant dense<0.000000e+00> : vector<8x384xf32>
    %80 = tpu.matmul %79, %7, %cst_24 {dimension_numbers = #tpu.dot_dimension_numbers<[1], [0], [0], [1], [0, 0, 1, 1], [], []>} : vector<8x128xbf16>, vector<128x384xbf16>, vector<8x384xf32> -> vector<8x384xf32>
    %81 = vector.extract_strided_slice %5 {offsets = [8, 0], sizes = [8, 128], strides = [1, 1]} : vector<64x768xf32> to vector<8x128xf32>
    %82 = vector.extract_strided_slice %80 {offsets = [0, 0], sizes = [8, 128], strides = [1, 1]} : vector<8x384xf32> to vector<8x128xf32>
    %83 = arith.addf %81, %82 : vector<8x128xf32>
    %84 = arith.negf %83 : vector<8x128xf32>
    %85 = math.exp %84 : vector<8x128xf32>
    %cst_25 = arith.constant 1.000000e+00 : f32
    %86 = vector.broadcast %cst_25 : f32 to vector<8x128xf32>
    %87 = arith.addf %86, %85 : vector<8x128xf32>
    %88 = arith.divf %86, %87 : vector<8x128xf32>
    %89 = vector.extract_strided_slice %5 {offsets = [8, 128], sizes = [8, 128], strides = [1, 1]} : vector<64x768xf32> to vector<8x128xf32>
    %90 = vector.extract_strided_slice %80 {offsets = [0, 128], sizes = [8, 128], strides = [1, 1]} : vector<8x384xf32> to vector<8x128xf32>
    %91 = arith.addf %89, %90 : vector<8x128xf32>
    %92 = arith.negf %91 : vector<8x128xf32>
    %93 = math.exp %92 : vector<8x128xf32>
    %cst_26 = arith.constant 1.000000e+00 : f32
    %94 = vector.broadcast %cst_26 : f32 to vector<8x128xf32>
    %95 = arith.addf %94, %93 : vector<8x128xf32>
    %96 = arith.divf %94, %95 : vector<8x128xf32>
    %97 = vector.extract_strided_slice %5 {offsets = [8, 256], sizes = [8, 128], strides = [1, 1]} : vector<64x768xf32> to vector<8x128xf32>
    %98 = vector.extract_strided_slice %80 {offsets = [0, 256], sizes = [8, 128], strides = [1, 1]} : vector<8x384xf32> to vector<8x128xf32>
    %99 = vector.broadcast %9 : vector<1x128xf32> to vector<8x128xf32>
    %100 = arith.addf %98, %99 : vector<8x128xf32>
    %101 = arith.mulf %88, %100 : vector<8x128xf32>
    %102 = arith.addf %97, %101 : vector<8x128xf32>
    %103 = math.tanh %102 : vector<8x128xf32>
    %cst_27 = arith.constant 1.000000e+00 : f32
    %104 = vector.broadcast %cst_27 : f32 to vector<8x128xf32>
    %105 = arith.subf %104, %96 : vector<8x128xf32>
    %106 = arith.mulf %105, %103 : vector<8x128xf32>
    %107 = arith.mulf %96, %45 : vector<8x128xf32>
    %108 = arith.addf %106, %107 : vector<8x128xf32>
    %109 = vector.extract_strided_slice %6 {offsets = [8, 0], sizes = [8, 1], strides = [1, 1]} : vector<64x1xf32> to vector<8x1xf32>
    %110 = vector.broadcast %109 : vector<8x1xf32> to vector<8x128xf32>
    %111 = arith.mulf %108, %110 : vector<8x128xf32>
    %112 = arith.truncf %78 : vector<8x128xf32> to vector<8x128xbf16>
    %cst_28 = arith.constant dense<0.000000e+00> : vector<8x384xf32>
    %113 = tpu.matmul %112, %8, %cst_28 {dimension_numbers = #tpu.dot_dimension_numbers<[1], [0], [0], [1], [0, 0, 1, 1], [], []>} : vector<8x128xbf16>, vector<128x384xbf16>, vector<8x384xf32> -> vector<8x384xf32>
    %114 = vector.extract_strided_slice %5 {offsets = [48, 384], sizes = [8, 128], strides = [1, 1]} : vector<64x768xf32> to vector<8x128xf32>
    %115 = vector.extract_strided_slice %113 {offsets = [0, 0], sizes = [8, 128], strides = [1, 1]} : vector<8x384xf32> to vector<8x128xf32>
    %116 = arith.addf %114, %115 : vector<8x128xf32>
    %117 = arith.negf %116 : vector<8x128xf32>
    %118 = math.exp %117 : vector<8x128xf32>
    %cst_29 = arith.constant 1.000000e+00 : f32
    %119 = vector.broadcast %cst_29 : f32 to vector<8x128xf32>
    %120 = arith.addf %119, %118 : vector<8x128xf32>
    %121 = arith.divf %119, %120 : vector<8x128xf32>
    %122 = vector.extract_strided_slice %5 {offsets = [48, 512], sizes = [8, 128], strides = [1, 1]} : vector<64x768xf32> to vector<8x128xf32>
    %123 = vector.extract_strided_slice %113 {offsets = [0, 128], sizes = [8, 128], strides = [1, 1]} : vector<8x384xf32> to vector<8x128xf32>
    %124 = arith.addf %122, %123 : vector<8x128xf32>
    %125 = arith.negf %124 : vector<8x128xf32>
    %126 = math.exp %125 : vector<8x128xf32>
    %cst_30 = arith.constant 1.000000e+00 : f32
    %127 = vector.broadcast %cst_30 : f32 to vector<8x128xf32>
    %128 = arith.addf %127, %126 : vector<8x128xf32>
    %129 = arith.divf %127, %128 : vector<8x128xf32>
    %130 = vector.extract_strided_slice %5 {offsets = [48, 640], sizes = [8, 128], strides = [1, 1]} : vector<64x768xf32> to vector<8x128xf32>
    %131 = vector.extract_strided_slice %113 {offsets = [0, 256], sizes = [8, 128], strides = [1, 1]} : vector<8x384xf32> to vector<8x128xf32>
    %132 = vector.broadcast %10 : vector<1x128xf32> to vector<8x128xf32>
    %133 = arith.addf %131, %132 : vector<8x128xf32>
    %134 = arith.mulf %121, %133 : vector<8x128xf32>
    %135 = arith.addf %130, %134 : vector<8x128xf32>
    %136 = math.tanh %135 : vector<8x128xf32>
    %cst_31 = arith.constant 1.000000e+00 : f32
    %137 = vector.broadcast %cst_31 : f32 to vector<8x128xf32>
    %138 = arith.subf %137, %129 : vector<8x128xf32>
    %139 = arith.mulf %138, %136 : vector<8x128xf32>
    %140 = arith.mulf %129, %78 : vector<8x128xf32>
    %141 = arith.addf %139, %140 : vector<8x128xf32>
    %142 = vector.extract_strided_slice %6 {offsets = [48, 0], sizes = [8, 1], strides = [1, 1]} : vector<64x1xf32> to vector<8x1xf32>
    %143 = vector.broadcast %142 : vector<8x1xf32> to vector<8x128xf32>
    %144 = arith.mulf %141, %143 : vector<8x128xf32>
    %145 = arith.truncf %111 : vector<8x128xf32> to vector<8x128xbf16>
    %cst_32 = arith.constant dense<0.000000e+00> : vector<8x384xf32>
    %146 = tpu.matmul %145, %7, %cst_32 {dimension_numbers = #tpu.dot_dimension_numbers<[1], [0], [0], [1], [0, 0, 1, 1], [], []>} : vector<8x128xbf16>, vector<128x384xbf16>, vector<8x384xf32> -> vector<8x384xf32>
    %147 = vector.extract_strided_slice %5 {offsets = [16, 0], sizes = [8, 128], strides = [1, 1]} : vector<64x768xf32> to vector<8x128xf32>
    %148 = vector.extract_strided_slice %146 {offsets = [0, 0], sizes = [8, 128], strides = [1, 1]} : vector<8x384xf32> to vector<8x128xf32>
    %149 = arith.addf %147, %148 : vector<8x128xf32>
    %150 = arith.negf %149 : vector<8x128xf32>
    %151 = math.exp %150 : vector<8x128xf32>
    %cst_33 = arith.constant 1.000000e+00 : f32
    %152 = vector.broadcast %cst_33 : f32 to vector<8x128xf32>
    %153 = arith.addf %152, %151 : vector<8x128xf32>
    %154 = arith.divf %152, %153 : vector<8x128xf32>
    %155 = vector.extract_strided_slice %5 {offsets = [16, 128], sizes = [8, 128], strides = [1, 1]} : vector<64x768xf32> to vector<8x128xf32>
    %156 = vector.extract_strided_slice %146 {offsets = [0, 128], sizes = [8, 128], strides = [1, 1]} : vector<8x384xf32> to vector<8x128xf32>
    %157 = arith.addf %155, %156 : vector<8x128xf32>
    %158 = arith.negf %157 : vector<8x128xf32>
    %159 = math.exp %158 : vector<8x128xf32>
    %cst_34 = arith.constant 1.000000e+00 : f32
    %160 = vector.broadcast %cst_34 : f32 to vector<8x128xf32>
    %161 = arith.addf %160, %159 : vector<8x128xf32>
    %162 = arith.divf %160, %161 : vector<8x128xf32>
    %163 = vector.extract_strided_slice %5 {offsets = [16, 256], sizes = [8, 128], strides = [1, 1]} : vector<64x768xf32> to vector<8x128xf32>
    %164 = vector.extract_strided_slice %146 {offsets = [0, 256], sizes = [8, 128], strides = [1, 1]} : vector<8x384xf32> to vector<8x128xf32>
    %165 = vector.broadcast %9 : vector<1x128xf32> to vector<8x128xf32>
    %166 = arith.addf %164, %165 : vector<8x128xf32>
    %167 = arith.mulf %154, %166 : vector<8x128xf32>
    %168 = arith.addf %163, %167 : vector<8x128xf32>
    %169 = math.tanh %168 : vector<8x128xf32>
    %cst_35 = arith.constant 1.000000e+00 : f32
    %170 = vector.broadcast %cst_35 : f32 to vector<8x128xf32>
    %171 = arith.subf %170, %162 : vector<8x128xf32>
    %172 = arith.mulf %171, %169 : vector<8x128xf32>
    %173 = arith.mulf %162, %111 : vector<8x128xf32>
    %174 = arith.addf %172, %173 : vector<8x128xf32>
    %175 = vector.extract_strided_slice %6 {offsets = [16, 0], sizes = [8, 1], strides = [1, 1]} : vector<64x1xf32> to vector<8x1xf32>
    %176 = vector.broadcast %175 : vector<8x1xf32> to vector<8x128xf32>
    %177 = arith.mulf %174, %176 : vector<8x128xf32>
    %178 = arith.truncf %144 : vector<8x128xf32> to vector<8x128xbf16>
    %cst_36 = arith.constant dense<0.000000e+00> : vector<8x384xf32>
    %179 = tpu.matmul %178, %8, %cst_36 {dimension_numbers = #tpu.dot_dimension_numbers<[1], [0], [0], [1], [0, 0, 1, 1], [], []>} : vector<8x128xbf16>, vector<128x384xbf16>, vector<8x384xf32> -> vector<8x384xf32>
    %180 = vector.extract_strided_slice %5 {offsets = [40, 384], sizes = [8, 128], strides = [1, 1]} : vector<64x768xf32> to vector<8x128xf32>
    %181 = vector.extract_strided_slice %179 {offsets = [0, 0], sizes = [8, 128], strides = [1, 1]} : vector<8x384xf32> to vector<8x128xf32>
    %182 = arith.addf %180, %181 : vector<8x128xf32>
    %183 = arith.negf %182 : vector<8x128xf32>
    %184 = math.exp %183 : vector<8x128xf32>
    %cst_37 = arith.constant 1.000000e+00 : f32
    %185 = vector.broadcast %cst_37 : f32 to vector<8x128xf32>
    %186 = arith.addf %185, %184 : vector<8x128xf32>
    %187 = arith.divf %185, %186 : vector<8x128xf32>
    %188 = vector.extract_strided_slice %5 {offsets = [40, 512], sizes = [8, 128], strides = [1, 1]} : vector<64x768xf32> to vector<8x128xf32>
    %189 = vector.extract_strided_slice %179 {offsets = [0, 128], sizes = [8, 128], strides = [1, 1]} : vector<8x384xf32> to vector<8x128xf32>
    %190 = arith.addf %188, %189 : vector<8x128xf32>
    %191 = arith.negf %190 : vector<8x128xf32>
    %192 = math.exp %191 : vector<8x128xf32>
    %cst_38 = arith.constant 1.000000e+00 : f32
    %193 = vector.broadcast %cst_38 : f32 to vector<8x128xf32>
    %194 = arith.addf %193, %192 : vector<8x128xf32>
    %195 = arith.divf %193, %194 : vector<8x128xf32>
    %196 = vector.extract_strided_slice %5 {offsets = [40, 640], sizes = [8, 128], strides = [1, 1]} : vector<64x768xf32> to vector<8x128xf32>
    %197 = vector.extract_strided_slice %179 {offsets = [0, 256], sizes = [8, 128], strides = [1, 1]} : vector<8x384xf32> to vector<8x128xf32>
    %198 = vector.broadcast %10 : vector<1x128xf32> to vector<8x128xf32>
    %199 = arith.addf %197, %198 : vector<8x128xf32>
    %200 = arith.mulf %187, %199 : vector<8x128xf32>
    %201 = arith.addf %196, %200 : vector<8x128xf32>
    %202 = math.tanh %201 : vector<8x128xf32>
    %cst_39 = arith.constant 1.000000e+00 : f32
    %203 = vector.broadcast %cst_39 : f32 to vector<8x128xf32>
    %204 = arith.subf %203, %195 : vector<8x128xf32>
    %205 = arith.mulf %204, %202 : vector<8x128xf32>
    %206 = arith.mulf %195, %144 : vector<8x128xf32>
    %207 = arith.addf %205, %206 : vector<8x128xf32>
    %208 = vector.extract_strided_slice %6 {offsets = [40, 0], sizes = [8, 1], strides = [1, 1]} : vector<64x1xf32> to vector<8x1xf32>
    %209 = vector.broadcast %208 : vector<8x1xf32> to vector<8x128xf32>
    %210 = arith.mulf %207, %209 : vector<8x128xf32>
    %211 = arith.truncf %177 : vector<8x128xf32> to vector<8x128xbf16>
    %cst_40 = arith.constant dense<0.000000e+00> : vector<8x384xf32>
    %212 = tpu.matmul %211, %7, %cst_40 {dimension_numbers = #tpu.dot_dimension_numbers<[1], [0], [0], [1], [0, 0, 1, 1], [], []>} : vector<8x128xbf16>, vector<128x384xbf16>, vector<8x384xf32> -> vector<8x384xf32>
    %213 = vector.extract_strided_slice %5 {offsets = [24, 0], sizes = [8, 128], strides = [1, 1]} : vector<64x768xf32> to vector<8x128xf32>
    %214 = vector.extract_strided_slice %212 {offsets = [0, 0], sizes = [8, 128], strides = [1, 1]} : vector<8x384xf32> to vector<8x128xf32>
    %215 = arith.addf %213, %214 : vector<8x128xf32>
    %216 = arith.negf %215 : vector<8x128xf32>
    %217 = math.exp %216 : vector<8x128xf32>
    %cst_41 = arith.constant 1.000000e+00 : f32
    %218 = vector.broadcast %cst_41 : f32 to vector<8x128xf32>
    %219 = arith.addf %218, %217 : vector<8x128xf32>
    %220 = arith.divf %218, %219 : vector<8x128xf32>
    %221 = vector.extract_strided_slice %5 {offsets = [24, 128], sizes = [8, 128], strides = [1, 1]} : vector<64x768xf32> to vector<8x128xf32>
    %222 = vector.extract_strided_slice %212 {offsets = [0, 128], sizes = [8, 128], strides = [1, 1]} : vector<8x384xf32> to vector<8x128xf32>
    %223 = arith.addf %221, %222 : vector<8x128xf32>
    %224 = arith.negf %223 : vector<8x128xf32>
    %225 = math.exp %224 : vector<8x128xf32>
    %cst_42 = arith.constant 1.000000e+00 : f32
    %226 = vector.broadcast %cst_42 : f32 to vector<8x128xf32>
    %227 = arith.addf %226, %225 : vector<8x128xf32>
    %228 = arith.divf %226, %227 : vector<8x128xf32>
    %229 = vector.extract_strided_slice %5 {offsets = [24, 256], sizes = [8, 128], strides = [1, 1]} : vector<64x768xf32> to vector<8x128xf32>
    %230 = vector.extract_strided_slice %212 {offsets = [0, 256], sizes = [8, 128], strides = [1, 1]} : vector<8x384xf32> to vector<8x128xf32>
    %231 = vector.broadcast %9 : vector<1x128xf32> to vector<8x128xf32>
    %232 = arith.addf %230, %231 : vector<8x128xf32>
    %233 = arith.mulf %220, %232 : vector<8x128xf32>
    %234 = arith.addf %229, %233 : vector<8x128xf32>
    %235 = math.tanh %234 : vector<8x128xf32>
    %cst_43 = arith.constant 1.000000e+00 : f32
    %236 = vector.broadcast %cst_43 : f32 to vector<8x128xf32>
    %237 = arith.subf %236, %228 : vector<8x128xf32>
    %238 = arith.mulf %237, %235 : vector<8x128xf32>
    %239 = arith.mulf %228, %177 : vector<8x128xf32>
    %240 = arith.addf %238, %239 : vector<8x128xf32>
    %241 = vector.extract_strided_slice %6 {offsets = [24, 0], sizes = [8, 1], strides = [1, 1]} : vector<64x1xf32> to vector<8x1xf32>
    %242 = vector.broadcast %241 : vector<8x1xf32> to vector<8x128xf32>
    %243 = arith.mulf %240, %242 : vector<8x128xf32>
    %244 = arith.truncf %210 : vector<8x128xf32> to vector<8x128xbf16>
    %cst_44 = arith.constant dense<0.000000e+00> : vector<8x384xf32>
    %245 = tpu.matmul %244, %8, %cst_44 {dimension_numbers = #tpu.dot_dimension_numbers<[1], [0], [0], [1], [0, 0, 1, 1], [], []>} : vector<8x128xbf16>, vector<128x384xbf16>, vector<8x384xf32> -> vector<8x384xf32>
    %246 = vector.extract_strided_slice %5 {offsets = [32, 384], sizes = [8, 128], strides = [1, 1]} : vector<64x768xf32> to vector<8x128xf32>
    %247 = vector.extract_strided_slice %245 {offsets = [0, 0], sizes = [8, 128], strides = [1, 1]} : vector<8x384xf32> to vector<8x128xf32>
    %248 = arith.addf %246, %247 : vector<8x128xf32>
    %249 = arith.negf %248 : vector<8x128xf32>
    %250 = math.exp %249 : vector<8x128xf32>
    %cst_45 = arith.constant 1.000000e+00 : f32
    %251 = vector.broadcast %cst_45 : f32 to vector<8x128xf32>
    %252 = arith.addf %251, %250 : vector<8x128xf32>
    %253 = arith.divf %251, %252 : vector<8x128xf32>
    %254 = vector.extract_strided_slice %5 {offsets = [32, 512], sizes = [8, 128], strides = [1, 1]} : vector<64x768xf32> to vector<8x128xf32>
    %255 = vector.extract_strided_slice %245 {offsets = [0, 128], sizes = [8, 128], strides = [1, 1]} : vector<8x384xf32> to vector<8x128xf32>
    %256 = arith.addf %254, %255 : vector<8x128xf32>
    %257 = arith.negf %256 : vector<8x128xf32>
    %258 = math.exp %257 : vector<8x128xf32>
    %cst_46 = arith.constant 1.000000e+00 : f32
    %259 = vector.broadcast %cst_46 : f32 to vector<8x128xf32>
    %260 = arith.addf %259, %258 : vector<8x128xf32>
    %261 = arith.divf %259, %260 : vector<8x128xf32>
    %262 = vector.extract_strided_slice %5 {offsets = [32, 640], sizes = [8, 128], strides = [1, 1]} : vector<64x768xf32> to vector<8x128xf32>
    %263 = vector.extract_strided_slice %245 {offsets = [0, 256], sizes = [8, 128], strides = [1, 1]} : vector<8x384xf32> to vector<8x128xf32>
    %264 = vector.broadcast %10 : vector<1x128xf32> to vector<8x128xf32>
    %265 = arith.addf %263, %264 : vector<8x128xf32>
    %266 = arith.mulf %253, %265 : vector<8x128xf32>
    %267 = arith.addf %262, %266 : vector<8x128xf32>
    %268 = math.tanh %267 : vector<8x128xf32>
    %cst_47 = arith.constant 1.000000e+00 : f32
    %269 = vector.broadcast %cst_47 : f32 to vector<8x128xf32>
    %270 = arith.subf %269, %261 : vector<8x128xf32>
    %271 = arith.mulf %270, %268 : vector<8x128xf32>
    %272 = arith.mulf %261, %210 : vector<8x128xf32>
    %273 = arith.addf %271, %272 : vector<8x128xf32>
    %274 = vector.extract_strided_slice %6 {offsets = [32, 0], sizes = [8, 1], strides = [1, 1]} : vector<64x1xf32> to vector<8x1xf32>
    %275 = vector.broadcast %274 : vector<8x1xf32> to vector<8x128xf32>
    %276 = arith.mulf %273, %275 : vector<8x128xf32>
    %277 = arith.truncf %243 : vector<8x128xf32> to vector<8x128xbf16>
    %cst_48 = arith.constant dense<0.000000e+00> : vector<8x384xf32>
    %278 = tpu.matmul %277, %7, %cst_48 {dimension_numbers = #tpu.dot_dimension_numbers<[1], [0], [0], [1], [0, 0, 1, 1], [], []>} : vector<8x128xbf16>, vector<128x384xbf16>, vector<8x384xf32> -> vector<8x384xf32>
    %279 = vector.extract_strided_slice %5 {offsets = [32, 0], sizes = [8, 128], strides = [1, 1]} : vector<64x768xf32> to vector<8x128xf32>
    %280 = vector.extract_strided_slice %278 {offsets = [0, 0], sizes = [8, 128], strides = [1, 1]} : vector<8x384xf32> to vector<8x128xf32>
    %281 = arith.addf %279, %280 : vector<8x128xf32>
    %282 = arith.negf %281 : vector<8x128xf32>
    %283 = math.exp %282 : vector<8x128xf32>
    %cst_49 = arith.constant 1.000000e+00 : f32
    %284 = vector.broadcast %cst_49 : f32 to vector<8x128xf32>
    %285 = arith.addf %284, %283 : vector<8x128xf32>
    %286 = arith.divf %284, %285 : vector<8x128xf32>
    %287 = vector.extract_strided_slice %5 {offsets = [32, 128], sizes = [8, 128], strides = [1, 1]} : vector<64x768xf32> to vector<8x128xf32>
    %288 = vector.extract_strided_slice %278 {offsets = [0, 128], sizes = [8, 128], strides = [1, 1]} : vector<8x384xf32> to vector<8x128xf32>
    %289 = arith.addf %287, %288 : vector<8x128xf32>
    %290 = arith.negf %289 : vector<8x128xf32>
    %291 = math.exp %290 : vector<8x128xf32>
    %cst_50 = arith.constant 1.000000e+00 : f32
    %292 = vector.broadcast %cst_50 : f32 to vector<8x128xf32>
    %293 = arith.addf %292, %291 : vector<8x128xf32>
    %294 = arith.divf %292, %293 : vector<8x128xf32>
    %295 = vector.extract_strided_slice %5 {offsets = [32, 256], sizes = [8, 128], strides = [1, 1]} : vector<64x768xf32> to vector<8x128xf32>
    %296 = vector.extract_strided_slice %278 {offsets = [0, 256], sizes = [8, 128], strides = [1, 1]} : vector<8x384xf32> to vector<8x128xf32>
    %297 = vector.broadcast %9 : vector<1x128xf32> to vector<8x128xf32>
    %298 = arith.addf %296, %297 : vector<8x128xf32>
    %299 = arith.mulf %286, %298 : vector<8x128xf32>
    %300 = arith.addf %295, %299 : vector<8x128xf32>
    %301 = math.tanh %300 : vector<8x128xf32>
    %cst_51 = arith.constant 1.000000e+00 : f32
    %302 = vector.broadcast %cst_51 : f32 to vector<8x128xf32>
    %303 = arith.subf %302, %294 : vector<8x128xf32>
    %304 = arith.mulf %303, %301 : vector<8x128xf32>
    %305 = arith.mulf %294, %243 : vector<8x128xf32>
    %306 = arith.addf %304, %305 : vector<8x128xf32>
    %307 = vector.extract_strided_slice %6 {offsets = [32, 0], sizes = [8, 1], strides = [1, 1]} : vector<64x1xf32> to vector<8x1xf32>
    %308 = vector.broadcast %307 : vector<8x1xf32> to vector<8x128xf32>
    %309 = arith.mulf %306, %308 : vector<8x128xf32>
    %310 = arith.truncf %276 : vector<8x128xf32> to vector<8x128xbf16>
    %cst_52 = arith.constant dense<0.000000e+00> : vector<8x384xf32>
    %311 = tpu.matmul %310, %8, %cst_52 {dimension_numbers = #tpu.dot_dimension_numbers<[1], [0], [0], [1], [0, 0, 1, 1], [], []>} : vector<8x128xbf16>, vector<128x384xbf16>, vector<8x384xf32> -> vector<8x384xf32>
    %312 = vector.extract_strided_slice %5 {offsets = [24, 384], sizes = [8, 128], strides = [1, 1]} : vector<64x768xf32> to vector<8x128xf32>
    %313 = vector.extract_strided_slice %311 {offsets = [0, 0], sizes = [8, 128], strides = [1, 1]} : vector<8x384xf32> to vector<8x128xf32>
    %314 = arith.addf %312, %313 : vector<8x128xf32>
    %315 = arith.negf %314 : vector<8x128xf32>
    %316 = math.exp %315 : vector<8x128xf32>
    %cst_53 = arith.constant 1.000000e+00 : f32
    %317 = vector.broadcast %cst_53 : f32 to vector<8x128xf32>
    %318 = arith.addf %317, %316 : vector<8x128xf32>
    %319 = arith.divf %317, %318 : vector<8x128xf32>
    %320 = vector.extract_strided_slice %5 {offsets = [24, 512], sizes = [8, 128], strides = [1, 1]} : vector<64x768xf32> to vector<8x128xf32>
    %321 = vector.extract_strided_slice %311 {offsets = [0, 128], sizes = [8, 128], strides = [1, 1]} : vector<8x384xf32> to vector<8x128xf32>
    %322 = arith.addf %320, %321 : vector<8x128xf32>
    %323 = arith.negf %322 : vector<8x128xf32>
    %324 = math.exp %323 : vector<8x128xf32>
    %cst_54 = arith.constant 1.000000e+00 : f32
    %325 = vector.broadcast %cst_54 : f32 to vector<8x128xf32>
    %326 = arith.addf %325, %324 : vector<8x128xf32>
    %327 = arith.divf %325, %326 : vector<8x128xf32>
    %328 = vector.extract_strided_slice %5 {offsets = [24, 640], sizes = [8, 128], strides = [1, 1]} : vector<64x768xf32> to vector<8x128xf32>
    %329 = vector.extract_strided_slice %311 {offsets = [0, 256], sizes = [8, 128], strides = [1, 1]} : vector<8x384xf32> to vector<8x128xf32>
    %330 = vector.broadcast %10 : vector<1x128xf32> to vector<8x128xf32>
    %331 = arith.addf %329, %330 : vector<8x128xf32>
    %332 = arith.mulf %319, %331 : vector<8x128xf32>
    %333 = arith.addf %328, %332 : vector<8x128xf32>
    %334 = math.tanh %333 : vector<8x128xf32>
    %cst_55 = arith.constant 1.000000e+00 : f32
    %335 = vector.broadcast %cst_55 : f32 to vector<8x128xf32>
    %336 = arith.subf %335, %327 : vector<8x128xf32>
    %337 = arith.mulf %336, %334 : vector<8x128xf32>
    %338 = arith.mulf %327, %276 : vector<8x128xf32>
    %339 = arith.addf %337, %338 : vector<8x128xf32>
    %340 = vector.extract_strided_slice %6 {offsets = [24, 0], sizes = [8, 1], strides = [1, 1]} : vector<64x1xf32> to vector<8x1xf32>
    %341 = vector.broadcast %340 : vector<8x1xf32> to vector<8x128xf32>
    %342 = arith.mulf %339, %341 : vector<8x128xf32>
    %343 = arith.truncf %309 : vector<8x128xf32> to vector<8x128xbf16>
    %cst_56 = arith.constant dense<0.000000e+00> : vector<8x384xf32>
    %344 = tpu.matmul %343, %7, %cst_56 {dimension_numbers = #tpu.dot_dimension_numbers<[1], [0], [0], [1], [0, 0, 1, 1], [], []>} : vector<8x128xbf16>, vector<128x384xbf16>, vector<8x384xf32> -> vector<8x384xf32>
    %345 = vector.extract_strided_slice %5 {offsets = [40, 0], sizes = [8, 128], strides = [1, 1]} : vector<64x768xf32> to vector<8x128xf32>
    %346 = vector.extract_strided_slice %344 {offsets = [0, 0], sizes = [8, 128], strides = [1, 1]} : vector<8x384xf32> to vector<8x128xf32>
    %347 = arith.addf %345, %346 : vector<8x128xf32>
    %348 = arith.negf %347 : vector<8x128xf32>
    %349 = math.exp %348 : vector<8x128xf32>
    %cst_57 = arith.constant 1.000000e+00 : f32
    %350 = vector.broadcast %cst_57 : f32 to vector<8x128xf32>
    %351 = arith.addf %350, %349 : vector<8x128xf32>
    %352 = arith.divf %350, %351 : vector<8x128xf32>
    %353 = vector.extract_strided_slice %5 {offsets = [40, 128], sizes = [8, 128], strides = [1, 1]} : vector<64x768xf32> to vector<8x128xf32>
    %354 = vector.extract_strided_slice %344 {offsets = [0, 128], sizes = [8, 128], strides = [1, 1]} : vector<8x384xf32> to vector<8x128xf32>
    %355 = arith.addf %353, %354 : vector<8x128xf32>
    %356 = arith.negf %355 : vector<8x128xf32>
    %357 = math.exp %356 : vector<8x128xf32>
    %cst_58 = arith.constant 1.000000e+00 : f32
    %358 = vector.broadcast %cst_58 : f32 to vector<8x128xf32>
    %359 = arith.addf %358, %357 : vector<8x128xf32>
    %360 = arith.divf %358, %359 : vector<8x128xf32>
    %361 = vector.extract_strided_slice %5 {offsets = [40, 256], sizes = [8, 128], strides = [1, 1]} : vector<64x768xf32> to vector<8x128xf32>
    %362 = vector.extract_strided_slice %344 {offsets = [0, 256], sizes = [8, 128], strides = [1, 1]} : vector<8x384xf32> to vector<8x128xf32>
    %363 = vector.broadcast %9 : vector<1x128xf32> to vector<8x128xf32>
    %364 = arith.addf %362, %363 : vector<8x128xf32>
    %365 = arith.mulf %352, %364 : vector<8x128xf32>
    %366 = arith.addf %361, %365 : vector<8x128xf32>
    %367 = math.tanh %366 : vector<8x128xf32>
    %cst_59 = arith.constant 1.000000e+00 : f32
    %368 = vector.broadcast %cst_59 : f32 to vector<8x128xf32>
    %369 = arith.subf %368, %360 : vector<8x128xf32>
    %370 = arith.mulf %369, %367 : vector<8x128xf32>
    %371 = arith.mulf %360, %309 : vector<8x128xf32>
    %372 = arith.addf %370, %371 : vector<8x128xf32>
    %373 = vector.extract_strided_slice %6 {offsets = [40, 0], sizes = [8, 1], strides = [1, 1]} : vector<64x1xf32> to vector<8x1xf32>
    %374 = vector.broadcast %373 : vector<8x1xf32> to vector<8x128xf32>
    %375 = arith.mulf %372, %374 : vector<8x128xf32>
    %376 = arith.truncf %342 : vector<8x128xf32> to vector<8x128xbf16>
    %cst_60 = arith.constant dense<0.000000e+00> : vector<8x384xf32>
    %377 = tpu.matmul %376, %8, %cst_60 {dimension_numbers = #tpu.dot_dimension_numbers<[1], [0], [0], [1], [0, 0, 1, 1], [], []>} : vector<8x128xbf16>, vector<128x384xbf16>, vector<8x384xf32> -> vector<8x384xf32>
    %378 = vector.extract_strided_slice %5 {offsets = [16, 384], sizes = [8, 128], strides = [1, 1]} : vector<64x768xf32> to vector<8x128xf32>
    %379 = vector.extract_strided_slice %377 {offsets = [0, 0], sizes = [8, 128], strides = [1, 1]} : vector<8x384xf32> to vector<8x128xf32>
    %380 = arith.addf %378, %379 : vector<8x128xf32>
    %381 = arith.negf %380 : vector<8x128xf32>
    %382 = math.exp %381 : vector<8x128xf32>
    %cst_61 = arith.constant 1.000000e+00 : f32
    %383 = vector.broadcast %cst_61 : f32 to vector<8x128xf32>
    %384 = arith.addf %383, %382 : vector<8x128xf32>
    %385 = arith.divf %383, %384 : vector<8x128xf32>
    %386 = vector.extract_strided_slice %5 {offsets = [16, 512], sizes = [8, 128], strides = [1, 1]} : vector<64x768xf32> to vector<8x128xf32>
    %387 = vector.extract_strided_slice %377 {offsets = [0, 128], sizes = [8, 128], strides = [1, 1]} : vector<8x384xf32> to vector<8x128xf32>
    %388 = arith.addf %386, %387 : vector<8x128xf32>
    %389 = arith.negf %388 : vector<8x128xf32>
    %390 = math.exp %389 : vector<8x128xf32>
    %cst_62 = arith.constant 1.000000e+00 : f32
    %391 = vector.broadcast %cst_62 : f32 to vector<8x128xf32>
    %392 = arith.addf %391, %390 : vector<8x128xf32>
    %393 = arith.divf %391, %392 : vector<8x128xf32>
    %394 = vector.extract_strided_slice %5 {offsets = [16, 640], sizes = [8, 128], strides = [1, 1]} : vector<64x768xf32> to vector<8x128xf32>
    %395 = vector.extract_strided_slice %377 {offsets = [0, 256], sizes = [8, 128], strides = [1, 1]} : vector<8x384xf32> to vector<8x128xf32>
    %396 = vector.broadcast %10 : vector<1x128xf32> to vector<8x128xf32>
    %397 = arith.addf %395, %396 : vector<8x128xf32>
    %398 = arith.mulf %385, %397 : vector<8x128xf32>
    %399 = arith.addf %394, %398 : vector<8x128xf32>
    %400 = math.tanh %399 : vector<8x128xf32>
    %cst_63 = arith.constant 1.000000e+00 : f32
    %401 = vector.broadcast %cst_63 : f32 to vector<8x128xf32>
    %402 = arith.subf %401, %393 : vector<8x128xf32>
    %403 = arith.mulf %402, %400 : vector<8x128xf32>
    %404 = arith.mulf %393, %342 : vector<8x128xf32>
    %405 = arith.addf %403, %404 : vector<8x128xf32>
    %406 = vector.extract_strided_slice %6 {offsets = [16, 0], sizes = [8, 1], strides = [1, 1]} : vector<64x1xf32> to vector<8x1xf32>
    %407 = vector.broadcast %406 : vector<8x1xf32> to vector<8x128xf32>
    %408 = arith.mulf %405, %407 : vector<8x128xf32>
    %409 = arith.truncf %375 : vector<8x128xf32> to vector<8x128xbf16>
    %cst_64 = arith.constant dense<0.000000e+00> : vector<8x384xf32>
    %410 = tpu.matmul %409, %7, %cst_64 {dimension_numbers = #tpu.dot_dimension_numbers<[1], [0], [0], [1], [0, 0, 1, 1], [], []>} : vector<8x128xbf16>, vector<128x384xbf16>, vector<8x384xf32> -> vector<8x384xf32>
    %411 = vector.extract_strided_slice %5 {offsets = [48, 0], sizes = [8, 128], strides = [1, 1]} : vector<64x768xf32> to vector<8x128xf32>
    %412 = vector.extract_strided_slice %410 {offsets = [0, 0], sizes = [8, 128], strides = [1, 1]} : vector<8x384xf32> to vector<8x128xf32>
    %413 = arith.addf %411, %412 : vector<8x128xf32>
    %414 = arith.negf %413 : vector<8x128xf32>
    %415 = math.exp %414 : vector<8x128xf32>
    %cst_65 = arith.constant 1.000000e+00 : f32
    %416 = vector.broadcast %cst_65 : f32 to vector<8x128xf32>
    %417 = arith.addf %416, %415 : vector<8x128xf32>
    %418 = arith.divf %416, %417 : vector<8x128xf32>
    %419 = vector.extract_strided_slice %5 {offsets = [48, 128], sizes = [8, 128], strides = [1, 1]} : vector<64x768xf32> to vector<8x128xf32>
    %420 = vector.extract_strided_slice %410 {offsets = [0, 128], sizes = [8, 128], strides = [1, 1]} : vector<8x384xf32> to vector<8x128xf32>
    %421 = arith.addf %419, %420 : vector<8x128xf32>
    %422 = arith.negf %421 : vector<8x128xf32>
    %423 = math.exp %422 : vector<8x128xf32>
    %cst_66 = arith.constant 1.000000e+00 : f32
    %424 = vector.broadcast %cst_66 : f32 to vector<8x128xf32>
    %425 = arith.addf %424, %423 : vector<8x128xf32>
    %426 = arith.divf %424, %425 : vector<8x128xf32>
    %427 = vector.extract_strided_slice %5 {offsets = [48, 256], sizes = [8, 128], strides = [1, 1]} : vector<64x768xf32> to vector<8x128xf32>
    %428 = vector.extract_strided_slice %410 {offsets = [0, 256], sizes = [8, 128], strides = [1, 1]} : vector<8x384xf32> to vector<8x128xf32>
    %429 = vector.broadcast %9 : vector<1x128xf32> to vector<8x128xf32>
    %430 = arith.addf %428, %429 : vector<8x128xf32>
    %431 = arith.mulf %418, %430 : vector<8x128xf32>
    %432 = arith.addf %427, %431 : vector<8x128xf32>
    %433 = math.tanh %432 : vector<8x128xf32>
    %cst_67 = arith.constant 1.000000e+00 : f32
    %434 = vector.broadcast %cst_67 : f32 to vector<8x128xf32>
    %435 = arith.subf %434, %426 : vector<8x128xf32>
    %436 = arith.mulf %435, %433 : vector<8x128xf32>
    %437 = arith.mulf %426, %375 : vector<8x128xf32>
    %438 = arith.addf %436, %437 : vector<8x128xf32>
    %439 = vector.extract_strided_slice %6 {offsets = [48, 0], sizes = [8, 1], strides = [1, 1]} : vector<64x1xf32> to vector<8x1xf32>
    %440 = vector.broadcast %439 : vector<8x1xf32> to vector<8x128xf32>
    %441 = arith.mulf %438, %440 : vector<8x128xf32>
    %442 = arith.truncf %408 : vector<8x128xf32> to vector<8x128xbf16>
    %cst_68 = arith.constant dense<0.000000e+00> : vector<8x384xf32>
    %443 = tpu.matmul %442, %8, %cst_68 {dimension_numbers = #tpu.dot_dimension_numbers<[1], [0], [0], [1], [0, 0, 1, 1], [], []>} : vector<8x128xbf16>, vector<128x384xbf16>, vector<8x384xf32> -> vector<8x384xf32>
    %444 = vector.extract_strided_slice %5 {offsets = [8, 384], sizes = [8, 128], strides = [1, 1]} : vector<64x768xf32> to vector<8x128xf32>
    %445 = vector.extract_strided_slice %443 {offsets = [0, 0], sizes = [8, 128], strides = [1, 1]} : vector<8x384xf32> to vector<8x128xf32>
    %446 = arith.addf %444, %445 : vector<8x128xf32>
    %447 = arith.negf %446 : vector<8x128xf32>
    %448 = math.exp %447 : vector<8x128xf32>
    %cst_69 = arith.constant 1.000000e+00 : f32
    %449 = vector.broadcast %cst_69 : f32 to vector<8x128xf32>
    %450 = arith.addf %449, %448 : vector<8x128xf32>
    %451 = arith.divf %449, %450 : vector<8x128xf32>
    %452 = vector.extract_strided_slice %5 {offsets = [8, 512], sizes = [8, 128], strides = [1, 1]} : vector<64x768xf32> to vector<8x128xf32>
    %453 = vector.extract_strided_slice %443 {offsets = [0, 128], sizes = [8, 128], strides = [1, 1]} : vector<8x384xf32> to vector<8x128xf32>
    %454 = arith.addf %452, %453 : vector<8x128xf32>
    %455 = arith.negf %454 : vector<8x128xf32>
    %456 = math.exp %455 : vector<8x128xf32>
    %cst_70 = arith.constant 1.000000e+00 : f32
    %457 = vector.broadcast %cst_70 : f32 to vector<8x128xf32>
    %458 = arith.addf %457, %456 : vector<8x128xf32>
    %459 = arith.divf %457, %458 : vector<8x128xf32>
    %460 = vector.extract_strided_slice %5 {offsets = [8, 640], sizes = [8, 128], strides = [1, 1]} : vector<64x768xf32> to vector<8x128xf32>
    %461 = vector.extract_strided_slice %443 {offsets = [0, 256], sizes = [8, 128], strides = [1, 1]} : vector<8x384xf32> to vector<8x128xf32>
    %462 = vector.broadcast %10 : vector<1x128xf32> to vector<8x128xf32>
    %463 = arith.addf %461, %462 : vector<8x128xf32>
    %464 = arith.mulf %451, %463 : vector<8x128xf32>
    %465 = arith.addf %460, %464 : vector<8x128xf32>
    %466 = math.tanh %465 : vector<8x128xf32>
    %cst_71 = arith.constant 1.000000e+00 : f32
    %467 = vector.broadcast %cst_71 : f32 to vector<8x128xf32>
    %468 = arith.subf %467, %459 : vector<8x128xf32>
    %469 = arith.mulf %468, %466 : vector<8x128xf32>
    %470 = arith.mulf %459, %408 : vector<8x128xf32>
    %471 = arith.addf %469, %470 : vector<8x128xf32>
    %472 = vector.extract_strided_slice %6 {offsets = [8, 0], sizes = [8, 1], strides = [1, 1]} : vector<64x1xf32> to vector<8x1xf32>
    %473 = vector.broadcast %472 : vector<8x1xf32> to vector<8x128xf32>
    %474 = arith.mulf %471, %473 : vector<8x128xf32>
    %475 = arith.truncf %441 : vector<8x128xf32> to vector<8x128xbf16>
    %cst_72 = arith.constant dense<0.000000e+00> : vector<8x384xf32>
    %476 = tpu.matmul %475, %7, %cst_72 {dimension_numbers = #tpu.dot_dimension_numbers<[1], [0], [0], [1], [0, 0, 1, 1], [], []>} : vector<8x128xbf16>, vector<128x384xbf16>, vector<8x384xf32> -> vector<8x384xf32>
    %477 = vector.extract_strided_slice %5 {offsets = [56, 0], sizes = [8, 128], strides = [1, 1]} : vector<64x768xf32> to vector<8x128xf32>
    %478 = vector.extract_strided_slice %476 {offsets = [0, 0], sizes = [8, 128], strides = [1, 1]} : vector<8x384xf32> to vector<8x128xf32>
    %479 = arith.addf %477, %478 : vector<8x128xf32>
    %480 = arith.negf %479 : vector<8x128xf32>
    %481 = math.exp %480 : vector<8x128xf32>
    %cst_73 = arith.constant 1.000000e+00 : f32
    %482 = vector.broadcast %cst_73 : f32 to vector<8x128xf32>
    %483 = arith.addf %482, %481 : vector<8x128xf32>
    %484 = arith.divf %482, %483 : vector<8x128xf32>
    %485 = vector.extract_strided_slice %5 {offsets = [56, 128], sizes = [8, 128], strides = [1, 1]} : vector<64x768xf32> to vector<8x128xf32>
    %486 = vector.extract_strided_slice %476 {offsets = [0, 128], sizes = [8, 128], strides = [1, 1]} : vector<8x384xf32> to vector<8x128xf32>
    %487 = arith.addf %485, %486 : vector<8x128xf32>
    %488 = arith.negf %487 : vector<8x128xf32>
    %489 = math.exp %488 : vector<8x128xf32>
    %cst_74 = arith.constant 1.000000e+00 : f32
    %490 = vector.broadcast %cst_74 : f32 to vector<8x128xf32>
    %491 = arith.addf %490, %489 : vector<8x128xf32>
    %492 = arith.divf %490, %491 : vector<8x128xf32>
    %493 = vector.extract_strided_slice %5 {offsets = [56, 256], sizes = [8, 128], strides = [1, 1]} : vector<64x768xf32> to vector<8x128xf32>
    %494 = vector.extract_strided_slice %476 {offsets = [0, 256], sizes = [8, 128], strides = [1, 1]} : vector<8x384xf32> to vector<8x128xf32>
    %495 = vector.broadcast %9 : vector<1x128xf32> to vector<8x128xf32>
    %496 = arith.addf %494, %495 : vector<8x128xf32>
    %497 = arith.mulf %484, %496 : vector<8x128xf32>
    %498 = arith.addf %493, %497 : vector<8x128xf32>
    %499 = math.tanh %498 : vector<8x128xf32>
    %cst_75 = arith.constant 1.000000e+00 : f32
    %500 = vector.broadcast %cst_75 : f32 to vector<8x128xf32>
    %501 = arith.subf %500, %492 : vector<8x128xf32>
    %502 = arith.mulf %501, %499 : vector<8x128xf32>
    %503 = arith.mulf %492, %441 : vector<8x128xf32>
    %504 = arith.addf %502, %503 : vector<8x128xf32>
    %505 = vector.extract_strided_slice %6 {offsets = [56, 0], sizes = [8, 1], strides = [1, 1]} : vector<64x1xf32> to vector<8x1xf32>
    %506 = vector.broadcast %505 : vector<8x1xf32> to vector<8x128xf32>
    %507 = arith.mulf %504, %506 : vector<8x128xf32>
    %508 = arith.truncf %474 : vector<8x128xf32> to vector<8x128xbf16>
    %cst_76 = arith.constant dense<0.000000e+00> : vector<8x384xf32>
    %509 = tpu.matmul %508, %8, %cst_76 {dimension_numbers = #tpu.dot_dimension_numbers<[1], [0], [0], [1], [0, 0, 1, 1], [], []>} : vector<8x128xbf16>, vector<128x384xbf16>, vector<8x384xf32> -> vector<8x384xf32>
    %510 = vector.extract_strided_slice %5 {offsets = [0, 384], sizes = [8, 128], strides = [1, 1]} : vector<64x768xf32> to vector<8x128xf32>
    %511 = vector.extract_strided_slice %509 {offsets = [0, 0], sizes = [8, 128], strides = [1, 1]} : vector<8x384xf32> to vector<8x128xf32>
    %512 = arith.addf %510, %511 : vector<8x128xf32>
    %513 = arith.negf %512 : vector<8x128xf32>
    %514 = math.exp %513 : vector<8x128xf32>
    %cst_77 = arith.constant 1.000000e+00 : f32
    %515 = vector.broadcast %cst_77 : f32 to vector<8x128xf32>
    %516 = arith.addf %515, %514 : vector<8x128xf32>
    %517 = arith.divf %515, %516 : vector<8x128xf32>
    %518 = vector.extract_strided_slice %5 {offsets = [0, 512], sizes = [8, 128], strides = [1, 1]} : vector<64x768xf32> to vector<8x128xf32>
    %519 = vector.extract_strided_slice %509 {offsets = [0, 128], sizes = [8, 128], strides = [1, 1]} : vector<8x384xf32> to vector<8x128xf32>
    %520 = arith.addf %518, %519 : vector<8x128xf32>
    %521 = arith.negf %520 : vector<8x128xf32>
    %522 = math.exp %521 : vector<8x128xf32>
    %cst_78 = arith.constant 1.000000e+00 : f32
    %523 = vector.broadcast %cst_78 : f32 to vector<8x128xf32>
    %524 = arith.addf %523, %522 : vector<8x128xf32>
    %525 = arith.divf %523, %524 : vector<8x128xf32>
    %526 = vector.extract_strided_slice %5 {offsets = [0, 640], sizes = [8, 128], strides = [1, 1]} : vector<64x768xf32> to vector<8x128xf32>
    %527 = vector.extract_strided_slice %509 {offsets = [0, 256], sizes = [8, 128], strides = [1, 1]} : vector<8x384xf32> to vector<8x128xf32>
    %528 = vector.broadcast %10 : vector<1x128xf32> to vector<8x128xf32>
    %529 = arith.addf %527, %528 : vector<8x128xf32>
    %530 = arith.mulf %517, %529 : vector<8x128xf32>
    %531 = arith.addf %526, %530 : vector<8x128xf32>
    %532 = math.tanh %531 : vector<8x128xf32>
    %cst_79 = arith.constant 1.000000e+00 : f32
    %533 = vector.broadcast %cst_79 : f32 to vector<8x128xf32>
    %534 = arith.subf %533, %525 : vector<8x128xf32>
    %535 = arith.mulf %534, %532 : vector<8x128xf32>
    %536 = arith.mulf %525, %474 : vector<8x128xf32>
    %537 = arith.addf %535, %536 : vector<8x128xf32>
    %538 = vector.extract_strided_slice %6 {offsets = [0, 0], sizes = [8, 1], strides = [1, 1]} : vector<64x1xf32> to vector<8x1xf32>
    %539 = vector.broadcast %538 : vector<8x1xf32> to vector<8x128xf32>
    %540 = arith.mulf %537, %539 : vector<8x128xf32>
    %541 = tpu.concatenate %45, %540 in 1 : vector<8x128xf32>, vector<8x128xf32> -> vector<8x256xf32>
    %542 = tpu.concatenate %111, %474 in 1 : vector<8x128xf32>, vector<8x128xf32> -> vector<8x256xf32>
    %543 = tpu.concatenate %177, %408 in 1 : vector<8x128xf32>, vector<8x128xf32> -> vector<8x256xf32>
    %544 = tpu.concatenate %243, %342 in 1 : vector<8x128xf32>, vector<8x128xf32> -> vector<8x256xf32>
    %545 = tpu.concatenate %309, %276 in 1 : vector<8x128xf32>, vector<8x128xf32> -> vector<8x256xf32>
    %546 = tpu.concatenate %375, %210 in 1 : vector<8x128xf32>, vector<8x128xf32> -> vector<8x256xf32>
    %547 = tpu.concatenate %441, %144 in 1 : vector<8x128xf32>, vector<8x128xf32> -> vector<8x256xf32>
    %548 = tpu.concatenate %507, %78 in 1 : vector<8x128xf32>, vector<8x128xf32> -> vector<8x256xf32>
    %549 = tpu.concatenate %541, %542, %543, %544, %545, %546, %547, %548 in 0 : vector<8x256xf32>, vector<8x256xf32>, vector<8x256xf32>, vector<8x256xf32>, vector<8x256xf32>, vector<8x256xf32>, vector<8x256xf32>, vector<8x256xf32> -> vector<64x256xf32>
    %550 = arith.truncf %549 : vector<64x256xf32> to vector<64x256xbf16>
    %c0_80 = arith.constant 0 : index
    %c0_81 = arith.constant 0 : index
    %551 = vector.load %arg7[%c0_80, %c0_81] : memref<256x128xbf16, #tpu.memory_space<vmem>>, vector<256x128xbf16>
    %cst_82 = arith.constant dense<0.000000e+00> : vector<64x128xf32>
    %552 = tpu.matmul %550, %551, %cst_82 {dimension_numbers = #tpu.dot_dimension_numbers<[1], [0], [0], [1], [0, 0, 1, 1], [], []>} : vector<64x256xbf16>, vector<256x128xbf16>, vector<64x128xf32> -> vector<64x128xf32>
    %c0_83 = arith.constant 0 : index
    %c0_84 = arith.constant 0 : index
    %553 = vector.load %arg8[%c0_83, %c0_84] : memref<1x128xf32, #tpu.memory_space<vmem>>, vector<1x128xf32>
    %554 = vector.broadcast %553 : vector<1x128xf32> to vector<64x128xf32>
    %555 = arith.addf %552, %554 : vector<64x128xf32>
    %556 = math.tanh %555 : vector<64x128xf32>
    %557 = arith.truncf %556 : vector<64x128xf32> to vector<64x128xbf16>
    %c0_85 = arith.constant 0 : index
    %c0_86 = arith.constant 0 : index
    %558 = vector.load %arg9[%c0_85, %c0_86] : memref<128x1xbf16, #tpu.memory_space<vmem>>, vector<128x1xbf16>
    %cst_87 = arith.constant dense<0.000000e+00> : vector<64x1xf32>
    %559 = tpu.matmul %557, %558, %cst_87 {dimension_numbers = #tpu.dot_dimension_numbers<[1], [0], [0], [1], [0, 0, 1, 1], [], []>} : vector<64x128xbf16>, vector<128x1xbf16>, vector<64x1xf32> -> vector<64x1xf32>
    %560 = vector.shape_cast %559 : vector<64x1xf32> to vector<8x8x1xf32>
    %cst_88 = arith.constant dense<0xFF800000> : vector<8x1xf32>
    %561 = vector.multi_reduction <maximumf>, %560, %cst_88 [0] : vector<8x8x1xf32> to vector<8x1xf32>
    %562 = vector.shape_cast %561 : vector<8x1xf32> to vector<1x8x1xf32>
    %563 = vector.broadcast %562 : vector<1x8x1xf32> to vector<8x8x1xf32>
    %564 = arith.subf %560, %563 : vector<8x8x1xf32>
    %565 = math.exp %564 : vector<8x8x1xf32>
    %cst_89 = arith.constant dense<0.000000e+00> : vector<8x1xf32>
    %566 = vector.multi_reduction <add>, %565, %cst_89 [0] : vector<8x8x1xf32> to vector<8x1xf32>
    %567 = vector.shape_cast %566 : vector<8x1xf32> to vector<1x8x1xf32>
    %568 = tpu.reciprocal %567 {approx = true} : vector<1x8x1xf32> -> vector<1x8x1xf32>
    %569 = arith.mulf %567, %568 : vector<1x8x1xf32>
    %cst_90 = arith.constant 2.000000e+00 : f32
    %570 = vector.broadcast %cst_90 : f32 to vector<1x8x1xf32>
    %571 = arith.subf %570, %569 : vector<1x8x1xf32>
    %572 = arith.mulf %568, %571 : vector<1x8x1xf32>
    %573 = vector.broadcast %572 : vector<1x8x1xf32> to vector<8x8x1xf32>
    %574 = arith.mulf %565, %573 : vector<8x8x1xf32>
    %575 = vector.shape_cast %556 : vector<64x128xf32> to vector<8x8x128xf32>
    %576 = vector.broadcast %574 : vector<8x8x1xf32> to vector<8x8x128xf32>
    %577 = arith.mulf %576, %575 : vector<8x8x128xf32>
    %cst_91 = arith.constant dense<0.000000e+00> : vector<8x128xf32>
    %578 = vector.multi_reduction <add>, %577, %cst_91 [0] : vector<8x8x128xf32> to vector<8x128xf32>
    %c0_92 = arith.constant 0 : index
    %c0_93 = arith.constant 0 : index
    %579 = vector.load %arg10[%c0_92, %c0_93] : memref<8x128xf32, #tpu.memory_space<vmem>>, vector<8x128xf32>
    tpu.vector_store %arg10[%c0_92, %c0_93], %578 {strides = array<i32>} : memref<8x128xf32, #tpu.memory_space<vmem>>, vector<8x128xf32>,
    %580 = vector.shape_cast %574 : vector<8x8x1xf32> to vector<64x1xf32>
    %c0_94 = arith.constant 0 : index
    %c0_95 = arith.constant 0 : index
    %581 = vector.load %arg11[%c0_94, %c0_95] : memref<64x1xf32, #tpu.memory_space<vmem>>, vector<64x1xf32>
    tpu.vector_store %arg11[%c0_94, %c0_95], %580 {strides = array<i32>} : memref<64x1xf32, #tpu.memory_space<vmem>>, vector<64x1xf32>,
    return
  }
}

</mosaic_0001>

<llo_original>
// kernel: sentence_forward.1
$region0: #{sentence_forward.1}
  #allocation0 [shape = 'u32[]', space=smem, size = 0x4, offset = 0x4, fixed_abs, tag = 'smem constant byte address 0x4 - core index']
  #allocation1 [shape = 'u32[72,128]{1,0:T(1,128)}', space=vmem, size = 0x9000, scoped, tag = 'internal scratch']
  %s0 = inlined_call_operand.vmem [shape: bf16[64,32], index: 0, kind: input, shape index: {}]
  %s1 = inlined_call_operand.vmem [shape: f32[64,1], index: 1, kind: input, shape index: {}]
  %s2 = inlined_call_operand.vmem [shape: bf16[32,768], index: 2, kind: input, shape index: {}]
  %s3 = inlined_call_operand.vmem [shape: f32[1,768], index: 3, kind: input, shape index: {}]
  %s4 = inlined_call_operand.vmem [shape: bf16[128,384], index: 4, kind: input, shape index: {}]
  %s5 = inlined_call_operand.vmem [shape: bf16[128,384], index: 5, kind: input, shape index: {}]
  %s6 = inlined_call_operand.vmem [shape: f32[1,256], index: 6, kind: input, shape index: {}]
  %s7 = inlined_call_operand.vmem [shape: bf16[256,128], index: 7, kind: input, shape index: {}]
  %s8 = inlined_call_operand.vmem [shape: f32[1,128], index: 8, kind: input, shape index: {}]
  %s9 = inlined_call_operand.vmem [shape: bf16[128,1], index: 9, kind: input, shape index: {}]
  %s10 = inlined_call_operand.vmem [shape: f32[8,128], index: 10, kind: output, shape index: {0}]
  %s11 = inlined_call_operand.vmem [shape: f32[64,1], index: 11, kind: output, shape index: {1}]
  %12 = xla_tuple %s10, %s11
  %s13 = sld [smem:[#allocation0]]
  $region58: #{sentence_forward.1} parent=0
    _
  %s15 = ssub.s32 1, %s13
  %s16 = scalar_select 0, %s15, %s13
  // Predicated region
  $region2: #{sentence_forward.1} parent=0 // pred_check
    _
  $region3: #{sentence_forward.1} parent=0 // pred_check_branch
    %18 = sbr.rel (0) target = $region5
  $region4: #{sentence_forward.1} parent=0 // pred_region
    _
  $region5: #{sentence_forward.1} parent=0 // pred_fallthru
    _
  // Predicated region
  $region6: #{sentence_forward.1} parent=0 // pred_check
    _
  $region7: #{sentence_forward.1} parent=0 // pred_check_branch
    %20 = sbr.rel (0) target = $region9
  $region8: #{sentence_forward.1} parent=0 // pred_region
    _
  $region9: #{sentence_forward.1} parent=0 // pred_fallthru
    _
  // Predicated region
  $region10: #{sentence_forward.1} parent=0 // pred_check
    _
  $region11: #{sentence_forward.1} parent=0 // pred_check_branch
    %22 = sbr.rel (0) target = $region13
  $region12: #{sentence_forward.1} parent=0 // pred_region
    _
  $region13: #{sentence_forward.1} parent=0 // pred_fallthru
    _
  // Predicated region
  $region14: #{sentence_forward.1} parent=0 // pred_check
    _
  $region15: #{sentence_forward.1} parent=0 // pred_check_branch
    %24 = sbr.rel (0) target = $region17
  $region16: #{sentence_forward.1} parent=0 // pred_region
    _
  $region17: #{sentence_forward.1} parent=0 // pred_fallthru
    _
  // Predicated region
  $region18: #{sentence_forward.1} parent=0 // pred_check
    _
  $region19: #{sentence_forward.1} parent=0 // pred_check_branch
    %26 = sbr.rel (0) target = $region21
  $region20: #{sentence_forward.1} parent=0 // pred_region
    _
  $region21: #{sentence_forward.1} parent=0 // pred_fallthru
    _
  // Predicated region
  $region22: #{sentence_forward.1} parent=0 // pred_check
    _
  $region23: #{sentence_forward.1} parent=0 // pred_check_branch
    %28 = sbr.rel (0) target = $region25
  $region24: #{sentence_forward.1} parent=0 // pred_region
    _
  $region25: #{sentence_forward.1} parent=0 // pred_fallthru
    _
  // Predicated region
  $region26: #{sentence_forward.1} parent=0 // pred_check
    _
  $region27: #{sentence_forward.1} parent=0 // pred_check_branch
    %30 = sbr.rel (0) target = $region29
  $region28: #{sentence_forward.1} parent=0 // pred_region
    _
  $region29: #{sentence_forward.1} parent=0 // pred_fallthru
    _
  // Predicated region
  $region30: #{sentence_forward.1} parent=0 // pred_check
    _
  $region31: #{sentence_forward.1} parent=0 // pred_check_branch
    %32 = sbr.rel (0) target = $region33
  $region32: #{sentence_forward.1} parent=0 // pred_region
    _
  $region33: #{sentence_forward.1} parent=0 // pred_fallthru
    _
  // Predicated region
  $region34: #{sentence_forward.1} parent=0 // pred_check
    _
  $region35: #{sentence_forward.1} parent=0 // pred_check_branch
    %34 = sbr.rel (0) target = $region37
  $region36: #{sentence_forward.1} parent=0 // pred_region
    _
  $region37: #{sentence_forward.1} parent=0 // pred_fallthru
    _
  // Predicated region
  $region38: #{sentence_forward.1} parent=0 // pred_check
    _
  $region39: #{sentence_forward.1} parent=0 // pred_check_branch
    %36 = sbr.rel (0) target = $region41
  $region40: #{sentence_forward.1} parent=0 // pred_region
    _
  $region41: #{sentence_forward.1} parent=0 // pred_fallthru
    _
  %v38 = vld [vmem:[%s0] sm:$0xf]
  %v39 = vld [vmem:[%s0 + $0x4] sm:$0xf]
  %v40 = vld [vmem:[%s0 + $0x8] sm:$0xf]
  %v41 = vld [vmem:[%s0 + $0xc] sm:$0xf]
  %v42 = vld [vmem:[%s0 + $0x10] sm:$0xf]
  %v43 = vld [vmem:[%s0 + $0x14] sm:$0xf]
  %v44 = vld [vmem:[%s0 + $0x18] sm:$0xf]
  %v45 = vld [vmem:[%s0 + $0x1c] sm:$0xf]
  %v46 = vld [vmem:[%s2] sm:$0xff]
  %v47 = vld [vmem:[%s2 + $0x8] sm:$0xff]
  %v48 = vld [vmem:[%s2 + $0x10] sm:$0xff]
  %v49 = vld [vmem:[%s2 + $0x18] sm:$0xff]
  %v50 = vld [vmem:[%s2 + $0x20] sm:$0xff]
  %v51 = vld [vmem:[%s2 + $0x28] sm:$0xff]
  %v52 = vld [vmem:[%s2 + $0x30] sm:$0xff]
  %v53 = vld [vmem:[%s2 + $0x38] sm:$0xff]
  %v54 = vld [vmem:[%s2 + $0x40] sm:$0xff]
  %v55 = vld [vmem:[%s2 + $0x48] sm:$0xff]
  %v56 = vld [vmem:[%s2 + $0x50] sm:$0xff]
  %v57 = vld [vmem:[%s2 + $0x58] sm:$0xff]
  %v58 = vld [vmem:[%s3] sm:$0x3f]
  %v60 = vperm.slane %v58, 0
  %v61 = vperm.slane %v58, 1
  %v62 = vperm.slane %v58, 2
  %v63 = vperm.slane %v58, 3
  %v64 = vperm.slane %v58, 4
  %v65 = vperm.slane %v58, 5
  %v80 = vunpack.c.l.b16 %v38
  %v81 = vunpack.c.l.b16 %v39
  %v82 = vunpack.c.l.b16 %v40
  %v83 = vunpack.c.l.b16 %v41
  %v84 = vunpack.c.l.b16 %v42
  %v85 = vunpack.c.l.b16 %v43
  %v86 = vunpack.c.l.b16 %v44
  %v87 = vunpack.c.l.b16 %v45
  %v88 = vpack.c.b16 %v81, %v80
  %v89 = vpack.c.b16 %v83, %v82
  %v90 = vpack.c.b16 %v85, %v84
  %v91 = vpack.c.b16 %v87, %v86
  %v104 = vunpack.c.l.b16 %v46
  %v105 = vunpack.c.h.b16 %v46
  %v106 = vunpack.c.l.b16 %v47
  %v107 = vunpack.c.h.b16 %v47
  %v108 = vunpack.c.l.b16 %v48
  %v109 = vunpack.c.h.b16 %v48
  %v110 = vunpack.c.l.b16 %v49
  %v111 = vunpack.c.h.b16 %v49
  %v112 = vunpack.c.l.b16 %v50
  %v113 = vunpack.c.h.b16 %v50
  %v114 = vunpack.c.l.b16 %v51
  %v115 = vunpack.c.h.b16 %v51
  %v116 = vunpack.c.l.b16 %v52
  %v117 = vunpack.c.h.b16 %v52
  %v118 = vunpack.c.l.b16 %v53
  %v119 = vunpack.c.h.b16 %v53
  %v120 = vunpack.c.l.b16 %v54
  %v121 = vunpack.c.h.b16 %v54
  %v122 = vunpack.c.l.b16 %v55
  %v123 = vunpack.c.h.b16 %v55
  %v124 = vunpack.c.l.b16 %v56
  %v125 = vunpack.c.h.b16 %v56
  %v126 = vunpack.c.l.b16 %v57
  %v127 = vunpack.c.h.b16 %v57
  %v128 = vpack.c.b16 %v110, %v104
  %v129 = vpack.c.b16 %v111, %v105
  %v130 = vpack.c.b16 %v112, %v106
  %v131 = vpack.c.b16 %v113, %v107
  %v132 = vpack.c.b16 %v114, %v108
  %v133 = vpack.c.b16 %v115, %v109
  %v134 = vpack.c.b16 %v122, %v116
  %v135 = vpack.c.b16 %v123, %v117
  %v136 = vpack.c.b16 %v124, %v118
  %v137 = vpack.c.b16 %v125, %v119
  %v138 = vpack.c.b16 %v126, %v120
  %v139 = vpack.c.b16 %v127, %v121
  %vm152 = vcmask 261120
  %v154 = vsel %vm152, %v88, 0
  %v157 = vsel %vm152, %v89, 0
  %v160 = vsel %vm152, %v90, 0
  %v163 = vsel %vm152, %v91, 0
  %165 = vmatpush.bf16.msra.mxu0 0
  %166 = vmatpush.bf16.msra.mxu0 0
  %167 = vmatpush.bf16.msra.mxu0 0
  %168 = vmatpush.bf16.msra.mxu0 0
  %169 = vmatpush.bf16.msra.mxu0 0
  %170 = vmatpush.bf16.msra.mxu0 0
  %171 = vmatpush.bf16.msra.mxu0 %v134
  %172 = vmatpush.bf16.msra.mxu0 %v128
  %173 = vmatmul.bf16.gmra.mxu0 %v154
  %v174 = vpop.f32.mrf.mxu0
  %v175 = vadd.f32 %v60, %v174
  %v176 = vpop.f32.mrf.mxu0
  %v177 = vadd.f32 %v60, %v176
  %178 = vmatmul.bf16.gmra.mxu0 %v157
  %v179 = vpop.f32.mrf.mxu0
  %v180 = vadd.f32 %v60, %v179
  %v181 = vpop.f32.mrf.mxu0
  %v182 = vadd.f32 %v60, %v181
  %183 = vmatmul.bf16.gmra.mxu0 %v160
  %v184 = vpop.f32.mrf.mxu0
  %v185 = vadd.f32 %v60, %v184
  %v186 = vpop.f32.mrf.mxu0
  %v187 = vadd.f32 %v60, %v186
  %188 = vmatmul.bf16.gmra.mxu0 %v163
  %v189 = vpop.f32.mrf.mxu0
  %v190 = vadd.f32 %v60, %v189
  %v191 = vpop.f32.mrf.mxu0
  %v192 = vadd.f32 %v60, %v191
  %193 = vdwg.mxu0
  %194 = vmatpush.bf16.msra.mxu0 0
  %195 = vmatpush.bf16.msra.mxu0 0
  %196 = vmatpush.bf16.msra.mxu0 0
  %197 = vmatpush.bf16.msra.mxu0 0
  %198 = vmatpush.bf16.msra.mxu0 0
  %199 = vmatpush.bf16.msra.mxu0 0
  %200 = vmatpush.bf16.msra.mxu0 %v135
  %201 = vmatpush.bf16.msra.mxu0 %v129
  %202 = vmatmul.bf16.gmra.mxu0 %v154
  %v203 = vpop.f32.mrf.mxu0
  %v204 = vadd.f32 %v61, %v203
  %v205 = vpop.f32.mrf.mxu0
  %v206 = vadd.f32 %v61, %v205
  %207 = vmatmul.bf16.gmra.mxu0 %v157
  %v208 = vpop.f32.mrf.mxu0
  %v209 = vadd.f32 %v61, %v208
  %v210 = vpop.f32.mrf.mxu0
  %v211 = vadd.f32 %v61, %v210
  %212 = vmatmul.bf16.gmra.mxu0 %v160
  %v213 = vpop.f32.mrf.mxu0
  %v214 = vadd.f32 %v61, %v213
  %v215 = vpop.f32.mrf.mxu0
  %v216 = vadd.f32 %v61, %v215
  %217 = vmatmul.bf16.gmra.mxu0 %v163
  %v218 = vpop.f32.mrf.mxu0
  %v219 = vadd.f32 %v61, %v218
  %v220 = vpop.f32.mrf.mxu0
  %v221 = vadd.f32 %v61, %v220
  %222 = vdwg.mxu0
  %223 = vmatpush.bf16.msra.mxu0 0
  %224 = vmatpush.bf16.msra.mxu0 0
  %225 = vmatpush.bf16.msra.mxu0 0
  %226 = vmatpush.bf16.msra.mxu0 0
  %227 = vmatpush.bf16.msra.mxu0 0
  %228 = vmatpush.bf16.msra.mxu0 0
  %229 = vmatpush.bf16.msra.mxu0 %v136
  %230 = vmatpush.bf16.msra.mxu0 %v130
  %231 = vmatmul.bf16.gmra.mxu0 %v154
  %v232 = vpop.f32.mrf.mxu0
  %v233 = vadd.f32 %v62, %v232
  %v234 = vpop.f32.mrf.mxu0
  %v235 = vadd.f32 %v62, %v234
  %236 = vmatmul.bf16.gmra.mxu0 %v157
  %v237 = vpop.f32.mrf.mxu0
  %v238 = vadd.f32 %v62, %v237
  %v239 = vpop.f32.mrf.mxu0
  %v240 = vadd.f32 %v62, %v239
  %241 = vmatmul.bf16.gmra.mxu0 %v160
  %v242 = vpop.f32.mrf.mxu0
  %v243 = vadd.f32 %v62, %v242
  %v244 = vpop.f32.mrf.mxu0
  %v245 = vadd.f32 %v62, %v244
  %246 = vmatmul.bf16.gmra.mxu0 %v163
  %v247 = vpop.f32.mrf.mxu0
  %v248 = vadd.f32 %v62, %v247
  %v249 = vpop.f32.mrf.mxu0
  %v250 = vadd.f32 %v62, %v249
  %251 = vdwg.mxu0
  %252 = vmatpush.bf16.msra.mxu0 0
  %253 = vmatpush.bf16.msra.mxu0 0
  %254 = vmatpush.bf16.msra.mxu0 0
  %255 = vmatpush.bf16.msra.mxu0 0
  %256 = vmatpush.bf16.msra.mxu0 0
  %257 = vmatpush.bf16.msra.mxu0 0
  %258 = vmatpush.bf16.msra.mxu0 %v137
  %259 = vmatpush.bf16.msra.mxu0 %v131
  %260 = vmatmul.bf16.gmra.mxu0 %v154
  %v261 = vpop.f32.mrf.mxu0
  %v262 = vadd.f32 %v63, %v261
  %v263 = vpop.f32.mrf.mxu0
  %v264 = vadd.f32 %v63, %v263
  %265 = vmatmul.bf16.gmra.mxu0 %v157
  %v266 = vpop.f32.mrf.mxu0
  %v267 = vadd.f32 %v63, %v266
  %v268 = vpop.f32.mrf.mxu0
  %v269 = vadd.f32 %v63, %v268
  %270 = vmatmul.bf16.gmra.mxu0 %v160
  %v271 = vpop.f32.mrf.mxu0
  %v272 = vadd.f32 %v63, %v271
  %v273 = vpop.f32.mrf.mxu0
  %v274 = vadd.f32 %v63, %v273
  %275 = vmatmul.bf16.gmra.mxu0 %v163
  %v276 = vpop.f32.mrf.mxu0
  %v277 = vadd.f32 %v63, %v276
  %v278 = vpop.f32.mrf.mxu0
  %v279 = vadd.f32 %v63, %v278
  %280 = vdwg.mxu0
  %281 = vmatpush.bf16.msra.mxu0 0
  %282 = vmatpush.bf16.msra.mxu0 0
  %283 = vmatpush.bf16.msra.mxu0 0
  %284 = vmatpush.bf16.msra.mxu0 0
  %285 = vmatpush.bf16.msra.mxu0 0
  %286 = vmatpush.bf16.msra.mxu0 0
  %287 = vmatpush.bf16.msra.mxu0 %v138
  %288 = vmatpush.bf16.msra.mxu0 %v132
  %289 = vmatmul.bf16.gmra.mxu0 %v154
  %v290 = vpop.f32.mrf.mxu0
  %v291 = vadd.f32 %v64, %v290
  %v292 = vpop.f32.mrf.mxu0
  %v293 = vadd.f32 %v64, %v292
  %294 = vmatmul.bf16.gmra.mxu0 %v157
  %v295 = vpop.f32.mrf.mxu0
  %v296 = vadd.f32 %v64, %v295
  %v297 = vpop.f32.mrf.mxu0
  %v298 = vadd.f32 %v64, %v297
  %299 = vmatmul.bf16.gmra.mxu0 %v160
  %v300 = vpop.f32.mrf.mxu0
  %v301 = vadd.f32 %v64, %v300
  %v302 = vpop.f32.mrf.mxu0
  %v303 = vadd.f32 %v64, %v302
  %304 = vmatmul.bf16.gmra.mxu0 %v163
  %v305 = vpop.f32.mrf.mxu0
  %v306 = vadd.f32 %v64, %v305
  %v307 = vpop.f32.mrf.mxu0
  %v308 = vadd.f32 %v64, %v307
  %309 = vdwg.mxu0
  %310 = vmatpush.bf16.msra.mxu0 0
  %311 = vmatpush.bf16.msra.mxu0 0
  %312 = vmatpush.bf16.msra.mxu0 0
  %313 = vmatpush.bf16.msra.mxu0 0
  %314 = vmatpush.bf16.msra.mxu0 0
  %315 = vmatpush.bf16.msra.mxu0 0
  %316 = vmatpush.bf16.msra.mxu0 %v139
  %317 = vmatpush.bf16.msra.mxu0 %v133
  %318 = vmatmul.bf16.gmra.mxu0 %v154
  %v319 = vpop.f32.mrf.mxu0
  %v320 = vadd.f32 %v65, %v319
  %v321 = vpop.f32.mrf.mxu0
  %v322 = vadd.f32 %v65, %v321
  %323 = vmatmul.bf16.gmra.mxu0 %v157
  %v324 = vpop.f32.mrf.mxu0
  %v325 = vadd.f32 %v65, %v324
  %v326 = vpop.f32.mrf.mxu0
  %v327 = vadd.f32 %v65, %v326
  %328 = vmatmul.bf16.gmra.mxu0 %v160
  %v329 = vpop.f32.mrf.mxu0
  %v330 = vadd.f32 %v65, %v329
  %v331 = vpop.f32.mrf.mxu0
  %v332 = vadd.f32 %v65, %v331
  %333 = vmatmul.bf16.gmra.mxu0 %v163
  %v334 = vpop.f32.mrf.mxu0
  %v335 = vadd.f32 %v65, %v334
  %v336 = vpop.f32.mrf.mxu0
  %v337 = vadd.f32 %v65, %v336
  %338 = vdwg.mxu0
  %v339 = vld [vmem:[%s1] sm:$0xff]
  %v340 = vld [vmem:[%s1 + $0x8] sm:$0xff]
  %v341 = vld [vmem:[%s1 + $0x10] sm:$0xff]
  %v342 = vld [vmem:[%s1 + $0x18] sm:$0xff]
  %v343 = vld [vmem:[%s1 + $0x20] sm:$0xff]
  %v344 = vld [vmem:[%s1 + $0x28] sm:$0xff]
  %v345 = vld [vmem:[%s1 + $0x30] sm:$0xff]
  %v346 = vld [vmem:[%s1 + $0x38] sm:$0xff]
  %v347 = vld [vmem:[%s4] sm:$0xff]
  %v348 = vld [vmem:[%s4 + $0x8] sm:$0xf]
  %v349 = vld [vmem:[%s4 + $0xc] sm:$0xff]
  %v350 = vld [vmem:[%s4 + $0x14] sm:$0xf]
  %v351 = vld [vmem:[%s4 + $0x18] sm:$0xff]
  %v352 = vld [vmem:[%s4 + $0x20] sm:$0xf]
  %v353 = vld [vmem:[%s4 + $0x24] sm:$0xff]
  %v354 = vld [vmem:[%s4 + $0x2c] sm:$0xf]
  %v355 = vld [vmem:[%s4 + $0x30] sm:$0xff]
  %v356 = vld [vmem:[%s4 + $0x38] sm:$0xf]
  %v357 = vld [vmem:[%s4 + $0x3c] sm:$0xff]
  %v358 = vld [vmem:[%s4 + $0x44] sm:$0xf]
  %v359 = vld [vmem:[%s4 + $0x48] sm:$0xff]
  %v360 = vld [vmem:[%s4 + $0x50] sm:$0xf]
  %v361 = vld [vmem:[%s4 + $0x54] sm:$0xff]
  %v362 = vld [vmem:[%s4 + $0x5c] sm:$0xf]
  %v363 = vld [vmem:[%s4 + $0x60] sm:$0xff]
  %v364 = vld [vmem:[%s4 + $0x68] sm:$0xf]
  %v365 = vld [vmem:[%s4 + $0x6c] sm:$0xff]
  %v366 = vld [vmem:[%s4 + $0x74] sm:$0xf]
  %v367 = vld [vmem:[%s4 + $0x78] sm:$0xff]
  %v368 = vld [vmem:[%s4 + $0x80] sm:$0xf]
  %v369 = vld [vmem:[%s4 + $0x84] sm:$0xff]
  %v370 = vld [vmem:[%s4 + $0x8c] sm:$0xf]
  %v371 = vld [vmem:[%s4 + $0x90] sm:$0xff]
  %v372 = vld [vmem:[%s4 + $0x98] sm:$0xf]
  %v373 = vld [vmem:[%s4 + $0x9c] sm:$0xff]
  %v374 = vld [vmem:[%s4 + $0xa4] sm:$0xf]
  %v375 = vld [vmem:[%s4 + $0xa8] sm:$0xff]
  %v376 = vld [vmem:[%s4 + $0xb0] sm:$0xf]
  %v377 = vld [vmem:[%s4 + $0xb4] sm:$0xff]
  %v378 = vld [vmem:[%s4 + $0xbc] sm:$0xf]
  %v379 = vld [vmem:[%s5] sm:$0xff]
  %v380 = vld [vmem:[%s5 + $0x8] sm:$0xf]
  %v381 = vld [vmem:[%s5 + $0xc] sm:$0xff]
  %v382 = vld [vmem:[%s5 + $0x14] sm:$0xf]
  %v383 = vld [vmem:[%s5 + $0x18] sm:$0xff]
  %v384 = vld [vmem:[%s5 + $0x20] sm:$0xf]
  %v385 = vld [vmem:[%s5 + $0x24] sm:$0xff]
  %v386 = vld [vmem:[%s5 + $0x2c] sm:$0xf]
  %v387 = vld [vmem:[%s5 + $0x30] sm:$0xff]
  %v388 = vld [vmem:[%s5 + $0x38] sm:$0xf]
  %v389 = vld [vmem:[%s5 + $0x3c] sm:$0xff]
  %v390 = vld [vmem:[%s5 + $0x44] sm:$0xf]
  %v391 = vld [vmem:[%s5 + $0x48] sm:$0xff]
  %v392 = vld [vmem:[%s5 + $0x50] sm:$0xf]
  %v393 = vld [vmem:[%s5 + $0x54] sm:$0xff]
  %v394 = vld [vmem:[%s5 + $0x5c] sm:$0xf]
  %v395 = vld [vmem:[%s5 + $0x60] sm:$0xff]
  %v396 = vld [vmem:[%s5 + $0x68] sm:$0xf]
  %v397 = vld [vmem:[%s5 + $0x6c] sm:$0xff]
  %v398 = vld [vmem:[%s5 + $0x74] sm:$0xf]
  %v399 = vld [vmem:[%s5 + $0x78] sm:$0xff]
  %v400 = vld [vmem:[%s5 + $0x80] sm:$0xf]
  %v401 = vld [vmem:[%s5 + $0x84] sm:$0xff]
  %v402 = vld [vmem:[%s5 + $0x8c] sm:$0xf]
  %v403 = vld [vmem:[%s5 + $0x90] sm:$0xff]
  %v404 = vld [vmem:[%s5 + $0x98] sm:$0xf]
  %v405 = vld [vmem:[%s5 + $0x9c] sm:$0xff]
  %v406 = vld [vmem:[%s5 + $0xa4] sm:$0xf]
  %v407 = vld [vmem:[%s5 + $0xa8] sm:$0xff]
  %v408 = vld [vmem:[%s5 + $0xb0] sm:$0xf]
  %v409 = vld [vmem:[%s5 + $0xb4] sm:$0xff]
  %v410 = vld [vmem:[%s5 + $0xbc] sm:$0xf]
  %v411 = vld [vmem:[%s6] sm:$0x1]
  %v412 = vld [vmem:[%s6 + $0x1] sm:$0x1]
  %v445 = vunpack.c.l.b16 %v347
  %v446 = vunpack.c.h.b16 %v347
  %v447 = vunpack.c.l.b16 %v348
  %v448 = vunpack.c.l.b16 %v349
  %v449 = vunpack.c.h.b16 %v349
  %v450 = vunpack.c.l.b16 %v350
  %v451 = vunpack.c.l.b16 %v351
  %v452 = vunpack.c.h.b16 %v351
  %v453 = vunpack.c.l.b16 %v352
  %v454 = vunpack.c.l.b16 %v353
  %v455 = vunpack.c.h.b16 %v353
  %v456 = vunpack.c.l.b16 %v354
  %v457 = vunpack.c.l.b16 %v355
  %v458 = vunpack.c.h.b16 %v355
  %v459 = vunpack.c.l.b16 %v356
  %v460 = vunpack.c.l.b16 %v357
  %v461 = vunpack.c.h.b16 %v357
  %v462 = vunpack.c.l.b16 %v358
  %v463 = vunpack.c.l.b16 %v359
  %v464 = vunpack.c.h.b16 %v359
  %v465 = vunpack.c.l.b16 %v360
  %v466 = vunpack.c.l.b16 %v361
  %v467 = vunpack.c.h.b16 %v361
  %v468 = vunpack.c.l.b16 %v362
  %v469 = vunpack.c.l.b16 %v363
  %v470 = vunpack.c.h.b16 %v363
  %v471 = vunpack.c.l.b16 %v364
  %v472 = vunpack.c.l.b16 %v365
  %v473 = vunpack.c.h.b16 %v365
  %v474 = vunpack.c.l.b16 %v366
  %v475 = vunpack.c.l.b16 %v367
  %v476 = vunpack.c.h.b16 %v367
  %v477 = vunpack.c.l.b16 %v368
  %v478 = vunpack.c.l.b16 %v369
  %v479 = vunpack.c.h.b16 %v369
  %v480 = vunpack.c.l.b16 %v370
  %v481 = vunpack.c.l.b16 %v371
  %v482 = vunpack.c.h.b16 %v371
  %v483 = vunpack.c.l.b16 %v372
  %v484 = vunpack.c.l.b16 %v373
  %v485 = vunpack.c.h.b16 %v373
  %v486 = vunpack.c.l.b16 %v374
  %v487 = vunpack.c.l.b16 %v375
  %v488 = vunpack.c.h.b16 %v375
  %v489 = vunpack.c.l.b16 %v376
  %v490 = vunpack.c.l.b16 %v377
  %v491 = vunpack.c.h.b16 %v377
  %v492 = vunpack.c.l.b16 %v378
  %v493 = vpack.c.b16 %v448, %v445
  %v494 = vpack.c.b16 %v449, %v446
  %v495 = vpack.c.b16 %v450, %v447
  %v496 = vpack.c.b16 %v454, %v451
  %v497 = vpack.c.b16 %v455, %v452
  %v498 = vpack.c.b16 %v456, %v453
  %v499 = vpack.c.b16 %v460, %v457
  %v500 = vpack.c.b16 %v461, %v458
  %v501 = vpack.c.b16 %v462, %v459
  %v502 = vpack.c.b16 %v466, %v463
  %v503 = vpack.c.b16 %v467, %v464
  %v504 = vpack.c.b16 %v468, %v465
  %v505 = vpack.c.b16 %v472, %v469
  %v506 = vpack.c.b16 %v473, %v470
  %v507 = vpack.c.b16 %v474, %v471
  %v508 = vpack.c.b16 %v478, %v475
  %v509 = vpack.c.b16 %v479, %v476
  %v510 = vpack.c.b16 %v480, %v477
  %v511 = vpack.c.b16 %v484, %v481
  %v512 = vpack.c.b16 %v485, %v482
  %v513 = vpack.c.b16 %v486, %v483
  %v514 = vpack.c.b16 %v490, %v487
  %v515 = vpack.c.b16 %v491, %v488
  %v516 = vpack.c.b16 %v492, %v489
  %541 = vmatpush.bf16.msra.mxu0 %v514
  %542 = vmatpush.bf16.msra.mxu0 %v511
  %543 = vmatpush.bf16.msra.mxu0 %v508
  %544 = vmatpush.bf16.msra.mxu0 %v505
  %545 = vmatpush.bf16.msra.mxu0 %v502
  %546 = vmatpush.bf16.msra.mxu0 %v499
  %547 = vmatpush.bf16.msra.mxu0 %v496
  %548 = vmatpush.bf16.msra.mxu0 %v493
  %549 = vmatmul.bf16.gmra.mxu0 0
  %v550 = vpop.f32.mrf.mxu0
  %v551 = vadd.f32 0.0, %v550
  %v552 = vpop.f32.mrf.mxu0
  %553 = vdwg.mxu0
  %554 = vmatpush.bf16.msra.mxu0 %v515
  %555 = vmatpush.bf16.msra.mxu0 %v512
  %556 = vmatpush.bf16.msra.mxu0 %v509
  %557 = vmatpush.bf16.msra.mxu0 %v506
  %558 = vmatpush.bf16.msra.mxu0 %v503
  %559 = vmatpush.bf16.msra.mxu0 %v500
  %560 = vmatpush.bf16.msra.mxu0 %v497
  %561 = vmatpush.bf16.msra.mxu0 %v494
  %562 = vmatmul.bf16.gmra.mxu0 0
  %v563 = vpop.f32.mrf.mxu0
  %v564 = vadd.f32 0.0, %v563
  %v565 = vpop.f32.mrf.mxu0
  %566 = vdwg.mxu0
  %567 = vmatpush.bf16.msra.mxu0 %v516
  %568 = vmatpush.bf16.msra.mxu0 %v513
  %569 = vmatpush.bf16.msra.mxu0 %v510
  %570 = vmatpush.bf16.msra.mxu0 %v507
  %571 = vmatpush.bf16.msra.mxu0 %v504
  %572 = vmatpush.bf16.msra.mxu0 %v501
  %573 = vmatpush.bf16.msra.mxu0 %v498
  %574 = vmatpush.bf16.msra.mxu0 %v495
  %575 = vmatmul.bf16.gmra.mxu0 0
  %v576 = vpop.f32.mrf.mxu0
  %v577 = vadd.f32 0.0, %v576
  %v578 = vpop.f32.mrf.mxu0
  %579 = vdwg.mxu0
  %v580 = vadd.f32 %v175, %v551
  %v581 = vxor.u32 %v580, 2147483648
  %v582 = vmul.f32 %v581, 1.442695
  %v583 = vpow.pop %v582
  %v584 = vadd.f32 %v583, 1.0
  %v585 = vrcp.pop %v584
  %v586 = vmul.f32 %v584, %v585
  %v587 = vsub.f32 1.0, %v586
  %v588 = vmul.f32 %v585, %v587
  %v589 = vadd.f32 %v585, %v588
  %vm590 = vweird.f32 %v584
  %vm591 = vweird.f32 %v585
  %vm592 = vmor %vm590, %vm591
  %v593 = vsel %vm592, %v585, %v589
  %v594 = vand.u32 2147483647, %v584
  %vm595 = vcmp.eq.f32.partialorder %v594, 8.507059e+37
  %v596 = vand.u32 %v584, 2147483648
  %v597 = vor.u32 1.1754944e-38, %v596
  %v598 = vsel %vm595, %v597, %v593
  %v599 = vmul.f32 1.0, %v598
  %v600 = vadd.f32 %v204, %v564
  %v601 = vxor.u32 %v600, 2147483648
  %v602 = vmul.f32 %v601, 1.442695
  %v603 = vpow.pop %v602
  %v604 = vadd.f32 %v603, 1.0
  %v605 = vrcp.pop %v604
  %v606 = vmul.f32 %v604, %v605
  %v607 = vsub.f32 1.0, %v606
  %v608 = vmul.f32 %v605, %v607
  %v609 = vadd.f32 %v605, %v608
  %vm610 = vweird.f32 %v604
  %vm611 = vweird.f32 %v605
  %vm612 = vmor %vm610, %vm611
  %v613 = vsel %vm612, %v605, %v609
  %v614 = vand.u32 2147483647, %v604
  %vm615 = vcmp.eq.f32.partialorder %v614, 8.507059e+37
  %v616 = vand.u32 %v604, 2147483648
  %v617 = vor.u32 1.1754944e-38, %v616
  %v618 = vsel %vm615, %v617, %v613
  %v619 = vmul.f32 1.0, %v618
  %v621 = vperm.slane %v411, 0
  %v623 = vadd.f32 %v577, %v621
  %v624 = vmul.f32 %v599, %v623
  %v625 = vadd.f32 %v233, %v624
  %v626 = vtanh.pop %v625
  %v627 = vsub.f32 1.0, %v619
  %v628 = vmul.f32 %v627, %v626
  %v629 = vmul.f32 %v619, 0.0
  %v630 = vadd.f32 %v628, %v629
  %632 = vset.pattern.permute.xlu0 0
  %633 = vperm.xlu0 %632, %v339
  %v634 = vpop.permute.xlu0 %633
  %v636 = vmul.f32 %v630, %v634
  %v669 = vunpack.c.l.b16 %v379
  %v670 = vunpack.c.h.b16 %v379
  %v671 = vunpack.c.l.b16 %v380
  %v672 = vunpack.c.l.b16 %v381
  %v673 = vunpack.c.h.b16 %v381
  %v674 = vunpack.c.l.b16 %v382
  %v675 = vunpack.c.l.b16 %v383
  %v676 = vunpack.c.h.b16 %v383
  %v677 = vunpack.c.l.b16 %v384
  %v678 = vunpack.c.l.b16 %v385
  %v679 = vunpack.c.h.b16 %v385
  %v680 = vunpack.c.l.b16 %v386
  %v681 = vunpack.c.l.b16 %v387
  %v682 = vunpack.c.h.b16 %v387
  %v683 = vunpack.c.l.b16 %v388
  %v684 = vunpack.c.l.b16 %v389
  %v685 = vunpack.c.h.b16 %v389
  %v686 = vunpack.c.l.b16 %v390
  %v687 = vunpack.c.l.b16 %v391
  %v688 = vunpack.c.h.b16 %v391
  %v689 = vunpack.c.l.b16 %v392
  %v690 = vunpack.c.l.b16 %v393
  %v691 = vunpack.c.h.b16 %v393
  %v692 = vunpack.c.l.b16 %v394
  %v693 = vunpack.c.l.b16 %v395
  %v694 = vunpack.c.h.b16 %v395
  %v695 = vunpack.c.l.b16 %v396
  %v696 = vunpack.c.l.b16 %v397
  %v697 = vunpack.c.h.b16 %v397
  %v698 = vunpack.c.l.b16 %v398
  %v699 = vunpack.c.l.b16 %v399
  %v700 = vunpack.c.h.b16 %v399
  %v701 = vunpack.c.l.b16 %v400
  %v702 = vunpack.c.l.b16 %v401
  %v703 = vunpack.c.h.b16 %v401
  %v704 = vunpack.c.l.b16 %v402
  %v705 = vunpack.c.l.b16 %v403
  %v706 = vunpack.c.h.b16 %v403
  %v707 = vunpack.c.l.b16 %v404
  %v708 = vunpack.c.l.b16 %v405
  %v709 = vunpack.c.h.b16 %v405
  %v710 = vunpack.c.l.b16 %v406
  %v711 = vunpack.c.l.b16 %v407
  %v712 = vunpack.c.h.b16 %v407
  %v713 = vunpack.c.l.b16 %v408
  %v714 = vunpack.c.l.b16 %v409
  %v715 = vunpack.c.h.b16 %v409
  %v716 = vunpack.c.l.b16 %v410
  %v717 = vpack.c.b16 %v672, %v669
  %v718 = vpack.c.b16 %v673, %v670
  %v719 = vpack.c.b16 %v674, %v671
  %v720 = vpack.c.b16 %v678, %v675
  %v721 = vpack.c.b16 %v679, %v676
  %v722 = vpack.c.b16 %v680, %v677
  %v723 = vpack.c.b16 %v684, %v681
  %v724 = vpack.c.b16 %v685, %v682
  %v725 = vpack.c.b16 %v686, %v683
  %v726 = vpack.c.b16 %v690, %v687
  %v727 = vpack.c.b16 %v691, %v688
  %v728 = vpack.c.b16 %v692, %v689
  %v729 = vpack.c.b16 %v696, %v693
  %v730 = vpack.c.b16 %v697, %v694
  %v731 = vpack.c.b16 %v698, %v695
  %v732 = vpack.c.b16 %v702, %v699
  %v733 = vpack.c.b16 %v703, %v700
  %v734 = vpack.c.b16 %v704, %v701
  %v735 = vpack.c.b16 %v708, %v705
  %v736 = vpack.c.b16 %v709, %v706
  %v737 = vpack.c.b16 %v710, %v707
  %v738 = vpack.c.b16 %v714, %v711
  %v739 = vpack.c.b16 %v715, %v712
  %v740 = vpack.c.b16 %v716, %v713
  %765 = vmatpush.bf16.msra.mxu0 %v738
  %766 = vmatpush.bf16.msra.mxu0 %v735
  %767 = vmatpush.bf16.msra.mxu0 %v732
  %768 = vmatpush.bf16.msra.mxu0 %v729
  %769 = vmatpush.bf16.msra.mxu0 %v726
  %770 = vmatpush.bf16.msra.mxu0 %v723
  %771 = vmatpush.bf16.msra.mxu0 %v720
  %772 = vmatpush.bf16.msra.mxu0 %v717
  %773 = vmatmul.bf16.gmra.mxu0 0
  %v774 = vpop.f32.mrf.mxu0
  %v775 = vadd.f32 0.0, %v774
  %v776 = vpop.f32.mrf.mxu0
  %777 = vdwg.mxu0
  %778 = vmatpush.bf16.msra.mxu0 %v739
  %779 = vmatpush.bf16.msra.mxu0 %v736
  %780 = vmatpush.bf16.msra.mxu0 %v733
  %781 = vmatpush.bf16.msra.mxu0 %v730
  %782 = vmatpush.bf16.msra.mxu0 %v727
  %783 = vmatpush.bf16.msra.mxu0 %v724
  %784 = vmatpush.bf16.msra.mxu0 %v721
  %785 = vmatpush.bf16.msra.mxu0 %v718
  %786 = vmatmul.bf16.gmra.mxu0 0
  %v787 = vpop.f32.mrf.mxu0
  %v788 = vadd.f32 0.0, %v787
  %v789 = vpop.f32.mrf.mxu0
  %790 = vdwg.mxu0
  %791 = vmatpush.bf16.msra.mxu0 %v740
  %792 = vmatpush.bf16.msra.mxu0 %v737
  %793 = vmatpush.bf16.msra.mxu0 %v734
  %794 = vmatpush.bf16.msra.mxu0 %v731
  %795 = vmatpush.bf16.msra.mxu0 %v728
  %796 = vmatpush.bf16.msra.mxu0 %v725
  %797 = vmatpush.bf16.msra.mxu0 %v722
  %798 = vmatpush.bf16.msra.mxu0 %v719
  %799 = vmatmul.bf16.gmra.mxu0 0
  %v800 = vpop.f32.mrf.mxu0
  %v801 = vadd.f32 0.0, %v800
  %v802 = vpop.f32.mrf.mxu0
  %803 = vdwg.mxu0
  %v804 = vadd.f32 %v279, %v775
  %v805 = vxor.u32 %v804, 2147483648
  %v806 = vmul.f32 %v805, 1.442695
  %v807 = vpow.pop %v806
  %v808 = vadd.f32 %v807, 1.0
  %v809 = vrcp.pop %v808
  %v810 = vmul.f32 %v808, %v809
  %v811 = vsub.f32 1.0, %v810
  %v812 = vmul.f32 %v809, %v811
  %v813 = vadd.f32 %v809, %v812
  %vm814 = vweird.f32 %v808
  %vm815 = vweird.f32 %v809
  %vm816 = vmor %vm814, %vm815
  %v817 = vsel %vm816, %v809, %v813
  %v818 = vand.u32 2147483647, %v808
  %vm819 = vcmp.eq.f32.partialorder %v818, 8.507059e+37
  %v820 = vand.u32 %v808, 2147483648
  %v821 = vor.u32 1.1754944e-38, %v820
  %v822 = vsel %vm819, %v821, %v817
  %v823 = vmul.f32 1.0, %v822
  %v824 = vadd.f32 %v308, %v788
  %v825 = vxor.u32 %v824, 2147483648
  %v826 = vmul.f32 %v825, 1.442695
  %v827 = vpow.pop %v826
  %v828 = vadd.f32 %v827, 1.0
  %v829 = vrcp.pop %v828
  %v830 = vmul.f32 %v828, %v829
  %v831 = vsub.f32 1.0, %v830
  %v832 = vmul.f32 %v829, %v831
  %v833 = vadd.f32 %v829, %v832
  %vm834 = vweird.f32 %v828
  %vm835 = vweird.f32 %v829
  %vm836 = vmor %vm834, %vm835
  %v837 = vsel %vm836, %v829, %v833
  %v838 = vand.u32 2147483647, %v828
  %vm839 = vcmp.eq.f32.partialorder %v838, 8.507059e+37
  %v840 = vand.u32 %v828, 2147483648
  %v841 = vor.u32 1.1754944e-38, %v840
  %v842 = vsel %vm839, %v841, %v837
  %v843 = vmul.f32 1.0, %v842
  %v845 = vperm.slane %v412, 0
  %v847 = vadd.f32 %v801, %v845
  %v848 = vmul.f32 %v823, %v847
  %v849 = vadd.f32 %v337, %v848
  %v850 = vtanh.pop %v849
  %v851 = vsub.f32 1.0, %v843
  %v852 = vmul.f32 %v851, %v850
  %v853 = vmul.f32 %v843, 0.0
  %v854 = vadd.f32 %v852, %v853
  %856 = vset.pattern.permute.xlu0 0
  %857 = vperm.xlu0 %856, %v346
  %v858 = vpop.permute.xlu0 %857
  %v860 = vmul.f32 %v854, %v858
  %v861 = vpack.c.bf16 %v636, %v636
  %862 = vmatpush.bf16.msra.mxu0 %v514
  %863 = vmatpush.bf16.msra.mxu0 %v511
  %864 = vmatpush.bf16.msra.mxu0 %v508
  %865 = vmatpush.bf16.msra.mxu0 %v505
  %866 = vmatpush.bf16.msra.mxu0 %v502
  %867 = vmatpush.bf16.msra.mxu0 %v499
  %868 = vmatpush.bf16.msra.mxu0 %v496
  %869 = vmatpush.bf16.msra.mxu0 %v493
  %870 = vmatmul.bf16.gmra.mxu0 %v861
  %v871 = vpop.f32.mrf.mxu0
  %v872 = vadd.f32 0.0, %v871
  %v873 = vpop.f32.mrf.mxu0
  %874 = vdwg.mxu0
  %875 = vmatpush.bf16.msra.mxu0 %v515
  %876 = vmatpush.bf16.msra.mxu0 %v512
  %877 = vmatpush.bf16.msra.mxu0 %v509
  %878 = vmatpush.bf16.msra.mxu0 %v506
  %879 = vmatpush.bf16.msra.mxu0 %v503
  %880 = vmatpush.bf16.msra.mxu0 %v500
  %881 = vmatpush.bf16.msra.mxu0 %v497
  %882 = vmatpush.bf16.msra.mxu0 %v494
  %883 = vmatmul.bf16.gmra.mxu0 %v861
  %v884 = vpop.f32.mrf.mxu0
  %v885 = vadd.f32 0.0, %v884
  %v886 = vpop.f32.mrf.mxu0
  %887 = vdwg.mxu0
  %888 = vmatpush.bf16.msra.mxu0 %v516
  %889 = vmatpush.bf16.msra.mxu0 %v513
  %890 = vmatpush.bf16.msra.mxu0 %v510
  %891 = vmatpush.bf16.msra.mxu0 %v507
  %892 = vmatpush.bf16.msra.mxu0 %v504
  %893 = vmatpush.bf16.msra.mxu0 %v501
  %894 = vmatpush.bf16.msra.mxu0 %v498
  %895 = vmatpush.bf16.msra.mxu0 %v495
  %896 = vmatmul.bf16.gmra.mxu0 %v861
  %v897 = vpop.f32.mrf.mxu0
  %v898 = vadd.f32 0.0, %v897
  %v899 = vpop.f32.mrf.mxu0
  %900 = vdwg.mxu0
  %v901 = vadd.f32 %v177, %v872
  %v902 = vxor.u32 %v901, 2147483648
  %v903 = vmul.f32 %v902, 1.442695
  %v904 = vpow.pop %v903
  %v905 = vadd.f32 %v904, 1.0
  %v906 = vrcp.pop %v905
  %v907 = vmul.f32 %v905, %v906
  %v908 = vsub.f32 1.0, %v907
  %v909 = vmul.f32 %v906, %v908
  %v910 = vadd.f32 %v906, %v909
  %vm911 = vweird.f32 %v905
  %vm912 = vweird.f32 %v906
  %vm913 = vmor %vm911, %vm912
  %v914 = vsel %vm913, %v906, %v910
  %v915 = vand.u32 2147483647, %v905
  %vm916 = vcmp.eq.f32.partialorder %v915, 8.507059e+37
  %v917 = vand.u32 %v905, 2147483648
  %v918 = vor.u32 1.1754944e-38, %v917
  %v919 = vsel %vm916, %v918, %v914
  %v920 = vmul.f32 1.0, %v919
  %v921 = vadd.f32 %v206, %v885
  %v922 = vxor.u32 %v921, 2147483648
  %v923 = vmul.f32 %v922, 1.442695
  %v924 = vpow.pop %v923
  %v925 = vadd.f32 %v924, 1.0
  %v926 = vrcp.pop %v925
  %v927 = vmul.f32 %v925, %v926
  %v928 = vsub.f32 1.0, %v927
  %v929 = vmul.f32 %v926, %v928
  %v930 = vadd.f32 %v926, %v929
  %vm931 = vweird.f32 %v925
  %vm932 = vweird.f32 %v926
  %vm933 = vmor %vm931, %vm932
  %v934 = vsel %vm933, %v926, %v930
  %v935 = vand.u32 2147483647, %v925
  %vm936 = vcmp.eq.f32.partialorder %v935, 8.507059e+37
  %v937 = vand.u32 %v925, 2147483648
  %v938 = vor.u32 1.1754944e-38, %v937
  %v939 = vsel %vm936, %v938, %v934
  %v940 = vmul.f32 1.0, %v939
  %v941 = vadd.f32 %v898, %v621
  %v942 = vmul.f32 %v920, %v941
  %v943 = vadd.f32 %v235, %v942
  %v944 = vtanh.pop %v943
  %v945 = vsub.f32 1.0, %v940
  %v946 = vmul.f32 %v945, %v944
  %v947 = vmul.f32 %v940, %v636
  %v948 = vadd.f32 %v946, %v947
  %950 = vset.pattern.permute.xlu0 0
  %951 = vperm.xlu0 %950, %v340
  %v952 = vpop.permute.xlu0 %951
  %v954 = vmul.f32 %v948, %v952
  %v955 = vpack.c.bf16 %v860, %v860
  %956 = vmatpush.bf16.msra.mxu0 %v738
  %957 = vmatpush.bf16.msra.mxu0 %v735
  %958 = vmatpush.bf16.msra.mxu0 %v732
  %959 = vmatpush.bf16.msra.mxu0 %v729
  %960 = vmatpush.bf16.msra.mxu0 %v726
  %961 = vmatpush.bf16.msra.mxu0 %v723
  %962 = vmatpush.bf16.msra.mxu0 %v720
  %963 = vmatpush.bf16.msra.mxu0 %v717
  %964 = vmatmul.bf16.gmra.mxu0 %v955
  %v965 = vpop.f32.mrf.mxu0
  %v966 = vadd.f32 0.0, %v965
  %v967 = vpop.f32.mrf.mxu0
  %968 = vdwg.mxu0
  %969 = vmatpush.bf16.msra.mxu0 %v739
  %970 = vmatpush.bf16.msra.mxu0 %v736
  %971 = vmatpush.bf16.msra.mxu0 %v733
  %972 = vmatpush.bf16.msra.mxu0 %v730
  %973 = vmatpush.bf16.msra.mxu0 %v727
  %974 = vmatpush.bf16.msra.mxu0 %v724
  %975 = vmatpush.bf16.msra.mxu0 %v721
  %976 = vmatpush.bf16.msra.mxu0 %v718
  %977 = vmatmul.bf16.gmra.mxu0 %v955
  %v978 = vpop.f32.mrf.mxu0
  %v979 = vadd.f32 0.0, %v978
  %v980 = vpop.f32.mrf.mxu0
  %981 = vdwg.mxu0
  %982 = vmatpush.bf16.msra.mxu0 %v740
  %983 = vmatpush.bf16.msra.mxu0 %v737
  %984 = vmatpush.bf16.msra.mxu0 %v734
  %985 = vmatpush.bf16.msra.mxu0 %v731
  %986 = vmatpush.bf16.msra.mxu0 %v728
  %987 = vmatpush.bf16.msra.mxu0 %v725
  %988 = vmatpush.bf16.msra.mxu0 %v722
  %989 = vmatpush.bf16.msra.mxu0 %v719
  %990 = vmatmul.bf16.gmra.mxu0 %v955
  %v991 = vpop.f32.mrf.mxu0
  %v992 = vadd.f32 0.0, %v991
  %v993 = vpop.f32.mrf.mxu0
  %994 = vdwg.mxu0
  %v995 = vadd.f32 %v277, %v966
  %v996 = vxor.u32 %v995, 2147483648
  %v997 = vmul.f32 %v996, 1.442695
  %v998 = vpow.pop %v997
  %v999 = vadd.f32 %v998, 1.0
  %v1000 = vrcp.pop %v999
  %v1001 = vmul.f32 %v999, %v1000
  %v1002 = vsub.f32 1.0, %v1001
  %v1003 = vmul.f32 %v1000, %v1002
  %v1004 = vadd.f32 %v1000, %v1003
  %vm1005 = vweird.f32 %v999
  %vm1006 = vweird.f32 %v1000
  %vm1007 = vmor %vm1005, %vm1006
  %v1008 = vsel %vm1007, %v1000, %v1004
  %v1009 = vand.u32 2147483647, %v999
  %vm1010 = vcmp.eq.f32.partialorder %v1009, 8.507059e+37
  %v1011 = vand.u32 %v999, 2147483648
  %v1012 = vor.u32 1.1754944e-38, %v1011
  %v1013 = vsel %vm1010, %v1012, %v1008
  %v1014 = vmul.f32 1.0, %v1013
  %v1015 = vadd.f32 %v306, %v979
  %v1016 = vxor.u32 %v1015, 2147483648
  %v1017 = vmul.f32 %v1016, 1.442695
  %v1018 = vpow.pop %v1017
  %v1019 = vadd.f32 %v1018, 1.0
  %v1020 = vrcp.pop %v1019
  %v1021 = vmul.f32 %v1019, %v1020
  %v1022 = vsub.f32 1.0, %v1021
  %v1023 = vmul.f32 %v1020, %v1022
  %v1024 = vadd.f32 %v1020, %v1023
  %vm1025 = vweird.f32 %v1019
  %vm1026 = vweird.f32 %v1020
  %vm1027 = vmor %vm1025, %vm1026
  %v1028 = vsel %vm1027, %v1020, %v1024
  %v1029 = vand.u32 2147483647, %v1019
  %vm1030 = vcmp.eq.f32.partialorder %v1029, 8.507059e+37
  %v1031 = vand.u32 %v1019, 2147483648
  %v1032 = vor.u32 1.1754944e-38, %v1031
  %v1033 = vsel %vm1030, %v1032, %v1028
  %v1034 = vmul.f32 1.0, %v1033
  %v1035 = vadd.f32 %v992, %v845
  %v1036 = vmul.f32 %v1014, %v1035
  %v1037 = vadd.f32 %v335, %v1036
  %v1038 = vtanh.pop %v1037
  %v1039 = vsub.f32 1.0, %v1034
  %v1040 = vmul.f32 %v1039, %v1038
  %v1041 = vmul.f32 %v1034, %v860
  %v1042 = vadd.f32 %v1040, %v1041
  %1044 = vset.pattern.permute.xlu0 0
  %1045 = vperm.xlu0 %1044, %v345
  %v1046 = vpop.permute.xlu0 %1045
  %v1048 = vmul.f32 %v1042, %v1046
  %v1049 = vpack.c.bf16 %v954, %v954
  %1050 = vmatpush.bf16.msra.mxu0 %v514
  %1051 = vmatpush.bf16.msra.mxu0 %v511
  %1052 = vmatpush.bf16.msra.mxu0 %v508
  %1053 = vmatpush.bf16.msra.mxu0 %v505
  %1054 = vmatpush.bf16.msra.mxu0 %v502
  %1055 = vmatpush.bf16.msra.mxu0 %v499
  %1056 = vmatpush.bf16.msra.mxu0 %v496
  %1057 = vmatpush.bf16.msra.mxu0 %v493
  %1058 = vmatmul.bf16.gmra.mxu0 %v1049
  %v1059 = vpop.f32.mrf.mxu0
  %v1060 = vadd.f32 0.0, %v1059
  %v1061 = vpop.f32.mrf.mxu0
  %1062 = vdwg.mxu0
  %1063 = vmatpush.bf16.msra.mxu0 %v515
  %1064 = vmatpush.bf16.msra.mxu0 %v512
  %1065 = vmatpush.bf16.msra.mxu0 %v509
  %1066 = vmatpush.bf16.msra.mxu0 %v506
  %1067 = vmatpush.bf16.msra.mxu0 %v503
  %1068 = vmatpush.bf16.msra.mxu0 %v500
  %1069 = vmatpush.bf16.msra.mxu0 %v497
  %1070 = vmatpush.bf16.msra.mxu0 %v494
  %1071 = vmatmul.bf16.gmra.mxu0 %v1049
  %v1072 = vpop.f32.mrf.mxu0
  %v1073 = vadd.f32 0.0, %v1072
  %v1074 = vpop.f32.mrf.mxu0
  %1075 = vdwg.mxu0
  %1076 = vmatpush.bf16.msra.mxu0 %v516
  %1077 = vmatpush.bf16.msra.mxu0 %v513
  %1078 = vmatpush.bf16.msra.mxu0 %v510
  %1079 = vmatpush.bf16.msra.mxu0 %v507
  %1080 = vmatpush.bf16.msra.mxu0 %v504
  %1081 = vmatpush.bf16.msra.mxu0 %v501
  %1082 = vmatpush.bf16.msra.mxu0 %v498
  %1083 = vmatpush.bf16.msra.mxu0 %v495
  %1084 = vmatmul.bf16.gmra.mxu0 %v1049
  %v1085 = vpop.f32.mrf.mxu0
  %v1086 = vadd.f32 0.0, %v1085
  %v1087 = vpop.f32.mrf.mxu0
  %1088 = vdwg.mxu0
  %v1089 = vadd.f32 %v180, %v1060
  %v1090 = vxor.u32 %v1089, 2147483648
  %v1091 = vmul.f32 %v1090, 1.442695
  %v1092 = vpow.pop %v1091
  %v1093 = vadd.f32 %v1092, 1.0
  %v1094 = vrcp.pop %v1093
  %v1095 = vmul.f32 %v1093, %v1094
  %v1096 = vsub.f32 1.0, %v1095
  %v1097 = vmul.f32 %v1094, %v1096
  %v1098 = vadd.f32 %v1094, %v1097
  %vm1099 = vweird.f32 %v1093
  %vm1100 = vweird.f32 %v1094
  %vm1101 = vmor %vm1099, %vm1100
  %v1102 = vsel %vm1101, %v1094, %v1098
  %v1103 = vand.u32 2147483647, %v1093
  %vm1104 = vcmp.eq.f32.partialorder %v1103, 8.507059e+37
  %v1105 = vand.u32 %v1093, 2147483648
  %v1106 = vor.u32 1.1754944e-38, %v1105
  %v1107 = vsel %vm1104, %v1106, %v1102
  %v1108 = vmul.f32 1.0, %v1107
  %v1109 = vadd.f32 %v209, %v1073
  %v1110 = vxor.u32 %v1109, 2147483648
  %v1111 = vmul.f32 %v1110, 1.442695
  %v1112 = vpow.pop %v1111
  %v1113 = vadd.f32 %v1112, 1.0
  %v1114 = vrcp.pop %v1113
  %v1115 = vmul.f32 %v1113, %v1114
  %v1116 = vsub.f32 1.0, %v1115
  %v1117 = vmul.f32 %v1114, %v1116
  %v1118 = vadd.f32 %v1114, %v1117
  %vm1119 = vweird.f32 %v1113
  %vm1120 = vweird.f32 %v1114
  %vm1121 = vmor %vm1119, %vm1120
  %v1122 = vsel %vm1121, %v1114, %v1118
  %v1123 = vand.u32 2147483647, %v1113
  %vm1124 = vcmp.eq.f32.partialorder %v1123, 8.507059e+37
  %v1125 = vand.u32 %v1113, 2147483648
  %v1126 = vor.u32 1.1754944e-38, %v1125
  %v1127 = vsel %vm1124, %v1126, %v1122
  %v1128 = vmul.f32 1.0, %v1127
  %v1129 = vadd.f32 %v1086, %v621
  %v1130 = vmul.f32 %v1108, %v1129
  %v1131 = vadd.f32 %v238, %v1130
  %v1132 = vtanh.pop %v1131
  %v1133 = vsub.f32 1.0, %v1128
  %v1134 = vmul.f32 %v1133, %v1132
  %v1135 = vmul.f32 %v1128, %v954
  %v1136 = vadd.f32 %v1134, %v1135
  %1138 = vset.pattern.permute.xlu0 0
  %1139 = vperm.xlu0 %1138, %v341
  %v1140 = vpop.permute.xlu0 %1139
  %v1142 = vmul.f32 %v1136, %v1140
  %v1143 = vpack.c.bf16 %v1048, %v1048
  %1144 = vmatpush.bf16.msra.mxu0 %v738
  %1145 = vmatpush.bf16.msra.mxu0 %v735
  %1146 = vmatpush.bf16.msra.mxu0 %v732
  %1147 = vmatpush.bf16.msra.mxu0 %v729
  %1148 = vmatpush.bf16.msra.mxu0 %v726
  %1149 = vmatpush.bf16.msra.mxu0 %v723
  %1150 = vmatpush.bf16.msra.mxu0 %v720
  %1151 = vmatpush.bf16.msra.mxu0 %v717
  %1152 = vmatmul.bf16.gmra.mxu0 %v1143
  %v1153 = vpop.f32.mrf.mxu0
  %v1154 = vadd.f32 0.0, %v1153
  %v1155 = vpop.f32.mrf.mxu0
  %1156 = vdwg.mxu0
  %1157 = vmatpush.bf16.msra.mxu0 %v739
  %1158 = vmatpush.bf16.msra.mxu0 %v736
  %1159 = vmatpush.bf16.msra.mxu0 %v733
  %1160 = vmatpush.bf16.msra.mxu0 %v730
  %1161 = vmatpush.bf16.msra.mxu0 %v727
  %1162 = vmatpush.bf16.msra.mxu0 %v724
  %1163 = vmatpush.bf16.msra.mxu0 %v721
  %1164 = vmatpush.bf16.msra.mxu0 %v718
  %1165 = vmatmul.bf16.gmra.mxu0 %v1143
  %v1166 = vpop.f32.mrf.mxu0
  %v1167 = vadd.f32 0.0, %v1166
  %v1168 = vpop.f32.mrf.mxu0
  %1169 = vdwg.mxu0
  %1170 = vmatpush.bf16.msra.mxu0 %v740
  %1171 = vmatpush.bf16.msra.mxu0 %v737
  %1172 = vmatpush.bf16.msra.mxu0 %v734
  %1173 = vmatpush.bf16.msra.mxu0 %v731
  %1174 = vmatpush.bf16.msra.mxu0 %v728
  %1175 = vmatpush.bf16.msra.mxu0 %v725
  %1176 = vmatpush.bf16.msra.mxu0 %v722
  %1177 = vmatpush.bf16.msra.mxu0 %v719
  %1178 = vmatmul.bf16.gmra.mxu0 %v1143
  %v1179 = vpop.f32.mrf.mxu0
  %v1180 = vadd.f32 0.0, %v1179
  %v1181 = vpop.f32.mrf.mxu0
  %1182 = vdwg.mxu0
  %v1183 = vadd.f32 %v274, %v1154
  %v1184 = vxor.u32 %v1183, 2147483648
  %v1185 = vmul.f32 %v1184, 1.442695
  %v1186 = vpow.pop %v1185
  %v1187 = vadd.f32 %v1186, 1.0
  %v1188 = vrcp.pop %v1187
  %v1189 = vmul.f32 %v1187, %v1188
  %v1190 = vsub.f32 1.0, %v1189
  %v1191 = vmul.f32 %v1188, %v1190
  %v1192 = vadd.f32 %v1188, %v1191
  %vm1193 = vweird.f32 %v1187
  %vm1194 = vweird.f32 %v1188
  %vm1195 = vmor %vm1193, %vm1194
  %v1196 = vsel %vm1195, %v1188, %v1192
  %v1197 = vand.u32 2147483647, %v1187
  %vm1198 = vcmp.eq.f32.partialorder %v1197, 8.507059e+37
  %v1199 = vand.u32 %v1187, 2147483648
  %v1200 = vor.u32 1.1754944e-38, %v1199
  %v1201 = vsel %vm1198, %v1200, %v1196
  %v1202 = vmul.f32 1.0, %v1201
  %v1203 = vadd.f32 %v303, %v1167
  %v1204 = vxor.u32 %v1203, 2147483648
  %v1205 = vmul.f32 %v1204, 1.442695
  %v1206 = vpow.pop %v1205
  %v1207 = vadd.f32 %v1206, 1.0
  %v1208 = vrcp.pop %v1207
  %v1209 = vmul.f32 %v1207, %v1208
  %v1210 = vsub.f32 1.0, %v1209
  %v1211 = vmul.f32 %v1208, %v1210
  %v1212 = vadd.f32 %v1208, %v1211
  %vm1213 = vweird.f32 %v1207
  %vm1214 = vweird.f32 %v1208
  %vm1215 = vmor %vm1213, %vm1214
  %v1216 = vsel %vm1215, %v1208, %v1212
  %v1217 = vand.u32 2147483647, %v1207
  %vm1218 = vcmp.eq.f32.partialorder %v1217, 8.507059e+37
  %v1219 = vand.u32 %v1207, 2147483648
  %v1220 = vor.u32 1.1754944e-38, %v1219
  %v1221 = vsel %vm1218, %v1220, %v1216
  %v1222 = vmul.f32 1.0, %v1221
  %v1223 = vadd.f32 %v1180, %v845
  %v1224 = vmul.f32 %v1202, %v1223
  %v1225 = vadd.f32 %v332, %v1224
  %v1226 = vtanh.pop %v1225
  %v1227 = vsub.f32 1.0, %v1222
  %v1228 = vmul.f32 %v1227, %v1226
  %v1229 = vmul.f32 %v1222, %v1048
  %v1230 = vadd.f32 %v1228, %v1229
  %1232 = vset.pattern.permute.xlu0 0
  %1233 = vperm.xlu0 %1232, %v344
  %v1234 = vpop.permute.xlu0 %1233
  %v1236 = vmul.f32 %v1230, %v1234
  %v1237 = vpack.c.bf16 %v1142, %v1142
  %1238 = vmatpush.bf16.msra.mxu0 %v514
  %1239 = vmatpush.bf16.msra.mxu0 %v511
  %1240 = vmatpush.bf16.msra.mxu0 %v508
  %1241 = vmatpush.bf16.msra.mxu0 %v505
  %1242 = vmatpush.bf16.msra.mxu0 %v502
  %1243 = vmatpush.bf16.msra.mxu0 %v499
  %1244 = vmatpush.bf16.msra.mxu0 %v496
  %1245 = vmatpush.bf16.msra.mxu0 %v493
  %1246 = vmatmul.bf16.gmra.mxu0 %v1237
  %v1247 = vpop.f32.mrf.mxu0
  %v1248 = vadd.f32 0.0, %v1247
  %v1249 = vpop.f32.mrf.mxu0
  %1250 = vdwg.mxu0
  %1251 = vmatpush.bf16.msra.mxu0 %v515
  %1252 = vmatpush.bf16.msra.mxu0 %v512
  %1253 = vmatpush.bf16.msra.mxu0 %v509
  %1254 = vmatpush.bf16.msra.mxu0 %v506
  %1255 = vmatpush.bf16.msra.mxu0 %v503
  %1256 = vmatpush.bf16.msra.mxu0 %v500
  %1257 = vmatpush.bf16.msra.mxu0 %v497
  %1258 = vmatpush.bf16.msra.mxu0 %v494
  %1259 = vmatmul.bf16.gmra.mxu0 %v1237
  %v1260 = vpop.f32.mrf.mxu0
  %v1261 = vadd.f32 0.0, %v1260
  %v1262 = vpop.f32.mrf.mxu0
  %1263 = vdwg.mxu0
  %1264 = vmatpush.bf16.msra.mxu0 %v516
  %1265 = vmatpush.bf16.msra.mxu0 %v513
  %1266 = vmatpush.bf16.msra.mxu0 %v510
  %1267 = vmatpush.bf16.msra.mxu0 %v507
  %1268 = vmatpush.bf16.msra.mxu0 %v504
  %1269 = vmatpush.bf16.msra.mxu0 %v501
  %1270 = vmatpush.bf16.msra.mxu0 %v498
  %1271 = vmatpush.bf16.msra.mxu0 %v495
  %1272 = vmatmul.bf16.gmra.mxu0 %v1237
  %v1273 = vpop.f32.mrf.mxu0
  %v1274 = vadd.f32 0.0, %v1273
  %v1275 = vpop.f32.mrf.mxu0
  %1276 = vdwg.mxu0
  %v1277 = vadd.f32 %v182, %v1248
  %v1278 = vxor.u32 %v1277, 2147483648
  %v1279 = vmul.f32 %v1278, 1.442695
  %v1280 = vpow.pop %v1279
  %v1281 = vadd.f32 %v1280, 1.0
  %v1282 = vrcp.pop %v1281
  %v1283 = vmul.f32 %v1281, %v1282
  %v1284 = vsub.f32 1.0, %v1283
  %v1285 = vmul.f32 %v1282, %v1284
  %v1286 = vadd.f32 %v1282, %v1285
  %vm1287 = vweird.f32 %v1281
  %vm1288 = vweird.f32 %v1282
  %vm1289 = vmor %vm1287, %vm1288
  %v1290 = vsel %vm1289, %v1282, %v1286
  %v1291 = vand.u32 2147483647, %v1281
  %vm1292 = vcmp.eq.f32.partialorder %v1291, 8.507059e+37
  %v1293 = vand.u32 %v1281, 2147483648
  %v1294 = vor.u32 1.1754944e-38, %v1293
  %v1295 = vsel %vm1292, %v1294, %v1290
  %v1296 = vmul.f32 1.0, %v1295
  %v1297 = vadd.f32 %v211, %v1261
  %v1298 = vxor.u32 %v1297, 2147483648
  %v1299 = vmul.f32 %v1298, 1.442695
  %v1300 = vpow.pop %v1299
  %v1301 = vadd.f32 %v1300, 1.0
  %v1302 = vrcp.pop %v1301
  %v1303 = vmul.f32 %v1301, %v1302
  %v1304 = vsub.f32 1.0, %v1303
  %v1305 = vmul.f32 %v1302, %v1304
  %v1306 = vadd.f32 %v1302, %v1305
  %vm1307 = vweird.f32 %v1301
  %vm1308 = vweird.f32 %v1302
  %vm1309 = vmor %vm1307, %vm1308
  %v1310 = vsel %vm1309, %v1302, %v1306
  %v1311 = vand.u32 2147483647, %v1301
  %vm1312 = vcmp.eq.f32.partialorder %v1311, 8.507059e+37
  %v1313 = vand.u32 %v1301, 2147483648
  %v1314 = vor.u32 1.1754944e-38, %v1313
  %v1315 = vsel %vm1312, %v1314, %v1310
  %v1316 = vmul.f32 1.0, %v1315
  %v1317 = vadd.f32 %v1274, %v621
  %v1318 = vmul.f32 %v1296, %v1317
  %v1319 = vadd.f32 %v240, %v1318
  %v1320 = vtanh.pop %v1319
  %v1321 = vsub.f32 1.0, %v1316
  %v1322 = vmul.f32 %v1321, %v1320
  %v1323 = vmul.f32 %v1316, %v1142
  %v1324 = vadd.f32 %v1322, %v1323
  %1326 = vset.pattern.permute.xlu0 0
  %1327 = vperm.xlu0 %1326, %v342
  %v1328 = vpop.permute.xlu0 %1327
  %v1330 = vmul.f32 %v1324, %v1328
  %v1331 = vpack.c.bf16 %v1236, %v1236
  %1332 = vmatpush.bf16.msra.mxu0 %v738
  %1333 = vmatpush.bf16.msra.mxu0 %v735
  %1334 = vmatpush.bf16.msra.mxu0 %v732
  %1335 = vmatpush.bf16.msra.mxu0 %v729
  %1336 = vmatpush.bf16.msra.mxu0 %v726
  %1337 = vmatpush.bf16.msra.mxu0 %v723
  %1338 = vmatpush.bf16.msra.mxu0 %v720
  %1339 = vmatpush.bf16.msra.mxu0 %v717
  %1340 = vmatmul.bf16.gmra.mxu0 %v1331
  %v1341 = vpop.f32.mrf.mxu0
  %v1342 = vadd.f32 0.0, %v1341
  %v1343 = vpop.f32.mrf.mxu0
  %1344 = vdwg.mxu0
  %1345 = vmatpush.bf16.msra.mxu0 %v739
  %1346 = vmatpush.bf16.msra.mxu0 %v736
  %1347 = vmatpush.bf16.msra.mxu0 %v733
  %1348 = vmatpush.bf16.msra.mxu0 %v730
  %1349 = vmatpush.bf16.msra.mxu0 %v727
  %1350 = vmatpush.bf16.msra.mxu0 %v724
  %1351 = vmatpush.bf16.msra.mxu0 %v721
  %1352 = vmatpush.bf16.msra.mxu0 %v718
  %1353 = vmatmul.bf16.gmra.mxu0 %v1331
  %v1354 = vpop.f32.mrf.mxu0
  %v1355 = vadd.f32 0.0, %v1354
  %v1356 = vpop.f32.mrf.mxu0
  %1357 = vdwg.mxu0
  %1358 = vmatpush.bf16.msra.mxu0 %v740
  %1359 = vmatpush.bf16.msra.mxu0 %v737
  %1360 = vmatpush.bf16.msra.mxu0 %v734
  %1361 = vmatpush.bf16.msra.mxu0 %v731
  %1362 = vmatpush.bf16.msra.mxu0 %v728
  %1363 = vmatpush.bf16.msra.mxu0 %v725
  %1364 = vmatpush.bf16.msra.mxu0 %v722
  %1365 = vmatpush.bf16.msra.mxu0 %v719
  %1366 = vmatmul.bf16.gmra.mxu0 %v1331
  %v1367 = vpop.f32.mrf.mxu0
  %v1368 = vadd.f32 0.0, %v1367
  %v1369 = vpop.f32.mrf.mxu0
  %1370 = vdwg.mxu0
  %v1371 = vadd.f32 %v272, %v1342
  %v1372 = vxor.u32 %v1371, 2147483648
  %v1373 = vmul.f32 %v1372, 1.442695
  %v1374 = vpow.pop %v1373
  %v1375 = vadd.f32 %v1374, 1.0
  %v1376 = vrcp.pop %v1375
  %v1377 = vmul.f32 %v1375, %v1376
  %v1378 = vsub.f32 1.0, %v1377
  %v1379 = vmul.f32 %v1376, %v1378
  %v1380 = vadd.f32 %v1376, %v1379
  %vm1381 = vweird.f32 %v1375
  %vm1382 = vweird.f32 %v1376
  %vm1383 = vmor %vm1381, %vm1382
  %v1384 = vsel %vm1383, %v1376, %v1380
  %v1385 = vand.u32 2147483647, %v1375
  %vm1386 = vcmp.eq.f32.partialorder %v1385, 8.507059e+37
  %v1387 = vand.u32 %v1375, 2147483648
  %v1388 = vor.u32 1.1754944e-38, %v1387
  %v1389 = vsel %vm1386, %v1388, %v1384
  %v1390 = vmul.f32 1.0, %v1389
  %v1391 = vadd.f32 %v301, %v1355
  %v1392 = vxor.u32 %v1391, 2147483648
  %v1393 = vmul.f32 %v1392, 1.442695
  %v1394 = vpow.pop %v1393
  %v1395 = vadd.f32 %v1394, 1.0
  %v1396 = vrcp.pop %v1395
  %v1397 = vmul.f32 %v1395, %v1396
  %v1398 = vsub.f32 1.0, %v1397
  %v1399 = vmul.f32 %v1396, %v1398
  %v1400 = vadd.f32 %v1396, %v1399
  %vm1401 = vweird.f32 %v1395
  %vm1402 = vweird.f32 %v1396
  %vm1403 = vmor %vm1401, %vm1402
  %v1404 = vsel %vm1403, %v1396, %v1400
  %v1405 = vand.u32 2147483647, %v1395
  %vm1406 = vcmp.eq.f32.partialorder %v1405, 8.507059e+37
  %v1407 = vand.u32 %v1395, 2147483648
  %v1408 = vor.u32 1.1754944e-38, %v1407
  %v1409 = vsel %vm1406, %v1408, %v1404
  %v1410 = vmul.f32 1.0, %v1409
  %v1411 = vadd.f32 %v1368, %v845
  %v1412 = vmul.f32 %v1390, %v1411
  %v1413 = vadd.f32 %v330, %v1412
  %v1414 = vtanh.pop %v1413
  %v1415 = vsub.f32 1.0, %v1410
  %v1416 = vmul.f32 %v1415, %v1414
  %v1417 = vmul.f32 %v1410, %v1236
  %v1418 = vadd.f32 %v1416, %v1417
  %1420 = vset.pattern.permute.xlu0 0
  %1421 = vperm.xlu0 %1420, %v343
  %v1422 = vpop.permute.xlu0 %1421
  %v1424 = vmul.f32 %v1418, %v1422
  %v1425 = vpack.c.bf16 %v1330, %v1330
  %1426 = vmatpush.bf16.msra.mxu0 %v514
  %1427 = vmatpush.bf16.msra.mxu0 %v511
  %1428 = vmatpush.bf16.msra.mxu0 %v508
  %1429 = vmatpush.bf16.msra.mxu0 %v505
  %1430 = vmatpush.bf16.msra.mxu0 %v502
  %1431 = vmatpush.bf16.msra.mxu0 %v499
  %1432 = vmatpush.bf16.msra.mxu0 %v496
  %1433 = vmatpush.bf16.msra.mxu0 %v493
  %1434 = vmatmul.bf16.gmra.mxu0 %v1425
  %v1435 = vpop.f32.mrf.mxu0
  %v1436 = vadd.f32 0.0, %v1435
  %v1437 = vpop.f32.mrf.mxu0
  %1438 = vdwg.mxu0
  %1439 = vmatpush.bf16.msra.mxu0 %v515
  %1440 = vmatpush.bf16.msra.mxu0 %v512
  %1441 = vmatpush.bf16.msra.mxu0 %v509
  %1442 = vmatpush.bf16.msra.mxu0 %v506
  %1443 = vmatpush.bf16.msra.mxu0 %v503
  %1444 = vmatpush.bf16.msra.mxu0 %v500
  %1445 = vmatpush.bf16.msra.mxu0 %v497
  %1446 = vmatpush.bf16.msra.mxu0 %v494
  %1447 = vmatmul.bf16.gmra.mxu0 %v1425
  %v1448 = vpop.f32.mrf.mxu0
  %v1449 = vadd.f32 0.0, %v1448
  %v1450 = vpop.f32.mrf.mxu0
  %1451 = vdwg.mxu0
  %1452 = vmatpush.bf16.msra.mxu0 %v516
  %1453 = vmatpush.bf16.msra.mxu0 %v513
  %1454 = vmatpush.bf16.msra.mxu0 %v510
  %1455 = vmatpush.bf16.msra.mxu0 %v507
  %1456 = vmatpush.bf16.msra.mxu0 %v504
  %1457 = vmatpush.bf16.msra.mxu0 %v501
  %1458 = vmatpush.bf16.msra.mxu0 %v498
  %1459 = vmatpush.bf16.msra.mxu0 %v495
  %1460 = vmatmul.bf16.gmra.mxu0 %v1425
  %v1461 = vpop.f32.mrf.mxu0
  %v1462 = vadd.f32 0.0, %v1461
  %v1463 = vpop.f32.mrf.mxu0
  %1464 = vdwg.mxu0
  %v1465 = vadd.f32 %v185, %v1436
  %v1466 = vxor.u32 %v1465, 2147483648
  %v1467 = vmul.f32 %v1466, 1.442695
  %v1468 = vpow.pop %v1467
  %v1469 = vadd.f32 %v1468, 1.0
  %v1470 = vrcp.pop %v1469
  %v1471 = vmul.f32 %v1469, %v1470
  %v1472 = vsub.f32 1.0, %v1471
  %v1473 = vmul.f32 %v1470, %v1472
  %v1474 = vadd.f32 %v1470, %v1473
  %vm1475 = vweird.f32 %v1469
  %vm1476 = vweird.f32 %v1470
  %vm1477 = vmor %vm1475, %vm1476
  %v1478 = vsel %vm1477, %v1470, %v1474
  %v1479 = vand.u32 2147483647, %v1469
  %vm1480 = vcmp.eq.f32.partialorder %v1479, 8.507059e+37
  %v1481 = vand.u32 %v1469, 2147483648
  %v1482 = vor.u32 1.1754944e-38, %v1481
  %v1483 = vsel %vm1480, %v1482, %v1478
  %v1484 = vmul.f32 1.0, %v1483
  %v1485 = vadd.f32 %v214, %v1449
  %v1486 = vxor.u32 %v1485, 2147483648
  %v1487 = vmul.f32 %v1486, 1.442695
  %v1488 = vpow.pop %v1487
  %v1489 = vadd.f32 %v1488, 1.0
  %v1490 = vrcp.pop %v1489
  %v1491 = vmul.f32 %v1489, %v1490
  %v1492 = vsub.f32 1.0, %v1491
  %v1493 = vmul.f32 %v1490, %v1492
  %v1494 = vadd.f32 %v1490, %v1493
  %vm1495 = vweird.f32 %v1489
  %vm1496 = vweird.f32 %v1490
  %vm1497 = vmor %vm1495, %vm1496
  %v1498 = vsel %vm1497, %v1490, %v1494
  %v1499 = vand.u32 2147483647, %v1489
  %vm1500 = vcmp.eq.f32.partialorder %v1499, 8.507059e+37
  %v1501 = vand.u32 %v1489, 2147483648
  %v1502 = vor.u32 1.1754944e-38, %v1501
  %v1503 = vsel %vm1500, %v1502, %v1498
  %v1504 = vmul.f32 1.0, %v1503
  %v1505 = vadd.f32 %v1462, %v621
  %v1506 = vmul.f32 %v1484, %v1505
  %v1507 = vadd.f32 %v243, %v1506
  %v1508 = vtanh.pop %v1507
  %v1509 = vsub.f32 1.0, %v1504
  %v1510 = vmul.f32 %v1509, %v1508
  %v1511 = vmul.f32 %v1504, %v1330
  %v1512 = vadd.f32 %v1510, %v1511
  %v1513 = vmul.f32 %v1512, %v1422
  %v1514 = vpack.c.bf16 %v1424, %v1424
  %1515 = vmatpush.bf16.msra.mxu0 %v738
  %1516 = vmatpush.bf16.msra.mxu0 %v735
  %1517 = vmatpush.bf16.msra.mxu0 %v732
  %1518 = vmatpush.bf16.msra.mxu0 %v729
  %1519 = vmatpush.bf16.msra.mxu0 %v726
  %1520 = vmatpush.bf16.msra.mxu0 %v723
  %1521 = vmatpush.bf16.msra.mxu0 %v720
  %1522 = vmatpush.bf16.msra.mxu0 %v717
  %1523 = vmatmul.bf16.gmra.mxu0 %v1514
  %v1524 = vpop.f32.mrf.mxu0
  %v1525 = vadd.f32 0.0, %v1524
  %v1526 = vpop.f32.mrf.mxu0
  %1527 = vdwg.mxu0
  %1528 = vmatpush.bf16.msra.mxu0 %v739
  %1529 = vmatpush.bf16.msra.mxu0 %v736
  %1530 = vmatpush.bf16.msra.mxu0 %v733
  %1531 = vmatpush.bf16.msra.mxu0 %v730
  %1532 = vmatpush.bf16.msra.mxu0 %v727
  %1533 = vmatpush.bf16.msra.mxu0 %v724
  %1534 = vmatpush.bf16.msra.mxu0 %v721
  %1535 = vmatpush.bf16.msra.mxu0 %v718
  %1536 = vmatmul.bf16.gmra.mxu0 %v1514
  %v1537 = vpop.f32.mrf.mxu0
  %v1538 = vadd.f32 0.0, %v1537
  %v1539 = vpop.f32.mrf.mxu0
  %1540 = vdwg.mxu0
  %1541 = vmatpush.bf16.msra.mxu0 %v740
  %1542 = vmatpush.bf16.msra.mxu0 %v737
  %1543 = vmatpush.bf16.msra.mxu0 %v734
  %1544 = vmatpush.bf16.msra.mxu0 %v731
  %1545 = vmatpush.bf16.msra.mxu0 %v728
  %1546 = vmatpush.bf16.msra.mxu0 %v725
  %1547 = vmatpush.bf16.msra.mxu0 %v722
  %1548 = vmatpush.bf16.msra.mxu0 %v719
  %1549 = vmatmul.bf16.gmra.mxu0 %v1514
  %v1550 = vpop.f32.mrf.mxu0
  %v1551 = vadd.f32 0.0, %v1550
  %v1552 = vpop.f32.mrf.mxu0
  %1553 = vdwg.mxu0
  %v1554 = vadd.f32 %v269, %v1525
  %v1555 = vxor.u32 %v1554, 2147483648
  %v1556 = vmul.f32 %v1555, 1.442695
  %v1557 = vpow.pop %v1556
  %v1558 = vadd.f32 %v1557, 1.0
  %v1559 = vrcp.pop %v1558
  %v1560 = vmul.f32 %v1558, %v1559
  %v1561 = vsub.f32 1.0, %v1560
  %v1562 = vmul.f32 %v1559, %v1561
  %v1563 = vadd.f32 %v1559, %v1562
  %vm1564 = vweird.f32 %v1558
  %vm1565 = vweird.f32 %v1559
  %vm1566 = vmor %vm1564, %vm1565
  %v1567 = vsel %vm1566, %v1559, %v1563
  %v1568 = vand.u32 2147483647, %v1558
  %vm1569 = vcmp.eq.f32.partialorder %v1568, 8.507059e+37
  %v1570 = vand.u32 %v1558, 2147483648
  %v1571 = vor.u32 1.1754944e-38, %v1570
  %v1572 = vsel %vm1569, %v1571, %v1567
  %v1573 = vmul.f32 1.0, %v1572
  %v1574 = vadd.f32 %v298, %v1538
  %v1575 = vxor.u32 %v1574, 2147483648
  %v1576 = vmul.f32 %v1575, 1.442695
  %v1577 = vpow.pop %v1576
  %v1578 = vadd.f32 %v1577, 1.0
  %v1579 = vrcp.pop %v1578
  %v1580 = vmul.f32 %v1578, %v1579
  %v1581 = vsub.f32 1.0, %v1580
  %v1582 = vmul.f32 %v1579, %v1581
  %v1583 = vadd.f32 %v1579, %v1582
  %vm1584 = vweird.f32 %v1578
  %vm1585 = vweird.f32 %v1579
  %vm1586 = vmor %vm1584, %vm1585
  %v1587 = vsel %vm1586, %v1579, %v1583
  %v1588 = vand.u32 2147483647, %v1578
  %vm1589 = vcmp.eq.f32.partialorder %v1588, 8.507059e+37
  %v1590 = vand.u32 %v1578, 2147483648
  %v1591 = vor.u32 1.1754944e-38, %v1590
  %v1592 = vsel %vm1589, %v1591, %v1587
  %v1593 = vmul.f32 1.0, %v1592
  %v1594 = vadd.f32 %v1551, %v845
  %v1595 = vmul.f32 %v1573, %v1594
  %v1596 = vadd.f32 %v327, %v1595
  %v1597 = vtanh.pop %v1596
  %v1598 = vsub.f32 1.0, %v1593
  %v1599 = vmul.f32 %v1598, %v1597
  %v1600 = vmul.f32 %v1593, %v1424
  %v1601 = vadd.f32 %v1599, %v1600
  %v1602 = vmul.f32 %v1601, %v1328
  %v1603 = vpack.c.bf16 %v1513, %v1513
  %1604 = vmatpush.bf16.msra.mxu0 %v514
  %1605 = vmatpush.bf16.msra.mxu0 %v511
  %1606 = vmatpush.bf16.msra.mxu0 %v508
  %1607 = vmatpush.bf16.msra.mxu0 %v505
  %1608 = vmatpush.bf16.msra.mxu0 %v502
  %1609 = vmatpush.bf16.msra.mxu0 %v499
  %1610 = vmatpush.bf16.msra.mxu0 %v496
  %1611 = vmatpush.bf16.msra.mxu0 %v493
  %1612 = vmatmul.bf16.gmra.mxu0 %v1603
  %v1613 = vpop.f32.mrf.mxu0
  %v1614 = vadd.f32 0.0, %v1613
  %v1615 = vpop.f32.mrf.mxu0
  %1616 = vdwg.mxu0
  %1617 = vmatpush.bf16.msra.mxu0 %v515
  %1618 = vmatpush.bf16.msra.mxu0 %v512
  %1619 = vmatpush.bf16.msra.mxu0 %v509
  %1620 = vmatpush.bf16.msra.mxu0 %v506
  %1621 = vmatpush.bf16.msra.mxu0 %v503
  %1622 = vmatpush.bf16.msra.mxu0 %v500
  %1623 = vmatpush.bf16.msra.mxu0 %v497
  %1624 = vmatpush.bf16.msra.mxu0 %v494
  %1625 = vmatmul.bf16.gmra.mxu0 %v1603
  %v1626 = vpop.f32.mrf.mxu0
  %v1627 = vadd.f32 0.0, %v1626
  %v1628 = vpop.f32.mrf.mxu0
  %1629 = vdwg.mxu0
  %1630 = vmatpush.bf16.msra.mxu0 %v516
  %1631 = vmatpush.bf16.msra.mxu0 %v513
  %1632 = vmatpush.bf16.msra.mxu0 %v510
  %1633 = vmatpush.bf16.msra.mxu0 %v507
  %1634 = vmatpush.bf16.msra.mxu0 %v504
  %1635 = vmatpush.bf16.msra.mxu0 %v501
  %1636 = vmatpush.bf16.msra.mxu0 %v498
  %1637 = vmatpush.bf16.msra.mxu0 %v495
  %1638 = vmatmul.bf16.gmra.mxu0 %v1603
  %v1639 = vpop.f32.mrf.mxu0
  %v1640 = vadd.f32 0.0, %v1639
  %v1641 = vpop.f32.mrf.mxu0
  %1642 = vdwg.mxu0
  %v1643 = vadd.f32 %v187, %v1614
  %v1644 = vxor.u32 %v1643, 2147483648
  %v1645 = vmul.f32 %v1644, 1.442695
  %v1646 = vpow.pop %v1645
  %v1647 = vadd.f32 %v1646, 1.0
  %v1648 = vrcp.pop %v1647
  %v1649 = vmul.f32 %v1647, %v1648
  %v1650 = vsub.f32 1.0, %v1649
  %v1651 = vmul.f32 %v1648, %v1650
  %v1652 = vadd.f32 %v1648, %v1651
  %vm1653 = vweird.f32 %v1647
  %vm1654 = vweird.f32 %v1648
  %vm1655 = vmor %vm1653, %vm1654
  %v1656 = vsel %vm1655, %v1648, %v1652
  %v1657 = vand.u32 2147483647, %v1647
  %vm1658 = vcmp.eq.f32.partialorder %v1657, 8.507059e+37
  %v1659 = vand.u32 %v1647, 2147483648
  %v1660 = vor.u32 1.1754944e-38, %v1659
  %v1661 = vsel %vm1658, %v1660, %v1656
  %v1662 = vmul.f32 1.0, %v1661
  %v1663 = vadd.f32 %v216, %v1627
  %v1664 = vxor.u32 %v1663, 2147483648
  %v1665 = vmul.f32 %v1664, 1.442695
  %v1666 = vpow.pop %v1665
  %v1667 = vadd.f32 %v1666, 1.0
  %v1668 = vrcp.pop %v1667
  %v1669 = vmul.f32 %v1667, %v1668
  %v1670 = vsub.f32 1.0, %v1669
  %v1671 = vmul.f32 %v1668, %v1670
  %v1672 = vadd.f32 %v1668, %v1671
  %vm1673 = vweird.f32 %v1667
  %vm1674 = vweird.f32 %v1668
  %vm1675 = vmor %vm1673, %vm1674
  %v1676 = vsel %vm1675, %v1668, %v1672
  %v1677 = vand.u32 2147483647, %v1667
  %vm1678 = vcmp.eq.f32.partialorder %v1677, 8.507059e+37
  %v1679 = vand.u32 %v1667, 2147483648
  %v1680 = vor.u32 1.1754944e-38, %v1679
  %v1681 = vsel %vm1678, %v1680, %v1676
  %v1682 = vmul.f32 1.0, %v1681
  %v1683 = vadd.f32 %v1640, %v621
  %v1684 = vmul.f32 %v1662, %v1683
  %v1685 = vadd.f32 %v245, %v1684
  %v1686 = vtanh.pop %v1685
  %v1687 = vsub.f32 1.0, %v1682
  %v1688 = vmul.f32 %v1687, %v1686
  %v1689 = vmul.f32 %v1682, %v1513
  %v1690 = vadd.f32 %v1688, %v1689
  %v1691 = vmul.f32 %v1690, %v1234
  %v1692 = vpack.c.bf16 %v1602, %v1602
  %1693 = vmatpush.bf16.msra.mxu0 %v738
  %1694 = vmatpush.bf16.msra.mxu0 %v735
  %1695 = vmatpush.bf16.msra.mxu0 %v732
  %1696 = vmatpush.bf16.msra.mxu0 %v729
  %1697 = vmatpush.bf16.msra.mxu0 %v726
  %1698 = vmatpush.bf16.msra.mxu0 %v723
  %1699 = vmatpush.bf16.msra.mxu0 %v720
  %1700 = vmatpush.bf16.msra.mxu0 %v717
  %1701 = vmatmul.bf16.gmra.mxu0 %v1692
  %v1702 = vpop.f32.mrf.mxu0
  %v1703 = vadd.f32 0.0, %v1702
  %v1704 = vpop.f32.mrf.mxu0
  %1705 = vdwg.mxu0
  %1706 = vmatpush.bf16.msra.mxu0 %v739
  %1707 = vmatpush.bf16.msra.mxu0 %v736
  %1708 = vmatpush.bf16.msra.mxu0 %v733
  %1709 = vmatpush.bf16.msra.mxu0 %v730
  %1710 = vmatpush.bf16.msra.mxu0 %v727
  %1711 = vmatpush.bf16.msra.mxu0 %v724
  %1712 = vmatpush.bf16.msra.mxu0 %v721
  %1713 = vmatpush.bf16.msra.mxu0 %v718
  %1714 = vmatmul.bf16.gmra.mxu0 %v1692
  %v1715 = vpop.f32.mrf.mxu0
  %v1716 = vadd.f32 0.0, %v1715
  %v1717 = vpop.f32.mrf.mxu0
  %1718 = vdwg.mxu0
  %1719 = vmatpush.bf16.msra.mxu0 %v740
  %1720 = vmatpush.bf16.msra.mxu0 %v737
  %1721 = vmatpush.bf16.msra.mxu0 %v734
  %1722 = vmatpush.bf16.msra.mxu0 %v731
  %1723 = vmatpush.bf16.msra.mxu0 %v728
  %1724 = vmatpush.bf16.msra.mxu0 %v725
  %1725 = vmatpush.bf16.msra.mxu0 %v722
  %1726 = vmatpush.bf16.msra.mxu0 %v719
  %1727 = vmatmul.bf16.gmra.mxu0 %v1692
  %v1728 = vpop.f32.mrf.mxu0
  %v1729 = vadd.f32 0.0, %v1728
  %v1730 = vpop.f32.mrf.mxu0
  %1731 = vdwg.mxu0
  %v1732 = vadd.f32 %v267, %v1703
  %v1733 = vxor.u32 %v1732, 2147483648
  %v1734 = vmul.f32 %v1733, 1.442695
  %v1735 = vpow.pop %v1734
  %v1736 = vadd.f32 %v1735, 1.0
  %v1737 = vrcp.pop %v1736
  %v1738 = vmul.f32 %v1736, %v1737
  %v1739 = vsub.f32 1.0, %v1738
  %v1740 = vmul.f32 %v1737, %v1739
  %v1741 = vadd.f32 %v1737, %v1740
  %vm1742 = vweird.f32 %v1736
  %vm1743 = vweird.f32 %v1737
  %vm1744 = vmor %vm1742, %vm1743
  %v1745 = vsel %vm1744, %v1737, %v1741
  %v1746 = vand.u32 2147483647, %v1736
  %vm1747 = vcmp.eq.f32.partialorder %v1746, 8.507059e+37
  %v1748 = vand.u32 %v1736, 2147483648
  %v1749 = vor.u32 1.1754944e-38, %v1748
  %v1750 = vsel %vm1747, %v1749, %v1745
  %v1751 = vmul.f32 1.0, %v1750
  %v1752 = vadd.f32 %v296, %v1716
  %v1753 = vxor.u32 %v1752, 2147483648
  %v1754 = vmul.f32 %v1753, 1.442695
  %v1755 = vpow.pop %v1754
  %v1756 = vadd.f32 %v1755, 1.0
  %v1757 = vrcp.pop %v1756
  %v1758 = vmul.f32 %v1756, %v1757
  %v1759 = vsub.f32 1.0, %v1758
  %v1760 = vmul.f32 %v1757, %v1759
  %v1761 = vadd.f32 %v1757, %v1760
  %vm1762 = vweird.f32 %v1756
  %vm1763 = vweird.f32 %v1757
  %vm1764 = vmor %vm1762, %vm1763
  %v1765 = vsel %vm1764, %v1757, %v1761
  %v1766 = vand.u32 2147483647, %v1756
  %vm1767 = vcmp.eq.f32.partialorder %v1766, 8.507059e+37
  %v1768 = vand.u32 %v1756, 2147483648
  %v1769 = vor.u32 1.1754944e-38, %v1768
  %v1770 = vsel %vm1767, %v1769, %v1765
  %v1771 = vmul.f32 1.0, %v1770
  %v1772 = vadd.f32 %v1729, %v845
  %v1773 = vmul.f32 %v1751, %v1772
  %v1774 = vadd.f32 %v325, %v1773
  %v1775 = vtanh.pop %v1774
  %v1776 = vsub.f32 1.0, %v1771
  %v1777 = vmul.f32 %v1776, %v1775
  %v1778 = vmul.f32 %v1771, %v1602
  %v1779 = vadd.f32 %v1777, %v1778
  %v1780 = vmul.f32 %v1779, %v1140
  %v1781 = vpack.c.bf16 %v1691, %v1691
  %1782 = vmatpush.bf16.msra.mxu0 %v514
  %1783 = vmatpush.bf16.msra.mxu0 %v511
  %1784 = vmatpush.bf16.msra.mxu0 %v508
  %1785 = vmatpush.bf16.msra.mxu0 %v505
  %1786 = vmatpush.bf16.msra.mxu0 %v502
  %1787 = vmatpush.bf16.msra.mxu0 %v499
  %1788 = vmatpush.bf16.msra.mxu0 %v496
  %1789 = vmatpush.bf16.msra.mxu0 %v493
  %1790 = vmatmul.bf16.gmra.mxu0 %v1781
  %v1791 = vpop.f32.mrf.mxu0
  %v1792 = vadd.f32 0.0, %v1791
  %v1793 = vpop.f32.mrf.mxu0
  %1794 = vdwg.mxu0
  %1795 = vmatpush.bf16.msra.mxu0 %v515
  %1796 = vmatpush.bf16.msra.mxu0 %v512
  %1797 = vmatpush.bf16.msra.mxu0 %v509
  %1798 = vmatpush.bf16.msra.mxu0 %v506
  %1799 = vmatpush.bf16.msra.mxu0 %v503
  %1800 = vmatpush.bf16.msra.mxu0 %v500
  %1801 = vmatpush.bf16.msra.mxu0 %v497
  %1802 = vmatpush.bf16.msra.mxu0 %v494
  %1803 = vmatmul.bf16.gmra.mxu0 %v1781
  %v1804 = vpop.f32.mrf.mxu0
  %v1805 = vadd.f32 0.0, %v1804
  %v1806 = vpop.f32.mrf.mxu0
  %1807 = vdwg.mxu0
  %1808 = vmatpush.bf16.msra.mxu0 %v516
  %1809 = vmatpush.bf16.msra.mxu0 %v513
  %1810 = vmatpush.bf16.msra.mxu0 %v510
  %1811 = vmatpush.bf16.msra.mxu0 %v507
  %1812 = vmatpush.bf16.msra.mxu0 %v504
  %1813 = vmatpush.bf16.msra.mxu0 %v501
  %1814 = vmatpush.bf16.msra.mxu0 %v498
  %1815 = vmatpush.bf16.msra.mxu0 %v495
  %1816 = vmatmul.bf16.gmra.mxu0 %v1781
  %v1817 = vpop.f32.mrf.mxu0
  %v1818 = vadd.f32 0.0, %v1817
  %v1819 = vpop.f32.mrf.mxu0
  %1820 = vdwg.mxu0
  %v1821 = vadd.f32 %v190, %v1792
  %v1822 = vxor.u32 %v1821, 2147483648
  %v1823 = vmul.f32 %v1822, 1.442695
  %v1824 = vpow.pop %v1823
  %v1825 = vadd.f32 %v1824, 1.0
  %v1826 = vrcp.pop %v1825
  %v1827 = vmul.f32 %v1825, %v1826
  %v1828 = vsub.f32 1.0, %v1827
  %v1829 = vmul.f32 %v1826, %v1828
  %v1830 = vadd.f32 %v1826, %v1829
  %vm1831 = vweird.f32 %v1825
  %vm1832 = vweird.f32 %v1826
  %vm1833 = vmor %vm1831, %vm1832
  %v1834 = vsel %vm1833, %v1826, %v1830
  %v1835 = vand.u32 2147483647, %v1825
  %vm1836 = vcmp.eq.f32.partialorder %v1835, 8.507059e+37
  %v1837 = vand.u32 %v1825, 2147483648
  %v1838 = vor.u32 1.1754944e-38, %v1837
  %v1839 = vsel %vm1836, %v1838, %v1834
  %v1840 = vmul.f32 1.0, %v1839
  %v1841 = vadd.f32 %v219, %v1805
  %v1842 = vxor.u32 %v1841, 2147483648
  %v1843 = vmul.f32 %v1842, 1.442695
  %v1844 = vpow.pop %v1843
  %v1845 = vadd.f32 %v1844, 1.0
  %v1846 = vrcp.pop %v1845
  %v1847 = vmul.f32 %v1845, %v1846
  %v1848 = vsub.f32 1.0, %v1847
  %v1849 = vmul.f32 %v1846, %v1848
  %v1850 = vadd.f32 %v1846, %v1849
  %vm1851 = vweird.f32 %v1845
  %vm1852 = vweird.f32 %v1846
  %vm1853 = vmor %vm1851, %vm1852
  %v1854 = vsel %vm1853, %v1846, %v1850
  %v1855 = vand.u32 2147483647, %v1845
  %vm1856 = vcmp.eq.f32.partialorder %v1855, 8.507059e+37
  %v1857 = vand.u32 %v1845, 2147483648
  %v1858 = vor.u32 1.1754944e-38, %v1857
  %v1859 = vsel %vm1856, %v1858, %v1854
  %v1860 = vmul.f32 1.0, %v1859
  %v1861 = vadd.f32 %v1818, %v621
  %v1862 = vmul.f32 %v1840, %v1861
  %v1863 = vadd.f32 %v248, %v1862
  %v1864 = vtanh.pop %v1863
  %v1865 = vsub.f32 1.0, %v1860
  %v1866 = vmul.f32 %v1865, %v1864
  %v1867 = vmul.f32 %v1860, %v1691
  %v1868 = vadd.f32 %v1866, %v1867
  %v1869 = vmul.f32 %v1868, %v1046
  %v1870 = vpack.c.bf16 %v1780, %v1780
  %1871 = vmatpush.bf16.msra.mxu0 %v738
  %1872 = vmatpush.bf16.msra.mxu0 %v735
  %1873 = vmatpush.bf16.msra.mxu0 %v732
  %1874 = vmatpush.bf16.msra.mxu0 %v729
  %1875 = vmatpush.bf16.msra.mxu0 %v726
  %1876 = vmatpush.bf16.msra.mxu0 %v723
  %1877 = vmatpush.bf16.msra.mxu0 %v720
  %1878 = vmatpush.bf16.msra.mxu0 %v717
  %1879 = vmatmul.bf16.gmra.mxu0 %v1870
  %v1880 = vpop.f32.mrf.mxu0
  %v1881 = vadd.f32 0.0, %v1880
  %v1882 = vpop.f32.mrf.mxu0
  %1883 = vdwg.mxu0
  %1884 = vmatpush.bf16.msra.mxu0 %v739
  %1885 = vmatpush.bf16.msra.mxu0 %v736
  %1886 = vmatpush.bf16.msra.mxu0 %v733
  %1887 = vmatpush.bf16.msra.mxu0 %v730
  %1888 = vmatpush.bf16.msra.mxu0 %v727
  %1889 = vmatpush.bf16.msra.mxu0 %v724
  %1890 = vmatpush.bf16.msra.mxu0 %v721
  %1891 = vmatpush.bf16.msra.mxu0 %v718
  %1892 = vmatmul.bf16.gmra.mxu0 %v1870
  %v1893 = vpop.f32.mrf.mxu0
  %v1894 = vadd.f32 0.0, %v1893
  %v1895 = vpop.f32.mrf.mxu0
  %1896 = vdwg.mxu0
  %1897 = vmatpush.bf16.msra.mxu0 %v740
  %1898 = vmatpush.bf16.msra.mxu0 %v737
  %1899 = vmatpush.bf16.msra.mxu0 %v734
  %1900 = vmatpush.bf16.msra.mxu0 %v731
  %1901 = vmatpush.bf16.msra.mxu0 %v728
  %1902 = vmatpush.bf16.msra.mxu0 %v725
  %1903 = vmatpush.bf16.msra.mxu0 %v722
  %1904 = vmatpush.bf16.msra.mxu0 %v719
  %1905 = vmatmul.bf16.gmra.mxu0 %v1870
  %v1906 = vpop.f32.mrf.mxu0
  %v1907 = vadd.f32 0.0, %v1906
  %v1908 = vpop.f32.mrf.mxu0
  %1909 = vdwg.mxu0
  %v1910 = vadd.f32 %v264, %v1881
  %v1911 = vxor.u32 %v1910, 2147483648
  %v1912 = vmul.f32 %v1911, 1.442695
  %v1913 = vpow.pop %v1912
  %v1914 = vadd.f32 %v1913, 1.0
  %v1915 = vrcp.pop %v1914
  %v1916 = vmul.f32 %v1914, %v1915
  %v1917 = vsub.f32 1.0, %v1916
  %v1918 = vmul.f32 %v1915, %v1917
  %v1919 = vadd.f32 %v1915, %v1918
  %vm1920 = vweird.f32 %v1914
  %vm1921 = vweird.f32 %v1915
  %vm1922 = vmor %vm1920, %vm1921
  %v1923 = vsel %vm1922, %v1915, %v1919
  %v1924 = vand.u32 2147483647, %v1914
  %vm1925 = vcmp.eq.f32.partialorder %v1924, 8.507059e+37
  %v1926 = vand.u32 %v1914, 2147483648
  %v1927 = vor.u32 1.1754944e-38, %v1926
  %v1928 = vsel %vm1925, %v1927, %v1923
  %v1929 = vmul.f32 1.0, %v1928
  %v1930 = vadd.f32 %v293, %v1894
  %v1931 = vxor.u32 %v1930, 2147483648
  %v1932 = vmul.f32 %v1931, 1.442695
  %v1933 = vpow.pop %v1932
  %v1934 = vadd.f32 %v1933, 1.0
  %v1935 = vrcp.pop %v1934
  %v1936 = vmul.f32 %v1934, %v1935
  %v1937 = vsub.f32 1.0, %v1936
  %v1938 = vmul.f32 %v1935, %v1937
  %v1939 = vadd.f32 %v1935, %v1938
  %vm1940 = vweird.f32 %v1934
  %vm1941 = vweird.f32 %v1935
  %vm1942 = vmor %vm1940, %vm1941
  %v1943 = vsel %vm1942, %v1935, %v1939
  %v1944 = vand.u32 2147483647, %v1934
  %vm1945 = vcmp.eq.f32.partialorder %v1944, 8.507059e+37
  %v1946 = vand.u32 %v1934, 2147483648
  %v1947 = vor.u32 1.1754944e-38, %v1946
  %v1948 = vsel %vm1945, %v1947, %v1943
  %v1949 = vmul.f32 1.0, %v1948
  %v1950 = vadd.f32 %v1907, %v845
  %v1951 = vmul.f32 %v1929, %v1950
  %v1952 = vadd.f32 %v322, %v1951
  %v1953 = vtanh.pop %v1952
  %v1954 = vsub.f32 1.0, %v1949
  %v1955 = vmul.f32 %v1954, %v1953
  %v1956 = vmul.f32 %v1949, %v1780
  %v1957 = vadd.f32 %v1955, %v1956
  %v1958 = vmul.f32 %v1957, %v952
  %v1959 = vpack.c.bf16 %v1869, %v1869
  %1960 = vmatpush.bf16.msra.mxu0 %v514
  %1961 = vmatpush.bf16.msra.mxu0 %v511
  %1962 = vmatpush.bf16.msra.mxu0 %v508
  %1963 = vmatpush.bf16.msra.mxu0 %v505
  %1964 = vmatpush.bf16.msra.mxu0 %v502
  %1965 = vmatpush.bf16.msra.mxu0 %v499
  %1966 = vmatpush.bf16.msra.mxu0 %v496
  %1967 = vmatpush.bf16.msra.mxu0 %v493
  %1968 = vmatmul.bf16.gmra.mxu0 %v1959
  %v1969 = vpop.f32.mrf.mxu0
  %v1970 = vadd.f32 0.0, %v1969
  %v1971 = vpop.f32.mrf.mxu0
  %1972 = vdwg.mxu0
  %1973 = vmatpush.bf16.msra.mxu0 %v515
  %1974 = vmatpush.bf16.msra.mxu0 %v512
  %1975 = vmatpush.bf16.msra.mxu0 %v509
  %1976 = vmatpush.bf16.msra.mxu0 %v506
  %1977 = vmatpush.bf16.msra.mxu0 %v503
  %1978 = vmatpush.bf16.msra.mxu0 %v500
  %1979 = vmatpush.bf16.msra.mxu0 %v497
  %1980 = vmatpush.bf16.msra.mxu0 %v494
  %1981 = vmatmul.bf16.gmra.mxu0 %v1959
  %v1982 = vpop.f32.mrf.mxu0
  %v1983 = vadd.f32 0.0, %v1982
  %v1984 = vpop.f32.mrf.mxu0
  %1985 = vdwg.mxu0
  %1986 = vmatpush.bf16.msra.mxu0 %v516
  %1987 = vmatpush.bf16.msra.mxu0 %v513
  %1988 = vmatpush.bf16.msra.mxu0 %v510
  %1989 = vmatpush.bf16.msra.mxu0 %v507
  %1990 = vmatpush.bf16.msra.mxu0 %v504
  %1991 = vmatpush.bf16.msra.mxu0 %v501
  %1992 = vmatpush.bf16.msra.mxu0 %v498
  %1993 = vmatpush.bf16.msra.mxu0 %v495
  %1994 = vmatmul.bf16.gmra.mxu0 %v1959
  %v1995 = vpop.f32.mrf.mxu0
  %v1996 = vadd.f32 0.0, %v1995
  %v1997 = vpop.f32.mrf.mxu0
  %1998 = vdwg.mxu0
  %v1999 = vadd.f32 %v192, %v1970
  %v2000 = vxor.u32 %v1999, 2147483648
  %v2001 = vmul.f32 %v2000, 1.442695
  %v2002 = vpow.pop %v2001
  %v2003 = vadd.f32 %v2002, 1.0
  %v2004 = vrcp.pop %v2003
  %v2005 = vmul.f32 %v2003, %v2004
  %v2006 = vsub.f32 1.0, %v2005
  %v2007 = vmul.f32 %v2004, %v2006
  %v2008 = vadd.f32 %v2004, %v2007
  %vm2009 = vweird.f32 %v2003
  %vm2010 = vweird.f32 %v2004
  %vm2011 = vmor %vm2009, %vm2010
  %v2012 = vsel %vm2011, %v2004, %v2008
  %v2013 = vand.u32 2147483647, %v2003
  %vm2014 = vcmp.eq.f32.partialorder %v2013, 8.507059e+37
  %v2015 = vand.u32 %v2003, 2147483648
  %v2016 = vor.u32 1.1754944e-38, %v2015
  %v2017 = vsel %vm2014, %v2016, %v2012
  %v2018 = vmul.f32 1.0, %v2017
  %v2019 = vadd.f32 %v221, %v1983
  %v2020 = vxor.u32 %v2019, 2147483648
  %v2021 = vmul.f32 %v2020, 1.442695
  %v2022 = vpow.pop %v2021
  %v2023 = vadd.f32 %v2022, 1.0
  %v2024 = vrcp.pop %v2023
  %v2025 = vmul.f32 %v2023, %v2024
  %v2026 = vsub.f32 1.0, %v2025
  %v2027 = vmul.f32 %v2024, %v2026
  %v2028 = vadd.f32 %v2024, %v2027
  %vm2029 = vweird.f32 %v2023
  %vm2030 = vweird.f32 %v2024
  %vm2031 = vmor %vm2029, %vm2030
  %v2032 = vsel %vm2031, %v2024, %v2028
  %v2033 = vand.u32 2147483647, %v2023
  %vm2034 = vcmp.eq.f32.partialorder %v2033, 8.507059e+37
  %v2035 = vand.u32 %v2023, 2147483648
  %v2036 = vor.u32 1.1754944e-38, %v2035
  %v2037 = vsel %vm2034, %v2036, %v2032
  %v2038 = vmul.f32 1.0, %v2037
  %v2039 = vadd.f32 %v1996, %v621
  %v2040 = vmul.f32 %v2018, %v2039
  %v2041 = vadd.f32 %v250, %v2040
  %v2042 = vtanh.pop %v2041
  %v2043 = vsub.f32 1.0, %v2038
  %v2044 = vmul.f32 %v2043, %v2042
  %v2045 = vmul.f32 %v2038, %v1869
  %v2046 = vadd.f32 %v2044, %v2045
  %v2047 = vmul.f32 %v2046, %v858
  %v2048 = vpack.c.bf16 %v1958, %v1958
  %2049 = vmatpush.bf16.msra.mxu0 %v738
  %2050 = vmatpush.bf16.msra.mxu0 %v735
  %2051 = vmatpush.bf16.msra.mxu0 %v732
  %2052 = vmatpush.bf16.msra.mxu0 %v729
  %2053 = vmatpush.bf16.msra.mxu0 %v726
  %2054 = vmatpush.bf16.msra.mxu0 %v723
  %2055 = vmatpush.bf16.msra.mxu0 %v720
  %2056 = vmatpush.bf16.msra.mxu0 %v717
  %2057 = vmatmul.bf16.gmra.mxu0 %v2048
  %v2058 = vpop.f32.mrf.mxu0
  %v2059 = vadd.f32 0.0, %v2058
  %v2060 = vpop.f32.mrf.mxu0
  %2061 = vdwg.mxu0
  %2062 = vmatpush.bf16.msra.mxu0 %v739
  %2063 = vmatpush.bf16.msra.mxu0 %v736
  %2064 = vmatpush.bf16.msra.mxu0 %v733
  %2065 = vmatpush.bf16.msra.mxu0 %v730
  %2066 = vmatpush.bf16.msra.mxu0 %v727
  %2067 = vmatpush.bf16.msra.mxu0 %v724
  %2068 = vmatpush.bf16.msra.mxu0 %v721
  %2069 = vmatpush.bf16.msra.mxu0 %v718
  %2070 = vmatmul.bf16.gmra.mxu0 %v2048
  %v2071 = vpop.f32.mrf.mxu0
  %v2072 = vadd.f32 0.0, %v2071
  %v2073 = vpop.f32.mrf.mxu0
  %2074 = vdwg.mxu0
  %2075 = vmatpush.bf16.msra.mxu0 %v740
  %2076 = vmatpush.bf16.msra.mxu0 %v737
  %2077 = vmatpush.bf16.msra.mxu0 %v734
  %2078 = vmatpush.bf16.msra.mxu0 %v731
  %2079 = vmatpush.bf16.msra.mxu0 %v728
  %2080 = vmatpush.bf16.msra.mxu0 %v725
  %2081 = vmatpush.bf16.msra.mxu0 %v722
  %2082 = vmatpush.bf16.msra.mxu0 %v719
  %2083 = vmatmul.bf16.gmra.mxu0 %v2048
  %v2084 = vpop.f32.mrf.mxu0
  %v2085 = vadd.f32 0.0, %v2084
  %v2086 = vpop.f32.mrf.mxu0
  %2087 = vdwg.mxu0
  %v2088 = vadd.f32 %v262, %v2059
  %v2089 = vxor.u32 %v2088, 2147483648
  %v2090 = vmul.f32 %v2089, 1.442695
  %v2091 = vpow.pop %v2090
  %v2092 = vadd.f32 %v2091, 1.0
  %v2093 = vrcp.pop %v2092
  %v2094 = vmul.f32 %v2092, %v2093
  %v2095 = vsub.f32 1.0, %v2094
  %v2096 = vmul.f32 %v2093, %v2095
  %v2097 = vadd.f32 %v2093, %v2096
  %vm2098 = vweird.f32 %v2092
  %vm2099 = vweird.f32 %v2093
  %vm2100 = vmor %vm2098, %vm2099
  %v2101 = vsel %vm2100, %v2093, %v2097
  %v2102 = vand.u32 2147483647, %v2092
  %vm2103 = vcmp.eq.f32.partialorder %v2102, 8.507059e+37
  %v2104 = vand.u32 %v2092, 2147483648
  %v2105 = vor.u32 1.1754944e-38, %v2104
  %v2106 = vsel %vm2103, %v2105, %v2101
  %v2107 = vmul.f32 1.0, %v2106
  %v2108 = vadd.f32 %v291, %v2072
  %v2109 = vxor.u32 %v2108, 2147483648
  %v2110 = vmul.f32 %v2109, 1.442695
  %v2111 = vpow.pop %v2110
  %v2112 = vadd.f32 %v2111, 1.0
  %v2113 = vrcp.pop %v2112
  %v2114 = vmul.f32 %v2112, %v2113
  %v2115 = vsub.f32 1.0, %v2114
  %v2116 = vmul.f32 %v2113, %v2115
  %v2117 = vadd.f32 %v2113, %v2116
  %vm2118 = vweird.f32 %v2112
  %vm2119 = vweird.f32 %v2113
  %vm2120 = vmor %vm2118, %vm2119
  %v2121 = vsel %vm2120, %v2113, %v2117
  %v2122 = vand.u32 2147483647, %v2112
  %vm2123 = vcmp.eq.f32.partialorder %v2122, 8.507059e+37
  %v2124 = vand.u32 %v2112, 2147483648
  %v2125 = vor.u32 1.1754944e-38, %v2124
  %v2126 = vsel %vm2123, %v2125, %v2121
  %v2127 = vmul.f32 1.0, %v2126
  %v2128 = vadd.f32 %v2085, %v845
  %v2129 = vmul.f32 %v2107, %v2128
  %v2130 = vadd.f32 %v320, %v2129
  %v2131 = vtanh.pop %v2130
  %v2132 = vsub.f32 1.0, %v2127
  %v2133 = vmul.f32 %v2132, %v2131
  %v2134 = vmul.f32 %v2127, %v1958
  %v2135 = vadd.f32 %v2133, %v2134
  %v2136 = vmul.f32 %v2135, %v634
  %v2137 = vpack.c.bf16 %v954, %v636
  %v2138 = vpack.c.bf16 %v1958, %v2136
  %v2139 = vpack.c.bf16 %v1330, %v1142
  %v2140 = vpack.c.bf16 %v1602, %v1780
  %v2141 = vpack.c.bf16 %v1691, %v1513
  %v2142 = vpack.c.bf16 %v1236, %v1424
  %v2143 = vpack.c.bf16 %v2047, %v1869
  %v2144 = vpack.c.bf16 %v860, %v1048
  %v2145 = vld [vmem:[%s7] sm:$0xf]
  %v2146 = vld [vmem:[%s7 + $0x4] sm:$0xf]
  %v2147 = vld [vmem:[%s7 + $0x8] sm:$0xf]
  %v2148 = vld [vmem:[%s7 + $0xc] sm:$0xf]
  %v2149 = vld [vmem:[%s7 + $0x10] sm:$0xf]
  %v2150 = vld [vmem:[%s7 + $0x14] sm:$0xf]
  %v2151 = vld [vmem:[%s7 + $0x18] sm:$0xf]
  %v2152 = vld [vmem:[%s7 + $0x1c] sm:$0xf]
  %v2153 = vld [vmem:[%s7 + $0x20] sm:$0xf]
  %v2154 = vld [vmem:[%s7 + $0x24] sm:$0xf]
  %v2155 = vld [vmem:[%s7 + $0x28] sm:$0xf]
  %v2156 = vld [vmem:[%s7 + $0x2c] sm:$0xf]
  %v2157 = vld [vmem:[%s7 + $0x30] sm:$0xf]
  %v2158 = vld [vmem:[%s7 + $0x34] sm:$0xf]
  %v2159 = vld [vmem:[%s7 + $0x38] sm:$0xf]
  %v2160 = vld [vmem:[%s7 + $0x3c] sm:$0xf]
  %v2161 = vld [vmem:[%s7 + $0x40] sm:$0xf]
  %v2162 = vld [vmem:[%s7 + $0x44] sm:$0xf]
  %v2163 = vld [vmem:[%s7 + $0x48] sm:$0xf]
  %v2164 = vld [vmem:[%s7 + $0x4c] sm:$0xf]
  %v2165 = vld [vmem:[%s7 + $0x50] sm:$0xf]
  %v2166 = vld [vmem:[%s7 + $0x54] sm:$0xf]
  %v2167 = vld [vmem:[%s7 + $0x58] sm:$0xf]
  %v2168 = vld [vmem:[%s7 + $0x5c] sm:$0xf]
  %v2169 = vld [vmem:[%s7 + $0x60] sm:$0xf]
  %v2170 = vld [vmem:[%s7 + $0x64] sm:$0xf]
  %v2171 = vld [vmem:[%s7 + $0x68] sm:$0xf]
  %v2172 = vld [vmem:[%s7 + $0x6c] sm:$0xf]
  %v2173 = vld [vmem:[%s7 + $0x70] sm:$0xf]
  %v2174 = vld [vmem:[%s7 + $0x74] sm:$0xf]
  %v2175 = vld [vmem:[%s7 + $0x78] sm:$0xf]
  %v2176 = vld [vmem:[%s7 + $0x7c] sm:$0xf]
  %v2177 = vld [vmem:[%s8] sm:$0x1]
  %v2179 = vperm.slane %v2177, 0
  %v2213 = vunpack.c.l.b16 %v2145
  %v2214 = vunpack.c.l.b16 %v2146
  %v2215 = vunpack.c.l.b16 %v2147
  %v2216 = vunpack.c.l.b16 %v2148
  %v2217 = vunpack.c.l.b16 %v2149
  %v2218 = vunpack.c.l.b16 %v2150
  %v2219 = vunpack.c.l.b16 %v2151
  %v2220 = vunpack.c.l.b16 %v2152
  %v2221 = vunpack.c.l.b16 %v2153
  %v2222 = vunpack.c.l.b16 %v2154
  %v2223 = vunpack.c.l.b16 %v2155
  %v2224 = vunpack.c.l.b16 %v2156
  %v2225 = vunpack.c.l.b16 %v2157
  %v2226 = vunpack.c.l.b16 %v2158
  %v2227 = vunpack.c.l.b16 %v2159
  %v2228 = vunpack.c.l.b16 %v2160
  %v2229 = vunpack.c.l.b16 %v2161
  %v2230 = vunpack.c.l.b16 %v2162
  %v2231 = vunpack.c.l.b16 %v2163
  %v2232 = vunpack.c.l.b16 %v2164
  %v2233 = vunpack.c.l.b16 %v2165
  %v2234 = vunpack.c.l.b16 %v2166
  %v2235 = vunpack.c.l.b16 %v2167
  %v2236 = vunpack.c.l.b16 %v2168
  %v2237 = vunpack.c.l.b16 %v2169
  %v2238 = vunpack.c.l.b16 %v2170
  %v2239 = vunpack.c.l.b16 %v2171
  %v2240 = vunpack.c.l.b16 %v2172
  %v2241 = vunpack.c.l.b16 %v2173
  %v2242 = vunpack.c.l.b16 %v2174
  %v2243 = vunpack.c.l.b16 %v2175
  %v2244 = vunpack.c.l.b16 %v2176
  %v2245 = vpack.c.b16 %v2214, %v2213
  %v2246 = vpack.c.b16 %v2216, %v2215
  %v2247 = vpack.c.b16 %v2218, %v2217
  %v2248 = vpack.c.b16 %v2220, %v2219
  %v2249 = vpack.c.b16 %v2222, %v2221
  %v2250 = vpack.c.b16 %v2224, %v2223
  %v2251 = vpack.c.b16 %v2226, %v2225
  %v2252 = vpack.c.b16 %v2228, %v2227
  %v2253 = vpack.c.b16 %v2230, %v2229
  %v2254 = vpack.c.b16 %v2232, %v2231
  %v2255 = vpack.c.b16 %v2234, %v2233
  %v2256 = vpack.c.b16 %v2236, %v2235
  %v2257 = vpack.c.b16 %v2238, %v2237
  %v2258 = vpack.c.b16 %v2240, %v2239
  %v2259 = vpack.c.b16 %v2242, %v2241
  %v2260 = vpack.c.b16 %v2244, %v2243
  %2277 = vmatpush.bf16.msra.mxu0 %v2252
  %2278 = vmatpush.bf16.msra.mxu0 %v2251
  %2279 = vmatpush.bf16.msra.mxu0 %v2250
  %2280 = vmatpush.bf16.msra.mxu0 %v2249
  %2281 = vmatpush.bf16.msra.mxu0 %v2248
  %2282 = vmatpush.bf16.msra.mxu0 %v2247
  %2283 = vmatpush.bf16.msra.mxu0 %v2246
  %2284 = vmatpush.bf16.msra.mxu0 %v2245
  %2285 = vmatmul.bf16.gmra.mxu0 %v2137
  %v2286 = vpop.f32.mrf.mxu0
  %v2287 = vadd.f32 %v2179, %v2286
  %v2288 = vpop.f32.mrf.mxu0
  %v2289 = vadd.f32 %v2179, %v2288
  %2290 = vmatmul.bf16.gmra.mxu0 %v2139
  %v2291 = vpop.f32.mrf.mxu0
  %v2292 = vadd.f32 %v2179, %v2291
  %v2293 = vpop.f32.mrf.mxu0
  %v2294 = vadd.f32 %v2179, %v2293
  %2295 = vmatmul.bf16.gmra.mxu0 %v2141
  %v2296 = vpop.f32.mrf.mxu0
  %v2297 = vadd.f32 %v2179, %v2296
  %v2298 = vpop.f32.mrf.mxu0
  %v2299 = vadd.f32 %v2179, %v2298
  %2300 = vmatmul.bf16.gmra.mxu0 %v2143
  %v2301 = vpop.f32.mrf.mxu0
  %v2302 = vadd.f32 %v2179, %v2301
  %v2303 = vpop.f32.mrf.mxu0
  %v2304 = vadd.f32 %v2179, %v2303
  %2305 = vdwg.mxu0
  %2306 = vmatpush.bf16.msra.mxu0 %v2260
  %2307 = vmatpush.bf16.msra.mxu0 %v2259
  %2308 = vmatpush.bf16.msra.mxu0 %v2258
  %2309 = vmatpush.bf16.msra.mxu0 %v2257
  %2310 = vmatpush.bf16.msra.mxu0 %v2256
  %2311 = vmatpush.bf16.msra.mxu0 %v2255
  %2312 = vmatpush.bf16.msra.mxu0 %v2254
  %2313 = vmatpush.bf16.msra.mxu0 %v2253
  %2314 = vmatmul.bf16.gmra.mxu0 %v2138
  %v2315 = vpop.f32.mrf.mxu0
  %v2316 = vadd.f32 %v2287, %v2315
  %v2317 = vpop.f32.mrf.mxu0
  %v2318 = vadd.f32 %v2289, %v2317
  %2319 = vmatmul.bf16.gmra.mxu0 %v2140
  %v2320 = vpop.f32.mrf.mxu0
  %v2321 = vadd.f32 %v2292, %v2320
  %v2322 = vpop.f32.mrf.mxu0
  %v2323 = vadd.f32 %v2294, %v2322
  %2324 = vmatmul.bf16.gmra.mxu0 %v2142
  %v2325 = vpop.f32.mrf.mxu0
  %v2326 = vadd.f32 %v2297, %v2325
  %v2327 = vpop.f32.mrf.mxu0
  %v2328 = vadd.f32 %v2299, %v2327
  %2329 = vmatmul.bf16.gmra.mxu0 %v2144
  %v2330 = vpop.f32.mrf.mxu0
  %v2331 = vadd.f32 %v2302, %v2330
  %v2332 = vpop.f32.mrf.mxu0
  %v2333 = vadd.f32 %v2304, %v2332
  %2334 = vdwg.mxu0
  %v2335 = vtanh.pop %v2316
  %v2336 = vtanh.pop %v2318
  %v2337 = vtanh.pop %v2321
  %v2338 = vtanh.pop %v2323
  %v2339 = vtanh.pop %v2326
  %v2340 = vtanh.pop %v2328
  %v2341 = vtanh.pop %v2331
  %v2342 = vtanh.pop %v2333
  %v2343 = vpack.c.bf16 %v2336, %v2335
  %v2344 = vpack.c.bf16 %v2338, %v2337
  %v2345 = vpack.c.bf16 %v2340, %v2339
  %v2346 = vpack.c.bf16 %v2342, %v2341
  %v2347 = vld [vmem:[%s9] sm:$0xf]
  %v2348 = vld [vmem:[%s9 + $0x4] sm:$0xf]
  %v2349 = vld [vmem:[%s9 + $0x8] sm:$0xf]
  %v2350 = vld [vmem:[%s9 + $0xc] sm:$0xf]
  %v2351 = vld [vmem:[%s9 + $0x10] sm:$0xf]
  %v2352 = vld [vmem:[%s9 + $0x14] sm:$0xf]
  %v2353 = vld [vmem:[%s9 + $0x18] sm:$0xf]
  %v2354 = vld [vmem:[%s9 + $0x1c] sm:$0xf]
  %v2355 = vld [vmem:[%s9 + $0x20] sm:$0xf]
  %v2356 = vld [vmem:[%s9 + $0x24] sm:$0xf]
  %v2357 = vld [vmem:[%s9 + $0x28] sm:$0xf]
  %v2358 = vld [vmem:[%s9 + $0x2c] sm:$0xf]
  %v2359 = vld [vmem:[%s9 + $0x30] sm:$0xf]
  %v2360 = vld [vmem:[%s9 + $0x34] sm:$0xf]
  %v2361 = vld [vmem:[%s9 + $0x38] sm:$0xf]
  %v2362 = vld [vmem:[%s9 + $0x3c] sm:$0xf]
  %v2379 = vunpack.c.l.b16 %v2347
  %v2380 = vunpack.c.l.b16 %v2348
  %v2381 = vunpack.c.l.b16 %v2349
  %v2382 = vunpack.c.l.b16 %v2350
  %v2383 = vunpack.c.l.b16 %v2351
  %v2384 = vunpack.c.l.b16 %v2352
  %v2385 = vunpack.c.l.b16 %v2353
  %v2386 = vunpack.c.l.b16 %v2354
  %v2387 = vunpack.c.l.b16 %v2355
  %v2388 = vunpack.c.l.b16 %v2356
  %v2389 = vunpack.c.l.b16 %v2357
  %v2390 = vunpack.c.l.b16 %v2358
  %v2391 = vunpack.c.l.b16 %v2359
  %v2392 = vunpack.c.l.b16 %v2360
  %v2393 = vunpack.c.l.b16 %v2361
  %v2394 = vunpack.c.l.b16 %v2362
  %v2395 = vpack.c.b16 %v2380, %v2379
  %v2396 = vpack.c.b16 %v2382, %v2381
  %v2397 = vpack.c.b16 %v2384, %v2383
  %v2398 = vpack.c.b16 %v2386, %v2385
  %v2399 = vpack.c.b16 %v2388, %v2387
  %v2400 = vpack.c.b16 %v2390, %v2389
  %v2401 = vpack.c.b16 %v2392, %v2391
  %v2402 = vpack.c.b16 %v2394, %v2393
  %2411 = vmatpush.bf16.msra.mxu0 %v2402
  %2412 = vmatpush.bf16.msra.mxu0 %v2401
  %2413 = vmatpush.bf16.msra.mxu0 %v2400
  %2414 = vmatpush.bf16.msra.mxu0 %v2399
  %2415 = vmatpush.bf16.msra.mxu0 %v2398
  %2416 = vmatpush.bf16.msra.mxu0 %v2397
  %2417 = vmatpush.bf16.msra.mxu0 %v2396
  %2418 = vmatpush.bf16.msra.mxu0 %v2395
  %2419 = vmatmul.bf16.gmra.mxu0 %v2343
  %v2420 = vpop.f32.mrf.mxu0
  %v2421 = vadd.f32 0.0, %v2420
  %v2422 = vpop.f32.mrf.mxu0
  %v2423 = vadd.f32 0.0, %v2422
  %2424 = vmatmul.bf16.gmra.mxu0 %v2344
  %v2425 = vpop.f32.mrf.mxu0
  %v2426 = vadd.f32 0.0, %v2425
  %v2427 = vpop.f32.mrf.mxu0
  %v2428 = vadd.f32 0.0, %v2427
  %2429 = vmatmul.bf16.gmra.mxu0 %v2345
  %v2430 = vpop.f32.mrf.mxu0
  %v2431 = vadd.f32 0.0, %v2430
  %v2432 = vpop.f32.mrf.mxu0
  %v2433 = vadd.f32 0.0, %v2432
  %2434 = vmatmul.bf16.gmra.mxu0 %v2346
  %v2435 = vpop.f32.mrf.mxu0
  %v2436 = vadd.f32 0.0, %v2435
  %v2437 = vpop.f32.mrf.mxu0
  %v2438 = vadd.f32 0.0, %v2437
  %2439 = vdwg.mxu0
  %vm2440 = vcmask 7168
  %v2441 = vsel %vm2440, %v2421, -inf
  %v2442 = vsel %vm2440, %v2423, -inf
  %v2443 = vsel %vm2440, %v2426, -inf
  %v2444 = vsel %vm2440, %v2428, -inf
  %v2445 = vsel %vm2440, %v2431, -inf
  %v2446 = vmax.f32 %v2441, %v2445
  %v2447 = vsel %vm2440, %v2433, -inf
  %v2448 = vmax.f32 %v2442, %v2447
  %v2449 = vsel %vm2440, %v2436, -inf
  %v2450 = vmax.f32 %v2443, %v2449
  %v2451 = vsel %vm2440, %v2438, -inf
  %v2452 = vmax.f32 %v2444, %v2451
  %v2453 = vmax.f32 %v2446, %v2448
  %v2454 = vmax.f32 %v2450, %v2452
  %v2455 = vmax.f32 %v2453, %v2454
  %v2456 = vsub.f32 %v2421, %v2455
  %v2457 = vsub.f32 %v2423, %v2455
  %v2458 = vsub.f32 %v2426, %v2455
  %v2459 = vsub.f32 %v2428, %v2455
  %v2460 = vsub.f32 %v2431, %v2455
  %v2461 = vsub.f32 %v2433, %v2455
  %v2462 = vsub.f32 %v2436, %v2455
  %v2463 = vsub.f32 %v2438, %v2455
  %v2464 = vmul.f32 %v2456, 1.442695
  %v2465 = vpow.pop %v2464
  %v2466 = vmul.f32 %v2457, 1.442695
  %v2467 = vpow.pop %v2466
  %v2468 = vmul.f32 %v2458, 1.442695
  %v2469 = vpow.pop %v2468
  %v2470 = vmul.f32 %v2459, 1.442695
  %v2471 = vpow.pop %v2470
  %v2472 = vmul.f32 %v2460, 1.442695
  %v2473 = vpow.pop %v2472
  %v2474 = vmul.f32 %v2461, 1.442695
  %v2475 = vpow.pop %v2474
  %v2476 = vmul.f32 %v2462, 1.442695
  %v2477 = vpow.pop %v2476
  %v2478 = vmul.f32 %v2463, 1.442695
  %v2479 = vpow.pop %v2478
  %v2480 = vsel %vm2440, %v2465, 0.0
  %v2481 = vsel %vm2440, %v2467, 0.0
  %v2482 = vadd.f32 %v2480, %v2481
  %v2483 = vsel %vm2440, %v2469, 0.0
  %v2484 = vadd.f32 %v2482, %v2483
  %v2485 = vsel %vm2440, %v2471, 0.0
  %v2486 = vadd.f32 %v2484, %v2485
  %v2487 = vsel %vm2440, %v2473, 0.0
  %v2488 = vadd.f32 %v2486, %v2487
  %v2489 = vsel %vm2440, %v2475, 0.0
  %v2490 = vadd.f32 %v2488, %v2489
  %v2491 = vsel %vm2440, %v2477, 0.0
  %v2492 = vadd.f32 %v2490, %v2491
  %v2493 = vsel %vm2440, %v2479, 0.0
  %v2494 = vadd.f32 %v2492, %v2493
  %v2495 = vrcp.pop %v2494
  %v2496 = vmul.f32 %v2494, %v2495
  %v2497 = vsub.f32 2.0, %v2496
  %v2498 = vmul.f32 %v2495, %v2497
  %v2499 = vmul.f32 %v2465, %v2498
  %v2500 = vmul.f32 %v2467, %v2498
  %v2501 = vmul.f32 %v2469, %v2498
  %v2502 = vmul.f32 %v2471, %v2498
  %v2503 = vmul.f32 %v2473, %v2498
  %v2504 = vmul.f32 %v2475, %v2498
  %v2505 = vmul.f32 %v2477, %v2498
  %v2506 = vmul.f32 %v2479, %v2498
  %2508 = vset.pattern.permute.xlu0 0
  %2509 = vperm.xlu0 %2508, %v2499
  %v2510 = vpop.permute.xlu0 %2509
  %2513 = vset.pattern.permute.xlu0 0
  %2514 = vperm.xlu0 %2513, %v2500
  %v2515 = vpop.permute.xlu0 %2514
  %2518 = vset.pattern.permute.xlu0 0
  %2519 = vperm.xlu0 %2518, %v2501
  %v2520 = vpop.permute.xlu0 %2519
  %2523 = vset.pattern.permute.xlu0 0
  %2524 = vperm.xlu0 %2523, %v2502
  %v2525 = vpop.permute.xlu0 %2524
  %2528 = vset.pattern.permute.xlu0 0
  %2529 = vperm.xlu0 %2528, %v2503
  %v2530 = vpop.permute.xlu0 %2529
  %2533 = vset.pattern.permute.xlu0 0
  %2534 = vperm.xlu0 %2533, %v2504
  %v2535 = vpop.permute.xlu0 %2534
  %2538 = vset.pattern.permute.xlu0 0
  %2539 = vperm.xlu0 %2538, %v2505
  %v2540 = vpop.permute.xlu0 %2539
  %2543 = vset.pattern.permute.xlu0 0
  %2544 = vperm.xlu0 %2543, %v2506
  %v2545 = vpop.permute.xlu0 %2544
  %v2547 = vmul.f32 %v2510, %v2335
  %v2548 = vmul.f32 %v2515, %v2336
  %v2549 = vmul.f32 %v2520, %v2337
  %v2550 = vmul.f32 %v2525, %v2338
  %v2551 = vmul.f32 %v2530, %v2339
  %v2552 = vmul.f32 %v2535, %v2340
  %v2553 = vmul.f32 %v2540, %v2341
  %v2554 = vmul.f32 %v2545, %v2342
  %v2555 = vadd.f32 %v2547, %v2548
  %v2556 = vadd.f32 %v2555, %v2549
  %v2557 = vadd.f32 %v2556, %v2550
  %v2558 = vadd.f32 %v2557, %v2551
  %v2559 = vadd.f32 %v2558, %v2552
  %v2560 = vadd.f32 %v2559, %v2553
  %v2561 = vadd.f32 %v2560, %v2554
  %2562 = vst [vmem:[%s10] sm:$0xff] %v2561
  %2563 = vst.msk [vmem:[%s11] sm:$0xff] %vm2440, %v2499
  %2564 = vst.msk [vmem:[%s11 + $0x8] sm:$0xff] %vm2440, %v2500
  %2565 = vst.msk [vmem:[%s11 + $0x10] sm:$0xff] %vm2440, %v2501
  %2566 = vst.msk [vmem:[%s11 + $0x18] sm:$0xff] %vm2440, %v2502
  %2567 = vst.msk [vmem:[%s11 + $0x20] sm:$0xff] %vm2440, %v2503
  %2568 = vst.msk [vmem:[%s11 + $0x28] sm:$0xff] %vm2440, %v2504
  %2569 = vst.msk [vmem:[%s11 + $0x30] sm:$0xff] %vm2440, %v2505
  %2570 = vst.msk [vmem:[%s11 + $0x38] sm:$0xff] %vm2440, %v2506
  // Predicated region
  $region42: #{sentence_forward.1} parent=0 // pred_check
    _
  $region43: #{sentence_forward.1} parent=0 // pred_check_branch
    %2572 = sbr.rel (0) target = $region45
  $region44: #{sentence_forward.1} parent=0 // pred_region
    _
  $region45: #{sentence_forward.1} parent=0 // pred_fallthru
    _
  // Predicated region
  $region46: #{sentence_forward.1} parent=0 // pred_check
    _
  $region47: #{sentence_forward.1} parent=0 // pred_check_branch
    %2574 = sbr.rel (0) target = $region49
  $region48: #{sentence_forward.1} parent=0 // pred_region
    _
  $region49: #{sentence_forward.1} parent=0 // pred_fallthru
    _
  // Predicated region
  $region50: #{sentence_forward.1} parent=0 // pred_check
    _
  $region51: #{sentence_forward.1} parent=0 // pred_check_branch
    %2576 = sbr.rel (0) target = $region53
  $region52: #{sentence_forward.1} parent=0 // pred_region
    _
  $region53: #{sentence_forward.1} parent=0 // pred_fallthru
    _
  // Predicated region
  $region54: #{sentence_forward.1} parent=0 // pred_check
    _
  $region55: #{sentence_forward.1} parent=0 // pred_check_branch
    %2578 = sbr.rel (0) target = $region57
  $region56: #{sentence_forward.1} parent=0 // pred_region
    _
  $region57: #{sentence_forward.1} parent=0 // pred_fallthru
    _

</llo_original>
